<compile_context>
chip_gen: v5e
topology: v5e:2x2
jax: 0.10.0
libtpu: 0.0.40
codegen_flags: <defaults>
</compile_context>

<pallas_src>
import jax
import jax.numpy as jnp
from jax import lax
from jax.experimental import pallas as pl
from jax.experimental.pallas import tpu as pltpu

VEC_PAD = 128     # embedder output padded to a full lane tile (lane-dense stores)
K_PAD = 32        # stem im2col K (3*3*3 = 27) zero-padded to 32
BIAS_SLOT = 128   # every bias/shift vector gets its own 128-lane slot in one packed array


# ----------------------------------------------------------------------------
# Fused Pallas kernel: whole ArtEfficientnet forward for B images per grid step
# ----------------------------------------------------------------------------
def _make_fused_kernel(B, oh, ow, c_stem, c_exp, c_se, c_blk, c_head, out_sz):
    HW = oh * ow
    M = B * HW
    f32, bf16 = jnp.float32, jnp.bfloat16

    def kernel(x_ref,          # (B*HW, K_PAD)    f32  im2col'd stem input
               stem_w_ref,     # (K_PAD, c_stem)  bf16 (BN folded)
               exp_w_ref,      # (c_stem, c_exp)  bf16 (BN folded)
               dw_w_ref,       # (9, c_exp)       f32  (BN scale folded)
               se_w1_ref,      # (c_exp, c_se)    bf16
               se_w2_ref,      # (c_se, c_exp)    bf16
               proj_w_ref,     # (c_exp, c_blk)   bf16 (BN folded)
               head_w_ref,     # (c_blk, c_head)  bf16 (BN folded)
               fc_w_ref,       # (c_head, out_sz) bf16
               emb_w_ref,      # (out_sz, VEC_PAD) bf16 (zero-padded columns)
               biases_ref,     # (1, 9*BIAS_SLOT) f32  all biases, one 128-lane slot each
               out_ref,        # (B, VEC_PAD)     f32
               dw_ref):        # VMEM scratch (B, oh+2, ow+2, c_exp) f32

        def bias(slot, width):
            # static, 128-aligned slice of the packed bias array
            return biases_ref[:, BIAS_SLOT * slot: BIAS_SLOT * slot + width]

        # --- stem 3x3 stride-2 conv (+ folded BN) + swish: one (M,32)x(32,c_stem) matmul ---
        h = jnp.dot(x_ref[...].astype(bf16), stem_w_ref[...], preferred_element_type=f32)
        h = h + bias(0, c_stem)
        h = h * jax.nn.sigmoid(h)                                           # (M, c_stem)

        # --- MBConv expand 1x1 (+ folded BN) + swish ---
        e = jnp.dot(h.astype(bf16), exp_w_ref[...], preferred_element_type=f32) + bias(1, c_exp)
        e = e * jax.nn.sigmoid(e)                                           # (M, c_exp)

        # --- depthwise 3x3 'same' (+ folded BN) + swish ---
        # Only the 1-wide halo is zeroed each step (plus the interior write); every scratch
        # element is rewritten every step, so no cross-step init is needed and the previous
        # full-buffer zero store is eliminated.  Megacore-safe (no reliance on program 0).
        e4 = e.reshape(B, oh, ow, c_exp)
        dw_ref[:, 0:1, :, :] = jnp.zeros((B, 1, ow + 2, c_exp), f32)
        dw_ref[:, oh + 1:oh + 2, :, :] = jnp.zeros((B, 1, ow + 2, c_exp), f32)
        dw_ref[:, :, 0:1, :] = jnp.zeros((B, oh + 2, 1, c_exp), f32)
        dw_ref[:, :, ow + 1:ow + 2, :] = jnp.zeros((B, oh + 2, 1, c_exp), f32)
        dw_ref[:, 1:1 + oh, 1:1 + ow, :] = e4
        dacc = jnp.zeros((B, oh, ow, c_exp), f32)
        for i in range(3):
            for j in range(3):
                w_tap = dw_w_ref[i * 3 + j: i * 3 + j + 1, :]               # (1, c_exp)
                dacc = dacc + dw_ref[:, i:i + oh, j:j + ow, :] * w_tap
        d = dacc + bias(2, c_exp)
        d = d * jax.nn.sigmoid(d)
        d3 = d.reshape(B, HW, c_exp)                                        # (B, HW, c_exp)

        # --- squeeze & excite (per-image pool fused; gate broadcast in-kernel) ---
        pooled = jnp.mean(d3, axis=1)                                       # (B, c_exp)
        s1 = jnp.dot(pooled.astype(bf16), se_w1_ref[...],
                     preferred_element_type=f32) + bias(3, c_se)
        s1 = s1 * jax.nn.sigmoid(s1)
        s2 = jnp.dot(s1.astype(bf16), se_w2_ref[...],
                     preferred_element_type=f32) + bias(4, c_exp)
        gate = jax.nn.sigmoid(s2)                                           # (B, c_exp)
        gated = (d3 * gate[:, None, :]).reshape(M, c_exp)

        # --- project 1x1 (+ folded BN, no activation) ---
        blk = jnp.dot(gated.astype(bf16), proj_w_ref[...],
                      preferred_element_type=f32) + bias(5, c_blk)
        # (no residual: in/out channel counts differ, matching EfficientNet's first block)

        # --- conv head 1x1 (+ folded BN) + swish ---
        hd = jnp.dot(blk.astype(bf16), head_w_ref[...],
                     preferred_element_type=f32) + bias(6, c_head)
        hd = hd * jax.nn.sigmoid(hd)                                        # (M, c_head)

        # --- global average pool + backbone _fc + ArtEfficientnet ReLU ---
        gp = jnp.mean(hd.reshape(B, HW, c_head), axis=1)                    # (B, c_head)
        # TODO(synk): EfficientNet applies dropout before _fc; identity in eval mode.
        logits = jnp.dot(gp.astype(bf16), fc_w_ref[...],
                         preferred_element_type=f32) + bias(7, out_sz)
        logits = jnp.maximum(logits, 0.0)                                   # self.activate = ReLU

        # --- embedder Linear (columns zero-padded to a full 128-lane tile) ---
        emb = jnp.dot(logits.astype(bf16), emb_w_ref[...],
                      preferred_element_type=f32) + bias(8, VEC_PAD)
        out_ref[...] = emb.astype(out_ref.dtype)

    return kernel


def _const0(nd):
    # Full-array block, same block index every grid step (weights stay resident in VMEM).
    return lambda g: (0,) * nd


# ----------------------------------------------------------------------------
# Forward pass (ArtEfficientnet.forward) -- a single pallas_call
# ----------------------------------------------------------------------------
def art_efficientnet_forward(x_nchw, p, *, block_b=4):
    N, C_in, H, W = x_nchw.shape
    assert C_in == 3 and H % 2 == 0 and W % 2 == 0
    oh, ow = H // 2, W // 2
    HW = oh * ow

    # Batch-block the grid: B images per step so spatial matmuls have M = B*HW (>= 256 for
    # HW=64, B=4) and the grid has >= 2 steps so both v7x TensorCores get work.
    B = next(b for b in range(min(block_b, N), 0, -1) if N % b == 0)
    G = N // B

    c_stem = p["stem_w"].shape[-1]
    c_exp = p["exp_w"].shape[-1]
    c_se = p["se_w1"].shape[-1]
    c_blk = p["proj_w"].shape[-1]
    c_head = p["head_w"].shape[-1]
    out_sz = p["fc_w"].shape[-1]
    vec_sz = p["emb_w"].shape[-1]
    k_taps = 9 * C_in

    # ---- stem im2col in the wrapper: lane-dense (N*HW, 32) slab, one K=32 matmul in-kernel ----
    # PyTorch Conv2d(3, c_stem, 3, stride=2, padding=1) convention.
    x = jnp.transpose(x_nchw, (0, 2, 3, 1)).astype(jnp.float32)             # NHWC
    xp = jnp.pad(x, ((0, 0), (1, 1), (1, 1), (0, 0)))
    cols = [xp[:, i:i + H - 1:2, j:j + W - 1:2, :] for i in range(3) for j in range(3)]
    im = jnp.concatenate(cols, axis=-1)                                      # (N, oh, ow, 27)
    im = jnp.pad(im, ((0, 0), (0, 0), (0, 0), (0, K_PAD - k_taps)))
    im = im.reshape(N * HW, K_PAD)

    # ---- pack weights for the kernel ----
    stem_w = jnp.pad(p["stem_w"].reshape(k_taps, c_stem), ((0, K_PAD - k_taps), (0, 0)))
    dw_w = p["dw_w"].reshape(9, c_exp)
    emb_w = jnp.pad(p["emb_w"], ((0, 0), (0, VEC_PAD - vec_sz)))             # zero cols

    # ---- all nine bias/shift vectors in ONE padded f32 array (one input, one VMEM tile) ----
    def slot(v):
        return jnp.pad(v.astype(jnp.float32), (0, BIAS_SLOT - v.shape[0]))
    biases = jnp.concatenate([slot(p["stem_b"]), slot(p["exp_b"]), slot(p["dw_b"]),
                              slot(p["se_b1"]), slot(p["se_b2"]), slot(p["proj_b"]),
                              slot(p["head_b"]), slot(p["fc_b"]), slot(p["emb_b"])])[None, :]

    weights = [stem_w, p["exp_w"], dw_w, p["se_w1"], p["se_w2"],
               p["proj_w"], p["head_w"], p["fc_w"], emb_w, biases]

    kernel = _make_fused_kernel(B, oh, ow, c_stem, c_exp, c_se, c_blk, c_head, out_sz)

    in_specs = [pl.BlockSpec((B * HW, K_PAD), lambda g: (g, 0))]
    # Weights: full-array blocks, constant index -> resident across the grid.
    # TODO(synk): pl.Buffered(1) on these would drop the redundant second buffer (v7x VMEM),
    # but the weights are tiny at this synthetic size so the default is kept.
    in_specs += [pl.BlockSpec(w.shape, _const0(w.ndim)) for w in weights]

    out = pl.pallas_call(
        kernel,
        out_shape=jax.ShapeDtypeStruct((G, B, VEC_PAD), jnp.float32),
        grid=(G,),
        in_specs=in_specs,
        out_specs=pl.BlockSpec((None, B, VEC_PAD), lambda g: (g, 0, 0)),
        scratch_shapes=[pltpu.VMEM((B, oh + 2, ow + 2, c_exp), jnp.float32)],
        compiler_params=pltpu.CompilerParams(
            dimension_semantics=("parallel",),   # batch-block grid sharded across TCs (v7x)
            # default scoped-VMEM limit is ample here (<1 MiB resident), so no override
        ),
    )(im, *weights)

    # lane-dense (B, 128) blocks -> (N, vector_size) outside the kernel
    return out.reshape(N, VEC_PAD)[:, :vec_sz]


# ----------------------------------------------------------------------------
# Pure-JAX f32 reference (same folded-BN weights) for the correctness check
# ----------------------------------------------------------------------------
def art_efficientnet_reference(x_nchw, p):
    f32 = jnp.float32
    c_exp = p["exp_w"].shape[-1]
    x = jnp.transpose(x_nchw, (0, 2, 3, 1)).astype(f32)                      # NHWC
    h = lax.conv_general_dilated(x, p["stem_w"].astype(f32), (2, 2), ((1, 1), (1, 1)),
                                 dimension_numbers=("NHWC", "HWIO", "NHWC"))
    h = h + p["stem_b"]
    h = h * jax.nn.sigmoid(h)
    e = jnp.einsum("nhwc,cd->nhwd", h, p["exp_w"].astype(f32)) + p["exp_b"]
    e = e * jax.nn.sigmoid(e)
    d = lax.conv_general_dilated(e, p["dw_w"].astype(f32)[:, :, None, :], (1, 1),
                                 ((1, 1), (1, 1)),
                                 dimension_numbers=("NHWC", "HWIO", "NHWC"),
                                 feature_group_count=c_exp)
    d = d + p["dw_b"]
    d = d * jax.nn.sigmoid(d)
    pooled = jnp.mean(d, axis=(1, 2))
    s1 = pooled @ p["se_w1"].astype(f32) + p["se_b1"]
    s1 = s1 * jax.nn.sigmoid(s1)
    gate = jax.nn.sigmoid(s1 @ p["se_w2"].astype(f32) + p["se_b2"])
    dg = d * gate[:, None, None, :]
    blk = jnp.einsum("nhwc,cd->nhwd", dg, p["proj_w"].astype(f32)) + p["proj_b"]
    hd = jnp.einsum("nhwc,cd->nhwd", blk, p["head_w"].astype(f32)) + p["head_b"]
    hd = hd * jax.nn.sigmoid(hd)
    gp = jnp.mean(hd, axis=(1, 2))
    logits = jnp.maximum(gp @ p["fc_w"].astype(f32) + p["fc_b"], 0.0)
    return logits @ p["emb_w"].astype(f32) + p["emb_b"]


# ----------------------------------------------------------------------------
# Deterministic synthetic parameters (BatchNorm folded for inference, eps=1e-3)
# ----------------------------------------------------------------------------
def bn_scale_shift(gamma, beta, mean, var, eps=1e-3):
    scale = gamma / jnp.sqrt(var + eps)
    return scale, beta - mean * scale


def make_params(key, c_in=3, c_stem=32, c_exp=64, c_se=16, c_blk=32, c_head=128,
                output_size=128, vector_size=16):
    cnt = [0]

    def nk():
        cnt[0] += 1
        return jax.random.fold_in(key, cnt[0])

    def nrm(shape, fan_in):
        return (jax.random.normal(nk(), shape) / jnp.sqrt(float(fan_in))).astype(jnp.float32)

    def bvec(c, s=0.1):
        return (s * jax.random.normal(nk(), (c,))).astype(jnp.float32)

    def bn(c):
        gamma = (1.0 + 0.1 * jax.random.normal(nk(), (c,))).astype(jnp.float32)
        beta = bvec(c)
        mean = bvec(c)
        var = jax.random.uniform(nk(), (c,), minval=0.5, maxval=1.5).astype(jnp.float32)
        return gamma, beta, mean, var

    p = {}
    # conv stem 3x3 stride-2 (HWIO) + bn0 folded into the weights
    sc, sh = bn_scale_shift(*bn(c_stem))
    p["stem_w"] = (nrm((3, 3, c_in, c_stem), 9 * c_in) * sc).astype(jnp.bfloat16)
    p["stem_b"] = sh
    # MBConv expand 1x1 + bn (folded)
    sc, sh = bn_scale_shift(*bn(c_exp))
    p["exp_w"] = (nrm((c_stem, c_exp), c_stem) * sc).astype(jnp.bfloat16)
    p["exp_b"] = sh
    # depthwise 3x3 + bn (scale folded into the taps, keep the shift); stays f32
    sc, sh = bn_scale_shift(*bn(c_exp))
    p["dw_w"] = nrm((3, 3, c_exp), 9) * sc
    p["dw_b"] = sh
    # squeeze-excite (1x1 convs on the pooled vector)
    p["se_w1"] = nrm((c_exp, c_se), c_exp).astype(jnp.bfloat16)
    p["se_b1"] = bvec(c_se)
    p["se_w2"] = nrm((c_se, c_exp), c_se).astype(jnp.bfloat16)
    p["se_b2"] = bvec(c_exp)
    # project 1x1 + bn (no activation)
    sc, sh = bn_scale_shift(*bn(c_blk))
    p["proj_w"] = (nrm((c_exp, c_blk), c_exp) * sc).astype(jnp.bfloat16)
    p["proj_b"] = sh
    # conv head 1x1 + bn1 (+ swish in-kernel)
    sc, sh = bn_scale_shift(*bn(c_head))
    p["head_w"] = (nrm((c_blk, c_head), c_blk) * sc).astype(jnp.bfloat16)
    p["head_b"] = sh
    # backbone _fc (output_size stands in for model._fc.out_features)
    p["fc_w"] = nrm((c_head, output_size), c_head).astype(jnp.bfloat16)
    p["fc_b"] = bvec(output_size)
    # ArtEfficientnet embedder: Linear(output_size, vector_size)
    p["emb_w"] = nrm((output_size, vector_size), output_size).astype(jnp.bfloat16)
    p["emb_b"] = bvec(vector_size)
    return p


if __name__ == "__main__":
    key = jax.random.PRNGKey(0)
    k_params, k_x = jax.random.split(key)

    vector_size = 16
    params = make_params(k_params, vector_size=vector_size)

    # small RGB image batch (PyTorch NCHW); N=8 -> 2 grid steps of 4 images each
    x = jax.random.uniform(k_x, (8, 3, 16, 16), dtype=jnp.float32)

    fwd = jax.jit(art_efficientnet_forward)
    y = jax.block_until_ready(fwd(x, params))
    assert y.shape == (8, vector_size), y.shape
    assert bool(jnp.all(jnp.isfinite(y)))

    # numerical check vs. a pure-JAX f32 reference (tolerance absorbs bf16 MXU rounding)
    y_ref = jax.block_until_ready(jax.jit(art_efficientnet_reference)(x, params))
    err = float(jnp.max(jnp.abs(y - y_ref)))
    scale = float(jnp.max(jnp.abs(y_ref)))
    assert err <= 2e-2 + 2e-2 * scale, (err, scale)

    print("KERNEL_OK")
</pallas_src>

<mosaic_0001>
module attributes {stable_mosaic.version = 11 : i64} {
  func.func @kernel(%arg0: i32, %arg1: memref<256x32xf32, #tpu.memory_space<vmem>>, %arg2: memref<32x32xbf16, #tpu.memory_space<vmem>>, %arg3: memref<32x64xbf16, #tpu.memory_space<vmem>>, %arg4: memref<9x64xf32, #tpu.memory_space<vmem>>, %arg5: memref<64x16xbf16, #tpu.memory_space<vmem>>, %arg6: memref<16x64xbf16, #tpu.memory_space<vmem>>, %arg7: memref<64x32xbf16, #tpu.memory_space<vmem>>, %arg8: memref<32x128xbf16, #tpu.memory_space<vmem>>, %arg9: memref<128x128xbf16, #tpu.memory_space<vmem>>, %arg10: memref<128x128xbf16, #tpu.memory_space<vmem>>, %arg11: memref<1x1152xf32, #tpu.memory_space<vmem>>, %arg12: memref<1x4x128xf32, #tpu.memory_space<vmem>>, %arg13: memref<4x10x10x64xf32, #tpu.memory_space<vmem>>) attributes {dimension_semantics = [#tpu.dimension_semantics<parallel>], iteration_bounds = array<i64: 2>, scalar_prefetch = 0 : i64, scratch_operands = 1 : i64, tpu.core_type = #tpu.core_type<tc>, window_params = [{transform_indices = @transform_0, window_bounds = array<i64: 256, 32>}, {pipeline_mode = #tpu.pipeline_mode<synchronous>, transform_indices = @transform_1, window_bounds = array<i64: 32, 32>}, {pipeline_mode = #tpu.pipeline_mode<synchronous>, transform_indices = @transform_2, window_bounds = array<i64: 32, 64>}, {pipeline_mode = #tpu.pipeline_mode<synchronous>, transform_indices = @transform_3, window_bounds = array<i64: 9, 64>}, {pipeline_mode = #tpu.pipeline_mode<synchronous>, transform_indices = @transform_4, window_bounds = array<i64: 64, 16>}, {pipeline_mode = #tpu.pipeline_mode<synchronous>, transform_indices = @transform_5, window_bounds = array<i64: 16, 64>}, {pipeline_mode = #tpu.pipeline_mode<synchronous>, transform_indices = @transform_6, window_bounds = array<i64: 64, 32>}, {pipeline_mode = #tpu.pipeline_mode<synchronous>, transform_indices = @transform_7, window_bounds = array<i64: 32, 128>}, {pipeline_mode = #tpu.pipeline_mode<synchronous>, transform_indices = @transform_8, window_bounds = array<i64: 128, 128>}, {pipeline_mode = #tpu.pipeline_mode<synchronous>, transform_indices = @transform_9, window_bounds = array<i64: 128, 128>}, {pipeline_mode = #tpu.pipeline_mode<synchronous>, transform_indices = @transform_10, window_bounds = array<i64: 1, 1152>}, {transform_indices = @transform_11, window_bounds = array<i64: 1, 4, 128>}]} {
    %c0 = arith.constant 0 : index
    %c0_0 = arith.constant 0 : index
    %0 = vector.load %arg1[%c0, %c0_0] : memref<256x32xf32, #tpu.memory_space<vmem>>, vector<256x32xf32>
    %1 = arith.truncf %0 : vector<256x32xf32> to vector<256x32xbf16>
    %c0_1 = arith.constant 0 : index
    %c0_2 = arith.constant 0 : index
    %2 = vector.load %arg2[%c0_1, %c0_2] : memref<32x32xbf16, #tpu.memory_space<vmem>>, vector<32x32xbf16>
    %cst = arith.constant dense<0.000000e+00> : vector<256x32xf32>
    %3 = tpu.matmul %1, %2, %cst {dimension_numbers = #tpu.dot_dimension_numbers<[1], [0], [0], [1], [0, 0, 1, 1], [], []>} : vector<256x32xbf16>, vector<32x32xbf16>, vector<256x32xf32> -> vector<256x32xf32>
    %c0_3 = arith.constant 0 : index
    %c0_4 = arith.constant 0 : index
    %4 = vector.load %arg11[%c0_3, %c0_4] : memref<1x1152xf32, #tpu.memory_space<vmem>>, vector<1x32xf32>
    %5 = vector.broadcast %4 : vector<1x32xf32> to vector<256x32xf32>
    %6 = arith.addf %3, %5 : vector<256x32xf32>
    %7 = arith.negf %6 : vector<256x32xf32>
    %8 = math.exp %7 : vector<256x32xf32>
    %cst_5 = arith.constant 1.000000e+00 : f32
    %9 = vector.broadcast %cst_5 : f32 to vector<256x32xf32>
    %10 = arith.addf %9, %8 : vector<256x32xf32>
    %11 = arith.divf %9, %10 : vector<256x32xf32>
    %12 = arith.mulf %6, %11 : vector<256x32xf32>
    %13 = arith.truncf %12 : vector<256x32xf32> to vector<256x32xbf16>
    %c0_6 = arith.constant 0 : index
    %c0_7 = arith.constant 0 : index
    %14 = vector.load %arg3[%c0_6, %c0_7] : memref<32x64xbf16, #tpu.memory_space<vmem>>, vector<32x64xbf16>
    %cst_8 = arith.constant dense<0.000000e+00> : vector<256x64xf32>
    %15 = tpu.matmul %13, %14, %cst_8 {dimension_numbers = #tpu.dot_dimension_numbers<[1], [0], [0], [1], [0, 0, 1, 1], [], []>} : vector<256x32xbf16>, vector<32x64xbf16>, vector<256x64xf32> -> vector<256x64xf32>
    %c0_9 = arith.constant 0 : index
    %c128 = arith.constant 128 : index
    %16 = vector.load %arg11[%c0_9, %c128] : memref<1x1152xf32, #tpu.memory_space<vmem>>, vector<1x64xf32>
    %17 = vector.broadcast %16 : vector<1x64xf32> to vector<256x64xf32>
    %18 = arith.addf %15, %17 : vector<256x64xf32>
    %19 = arith.negf %18 : vector<256x64xf32>
    %20 = math.exp %19 : vector<256x64xf32>
    %cst_10 = arith.constant 1.000000e+00 : f32
    %21 = vector.broadcast %cst_10 : f32 to vector<256x64xf32>
    %22 = arith.addf %21, %20 : vector<256x64xf32>
    %23 = arith.divf %21, %22 : vector<256x64xf32>
    %24 = arith.mulf %18, %23 : vector<256x64xf32>
    %25 = vector.shape_cast %24 : vector<256x64xf32> to vector<4x8x8x64xf32>
    %cst_11 = arith.constant 0.000000e+00 : f32
    %26 = vector.broadcast %cst_11 : f32 to vector<4x1x10x64xf32>
    %c0_12 = arith.constant 0 : index
    %c0_13 = arith.constant 0 : index
    %c0_14 = arith.constant 0 : index
    %c0_15 = arith.constant 0 : index
    %27 = vector.load %arg13[%c0_12, %c0_13, %c0_14, %c0_15] : memref<4x10x10x64xf32, #tpu.memory_space<vmem>>, vector<4x1x10x64xf32>
    tpu.vector_store %arg13[%c0_12, %c0_13, %c0_14, %c0_15], %26 {strides = array<i32>} : memref<4x10x10x64xf32, #tpu.memory_space<vmem>>, vector<4x1x10x64xf32>,
    %cst_16 = arith.constant 0.000000e+00 : f32
    %28 = vector.broadcast %cst_16 : f32 to vector<4x1x10x64xf32>
    %c0_17 = arith.constant 0 : index
    %c9 = arith.constant 9 : index
    %c0_18 = arith.constant 0 : index
    %c0_19 = arith.constant 0 : index
    %29 = vector.load %arg13[%c0_17, %c9, %c0_18, %c0_19] : memref<4x10x10x64xf32, #tpu.memory_space<vmem>>, vector<4x1x10x64xf32>
    tpu.vector_store %arg13[%c0_17, %c9, %c0_18, %c0_19], %28 {strides = array<i32>} : memref<4x10x10x64xf32, #tpu.memory_space<vmem>>, vector<4x1x10x64xf32>,
    %cst_20 = arith.constant 0.000000e+00 : f32
    %30 = vector.broadcast %cst_20 : f32 to vector<4x10x1x64xf32>
    %c0_21 = arith.constant 0 : index
    %c0_22 = arith.constant 0 : index
    %c0_23 = arith.constant 0 : index
    %c0_24 = arith.constant 0 : index
    %31 = vector.load %arg13[%c0_21, %c0_22, %c0_23, %c0_24] : memref<4x10x10x64xf32, #tpu.memory_space<vmem>>, vector<4x10x1x64xf32>
    tpu.vector_store %arg13[%c0_21, %c0_22, %c0_23, %c0_24], %30 {strides = array<i32>} : memref<4x10x10x64xf32, #tpu.memory_space<vmem>>, vector<4x10x1x64xf32>,
    %cst_25 = arith.constant 0.000000e+00 : f32
    %32 = vector.broadcast %cst_25 : f32 to vector<4x10x1x64xf32>
    %c0_26 = arith.constant 0 : index
    %c0_27 = arith.constant 0 : index
    %c9_28 = arith.constant 9 : index
    %c0_29 = arith.constant 0 : index
    %33 = vector.load %arg13[%c0_26, %c0_27, %c9_28, %c0_29] : memref<4x10x10x64xf32, #tpu.memory_space<vmem>>, vector<4x10x1x64xf32>
    tpu.vector_store %arg13[%c0_26, %c0_27, %c9_28, %c0_29], %32 {strides = array<i32>} : memref<4x10x10x64xf32, #tpu.memory_space<vmem>>, vector<4x10x1x64xf32>,
    %c0_30 = arith.constant 0 : index
    %c1 = arith.constant 1 : index
    %c1_31 = arith.constant 1 : index
    %c0_32 = arith.constant 0 : index
    %34 = vector.load %arg13[%c0_30, %c1, %c1_31, %c0_32] : memref<4x10x10x64xf32, #tpu.memory_space<vmem>>, vector<4x8x8x64xf32>
    tpu.vector_store %arg13[%c0_30, %c1, %c1_31, %c0_32], %25 {strides = array<i32>} : memref<4x10x10x64xf32, #tpu.memory_space<vmem>>, vector<4x8x8x64xf32>,
    %cst_33 = arith.constant 0.000000e+00 : f32
    %35 = vector.broadcast %cst_33 : f32 to vector<4x8x8x64xf32>
    %c0_34 = arith.constant 0 : index
    %c0_35 = arith.constant 0 : index
    %36 = vector.load %arg4[%c0_34, %c0_35] : memref<9x64xf32, #tpu.memory_space<vmem>>, vector<1x64xf32>
    %c0_36 = arith.constant 0 : index
    %c0_37 = arith.constant 0 : index
    %c0_38 = arith.constant 0 : index
    %c0_39 = arith.constant 0 : index
    %37 = vector.load %arg13[%c0_36, %c0_37, %c0_38, %c0_39] : memref<4x10x10x64xf32, #tpu.memory_space<vmem>>, vector<4x8x8x64xf32>
    %38 = vector.shape_cast %36 : vector<1x64xf32> to vector<1x1x1x64xf32>
    %39 = vector.broadcast %38 : vector<1x1x1x64xf32> to vector<4x8x8x64xf32>
    %40 = arith.mulf %37, %39 : vector<4x8x8x64xf32>
    %41 = arith.addf %35, %40 : vector<4x8x8x64xf32>
    %c1_40 = arith.constant 1 : index
    %c0_41 = arith.constant 0 : index
    %42 = vector.load %arg4[%c1_40, %c0_41] : memref<9x64xf32, #tpu.memory_space<vmem>>, vector<1x64xf32>
    %c0_42 = arith.constant 0 : index
    %c0_43 = arith.constant 0 : index
    %c1_44 = arith.constant 1 : index
    %c0_45 = arith.constant 0 : index
    %43 = vector.load %arg13[%c0_42, %c0_43, %c1_44, %c0_45] : memref<4x10x10x64xf32, #tpu.memory_space<vmem>>, vector<4x8x8x64xf32>
    %44 = vector.shape_cast %42 : vector<1x64xf32> to vector<1x1x1x64xf32>
    %45 = vector.broadcast %44 : vector<1x1x1x64xf32> to vector<4x8x8x64xf32>
    %46 = arith.mulf %43, %45 : vector<4x8x8x64xf32>
    %47 = arith.addf %41, %46 : vector<4x8x8x64xf32>
    %c2 = arith.constant 2 : index
    %c0_46 = arith.constant 0 : index
    %48 = vector.load %arg4[%c2, %c0_46] : memref<9x64xf32, #tpu.memory_space<vmem>>, vector<1x64xf32>
    %c0_47 = arith.constant 0 : index
    %c0_48 = arith.constant 0 : index
    %c2_49 = arith.constant 2 : index
    %c0_50 = arith.constant 0 : index
    %49 = vector.load %arg13[%c0_47, %c0_48, %c2_49, %c0_50] : memref<4x10x10x64xf32, #tpu.memory_space<vmem>>, vector<4x8x8x64xf32>
    %50 = vector.shape_cast %48 : vector<1x64xf32> to vector<1x1x1x64xf32>
    %51 = vector.broadcast %50 : vector<1x1x1x64xf32> to vector<4x8x8x64xf32>
    %52 = arith.mulf %49, %51 : vector<4x8x8x64xf32>
    %53 = arith.addf %47, %52 : vector<4x8x8x64xf32>
    %c3 = arith.constant 3 : index
    %c0_51 = arith.constant 0 : index
    %54 = vector.load %arg4[%c3, %c0_51] : memref<9x64xf32, #tpu.memory_space<vmem>>, vector<1x64xf32>
    %c0_52 = arith.constant 0 : index
    %c1_53 = arith.constant 1 : index
    %c0_54 = arith.constant 0 : index
    %c0_55 = arith.constant 0 : index
    %55 = vector.load %arg13[%c0_52, %c1_53, %c0_54, %c0_55] : memref<4x10x10x64xf32, #tpu.memory_space<vmem>>, vector<4x8x8x64xf32>
    %56 = vector.shape_cast %54 : vector<1x64xf32> to vector<1x1x1x64xf32>
    %57 = vector.broadcast %56 : vector<1x1x1x64xf32> to vector<4x8x8x64xf32>
    %58 = arith.mulf %55, %57 : vector<4x8x8x64xf32>
    %59 = arith.addf %53, %58 : vector<4x8x8x64xf32>
    %c4 = arith.constant 4 : index
    %c0_56 = arith.constant 0 : index
    %60 = vector.load %arg4[%c4, %c0_56] : memref<9x64xf32, #tpu.memory_space<vmem>>, vector<1x64xf32>
    %c0_57 = arith.constant 0 : index
    %c1_58 = arith.constant 1 : index
    %c1_59 = arith.constant 1 : index
    %c0_60 = arith.constant 0 : index
    %61 = vector.load %arg13[%c0_57, %c1_58, %c1_59, %c0_60] : memref<4x10x10x64xf32, #tpu.memory_space<vmem>>, vector<4x8x8x64xf32>
    %62 = vector.shape_cast %60 : vector<1x64xf32> to vector<1x1x1x64xf32>
    %63 = vector.broadcast %62 : vector<1x1x1x64xf32> to vector<4x8x8x64xf32>
    %64 = arith.mulf %61, %63 : vector<4x8x8x64xf32>
    %65 = arith.addf %59, %64 : vector<4x8x8x64xf32>
    %c5 = arith.constant 5 : index
    %c0_61 = arith.constant 0 : index
    %66 = vector.load %arg4[%c5, %c0_61] : memref<9x64xf32, #tpu.memory_space<vmem>>, vector<1x64xf32>
    %c0_62 = arith.constant 0 : index
    %c1_63 = arith.constant 1 : index
    %c2_64 = arith.constant 2 : index
    %c0_65 = arith.constant 0 : index
    %67 = vector.load %arg13[%c0_62, %c1_63, %c2_64, %c0_65] : memref<4x10x10x64xf32, #tpu.memory_space<vmem>>, vector<4x8x8x64xf32>
    %68 = vector.shape_cast %66 : vector<1x64xf32> to vector<1x1x1x64xf32>
    %69 = vector.broadcast %68 : vector<1x1x1x64xf32> to vector<4x8x8x64xf32>
    %70 = arith.mulf %67, %69 : vector<4x8x8x64xf32>
    %71 = arith.addf %65, %70 : vector<4x8x8x64xf32>
    %c6 = arith.constant 6 : index
    %c0_66 = arith.constant 0 : index
    %72 = vector.load %arg4[%c6, %c0_66] : memref<9x64xf32, #tpu.memory_space<vmem>>, vector<1x64xf32>
    %c0_67 = arith.constant 0 : index
    %c2_68 = arith.constant 2 : index
    %c0_69 = arith.constant 0 : index
    %c0_70 = arith.constant 0 : index
    %73 = vector.load %arg13[%c0_67, %c2_68, %c0_69, %c0_70] : memref<4x10x10x64xf32, #tpu.memory_space<vmem>>, vector<4x8x8x64xf32>
    %74 = vector.shape_cast %72 : vector<1x64xf32> to vector<1x1x1x64xf32>
    %75 = vector.broadcast %74 : vector<1x1x1x64xf32> to vector<4x8x8x64xf32>
    %76 = arith.mulf %73, %75 : vector<4x8x8x64xf32>
    %77 = arith.addf %71, %76 : vector<4x8x8x64xf32>
    %c7 = arith.constant 7 : index
    %c0_71 = arith.constant 0 : index
    %78 = vector.load %arg4[%c7, %c0_71] : memref<9x64xf32, #tpu.memory_space<vmem>>, vector<1x64xf32>
    %c0_72 = arith.constant 0 : index
    %c2_73 = arith.constant 2 : index
    %c1_74 = arith.constant 1 : index
    %c0_75 = arith.constant 0 : index
    %79 = vector.load %arg13[%c0_72, %c2_73, %c1_74, %c0_75] : memref<4x10x10x64xf32, #tpu.memory_space<vmem>>, vector<4x8x8x64xf32>
    %80 = vector.shape_cast %78 : vector<1x64xf32> to vector<1x1x1x64xf32>
    %81 = vector.broadcast %80 : vector<1x1x1x64xf32> to vector<4x8x8x64xf32>
    %82 = arith.mulf %79, %81 : vector<4x8x8x64xf32>
    %83 = arith.addf %77, %82 : vector<4x8x8x64xf32>
    %c8 = arith.constant 8 : index
    %c0_76 = arith.constant 0 : index
    %84 = vector.load %arg4[%c8, %c0_76] : memref<9x64xf32, #tpu.memory_space<vmem>>, vector<1x64xf32>
    %c0_77 = arith.constant 0 : index
    %c2_78 = arith.constant 2 : index
    %c2_79 = arith.constant 2 : index
    %c0_80 = arith.constant 0 : index
    %85 = vector.load %arg13[%c0_77, %c2_78, %c2_79, %c0_80] : memref<4x10x10x64xf32, #tpu.memory_space<vmem>>, vector<4x8x8x64xf32>
    %86 = vector.shape_cast %84 : vector<1x64xf32> to vector<1x1x1x64xf32>
    %87 = vector.broadcast %86 : vector<1x1x1x64xf32> to vector<4x8x8x64xf32>
    %88 = arith.mulf %85, %87 : vector<4x8x8x64xf32>
    %89 = arith.addf %83, %88 : vector<4x8x8x64xf32>
    %c0_81 = arith.constant 0 : index
    %c256 = arith.constant 256 : index
    %90 = vector.load %arg11[%c0_81, %c256] : memref<1x1152xf32, #tpu.memory_space<vmem>>, vector<1x64xf32>
    %91 = vector.shape_cast %90 : vector<1x64xf32> to vector<1x1x1x64xf32>
    %92 = vector.broadcast %91 : vector<1x1x1x64xf32> to vector<4x8x8x64xf32>
    %93 = arith.addf %89, %92 : vector<4x8x8x64xf32>
    %94 = arith.negf %93 : vector<4x8x8x64xf32>
    %95 = math.exp %94 : vector<4x8x8x64xf32>
    %cst_82 = arith.constant 1.000000e+00 : f32
    %96 = vector.broadcast %cst_82 : f32 to vector<4x8x8x64xf32>
    %97 = arith.addf %96, %95 : vector<4x8x8x64xf32>
    %98 = arith.divf %96, %97 : vector<4x8x8x64xf32>
    %99 = arith.mulf %93, %98 : vector<4x8x8x64xf32>
    %100 = vector.shape_cast %99 : vector<4x8x8x64xf32> to vector<4x64x64xf32>
    %cst_83 = arith.constant dense<0.000000e+00> : vector<4x64xf32>
    %101 = vector.multi_reduction <add>, %100, %cst_83 [1] : vector<4x64x64xf32> to vector<4x64xf32>
    %cst_84 = arith.constant 6.400000e+01 : f32
    %102 = vector.broadcast %cst_84 : f32 to vector<4x64xf32>
    %103 = arith.divf %101, %102 : vector<4x64xf32>
    %104 = arith.truncf %103 : vector<4x64xf32> to vector<4x64xbf16>
    %c0_85 = arith.constant 0 : index
    %c0_86 = arith.constant 0 : index
    %105 = vector.load %arg5[%c0_85, %c0_86] : memref<64x16xbf16, #tpu.memory_space<vmem>>, vector<64x16xbf16>
    %cst_87 = arith.constant dense<0.000000e+00> : vector<4x16xf32>
    %106 = tpu.matmul %104, %105, %cst_87 {dimension_numbers = #tpu.dot_dimension_numbers<[1], [0], [0], [1], [0, 0, 1, 1], [], []>} : vector<4x64xbf16>, vector<64x16xbf16>, vector<4x16xf32> -> vector<4x16xf32>
    %c0_88 = arith.constant 0 : index
    %c384 = arith.constant 384 : index
    %107 = vector.load %arg11[%c0_88, %c384] : memref<1x1152xf32, #tpu.memory_space<vmem>>, vector<1x16xf32>
    %108 = vector.broadcast %107 : vector<1x16xf32> to vector<4x16xf32>
    %109 = arith.addf %106, %108 : vector<4x16xf32>
    %110 = arith.negf %109 : vector<4x16xf32>
    %111 = math.exp %110 : vector<4x16xf32>
    %cst_89 = arith.constant 1.000000e+00 : f32
    %112 = vector.broadcast %cst_89 : f32 to vector<4x16xf32>
    %113 = arith.addf %112, %111 : vector<4x16xf32>
    %114 = arith.divf %112, %113 : vector<4x16xf32>
    %115 = arith.mulf %109, %114 : vector<4x16xf32>
    %116 = arith.truncf %115 : vector<4x16xf32> to vector<4x16xbf16>
    %c0_90 = arith.constant 0 : index
    %c0_91 = arith.constant 0 : index
    %117 = vector.load %arg6[%c0_90, %c0_91] : memref<16x64xbf16, #tpu.memory_space<vmem>>, vector<16x64xbf16>
    %cst_92 = arith.constant dense<0.000000e+00> : vector<4x64xf32>
    %118 = tpu.matmul %116, %117, %cst_92 {dimension_numbers = #tpu.dot_dimension_numbers<[1], [0], [0], [1], [0, 0, 1, 1], [], []>} : vector<4x16xbf16>, vector<16x64xbf16>, vector<4x64xf32> -> vector<4x64xf32>
    %c0_93 = arith.constant 0 : index
    %c512 = arith.constant 512 : index
    %119 = vector.load %arg11[%c0_93, %c512] : memref<1x1152xf32, #tpu.memory_space<vmem>>, vector<1x64xf32>
    %120 = vector.broadcast %119 : vector<1x64xf32> to vector<4x64xf32>
    %121 = arith.addf %118, %120 : vector<4x64xf32>
    %122 = arith.negf %121 : vector<4x64xf32>
    %123 = math.exp %122 : vector<4x64xf32>
    %cst_94 = arith.constant 1.000000e+00 : f32
    %124 = vector.broadcast %cst_94 : f32 to vector<4x64xf32>
    %125 = arith.addf %124, %123 : vector<4x64xf32>
    %126 = arith.divf %124, %125 : vector<4x64xf32>
    %127 = vector.shape_cast %126 : vector<4x64xf32> to vector<4x1x64xf32>
    %128 = vector.broadcast %127 : vector<4x1x64xf32> to vector<4x64x64xf32>
    %129 = arith.mulf %100, %128 : vector<4x64x64xf32>
    %130 = vector.shape_cast %129 : vector<4x64x64xf32> to vector<256x64xf32>
    %131 = arith.truncf %130 : vector<256x64xf32> to vector<256x64xbf16>
    %c0_95 = arith.constant 0 : index
    %c0_96 = arith.constant 0 : index
    %132 = vector.load %arg7[%c0_95, %c0_96] : memref<64x32xbf16, #tpu.memory_space<vmem>>, vector<64x32xbf16>
    %cst_97 = arith.constant dense<0.000000e+00> : vector<256x32xf32>
    %133 = tpu.matmul %131, %132, %cst_97 {dimension_numbers = #tpu.dot_dimension_numbers<[1], [0], [0], [1], [0, 0, 1, 1], [], []>} : vector<256x64xbf16>, vector<64x32xbf16>, vector<256x32xf32> -> vector<256x32xf32>
    %c0_98 = arith.constant 0 : index
    %c640 = arith.constant 640 : index
    %134 = vector.load %arg11[%c0_98, %c640] : memref<1x1152xf32, #tpu.memory_space<vmem>>, vector<1x32xf32>
    %135 = vector.broadcast %134 : vector<1x32xf32> to vector<256x32xf32>
    %136 = arith.addf %133, %135 : vector<256x32xf32>
    %137 = arith.truncf %136 : vector<256x32xf32> to vector<256x32xbf16>
    %c0_99 = arith.constant 0 : index
    %c0_100 = arith.constant 0 : index
    %138 = vector.load %arg8[%c0_99, %c0_100] : memref<32x128xbf16, #tpu.memory_space<vmem>>, vector<32x128xbf16>
    %cst_101 = arith.constant dense<0.000000e+00> : vector<256x128xf32>
    %139 = tpu.matmul %137, %138, %cst_101 {dimension_numbers = #tpu.dot_dimension_numbers<[1], [0], [0], [1], [0, 0, 1, 1], [], []>} : vector<256x32xbf16>, vector<32x128xbf16>, vector<256x128xf32> -> vector<256x128xf32>
    %c0_102 = arith.constant 0 : index
    %c768 = arith.constant 768 : index
    %140 = vector.load %arg11[%c0_102, %c768] : memref<1x1152xf32, #tpu.memory_space<vmem>>, vector<1x128xf32>
    %141 = vector.broadcast %140 : vector<1x128xf32> to vector<256x128xf32>
    %142 = arith.addf %139, %141 : vector<256x128xf32>
    %143 = arith.negf %142 : vector<256x128xf32>
    %144 = math.exp %143 : vector<256x128xf32>
    %cst_103 = arith.constant 1.000000e+00 : f32
    %145 = vector.broadcast %cst_103 : f32 to vector<256x128xf32>
    %146 = arith.addf %145, %144 : vector<256x128xf32>
    %147 = arith.divf %145, %146 : vector<256x128xf32>
    %148 = arith.mulf %142, %147 : vector<256x128xf32>
    %149 = vector.shape_cast %148 : vector<256x128xf32> to vector<4x64x128xf32>
    %cst_104 = arith.constant dense<0.000000e+00> : vector<4x128xf32>
    %150 = vector.multi_reduction <add>, %149, %cst_104 [1] : vector<4x64x128xf32> to vector<4x128xf32>
    %cst_105 = arith.constant 6.400000e+01 : f32
    %151 = vector.broadcast %cst_105 : f32 to vector<4x128xf32>
    %152 = arith.divf %150, %151 : vector<4x128xf32>
    %153 = arith.truncf %152 : vector<4x128xf32> to vector<4x128xbf16>
    %c0_106 = arith.constant 0 : index
    %c0_107 = arith.constant 0 : index
    %154 = vector.load %arg9[%c0_106, %c0_107] : memref<128x128xbf16, #tpu.memory_space<vmem>>, vector<128x128xbf16>
    %cst_108 = arith.constant dense<0.000000e+00> : vector<4x128xf32>
    %155 = tpu.matmul %153, %154, %cst_108 {dimension_numbers = #tpu.dot_dimension_numbers<[1], [0], [0], [1], [0, 0, 1, 1], [], []>} : vector<4x128xbf16>, vector<128x128xbf16>, vector<4x128xf32> -> vector<4x128xf32>
    %c0_109 = arith.constant 0 : index
    %c896 = arith.constant 896 : index
    %156 = vector.load %arg11[%c0_109, %c896] : memref<1x1152xf32, #tpu.memory_space<vmem>>, vector<1x128xf32>
    %157 = vector.broadcast %156 : vector<1x128xf32> to vector<4x128xf32>
    %158 = arith.addf %155, %157 : vector<4x128xf32>
    %cst_110 = arith.constant 0.000000e+00 : f32
    %159 = vector.broadcast %cst_110 : f32 to vector<4x128xf32>
    %160 = arith.maximumf %158, %159 : vector<4x128xf32>
    %161 = arith.truncf %160 : vector<4x128xf32> to vector<4x128xbf16>
    %c0_111 = arith.constant 0 : index
    %c0_112 = arith.constant 0 : index
    %162 = vector.load %arg10[%c0_111, %c0_112] : memref<128x128xbf16, #tpu.memory_space<vmem>>, vector<128x128xbf16>
    %cst_113 = arith.constant dense<0.000000e+00> : vector<4x128xf32>
    %163 = tpu.matmul %161, %162, %cst_113 {dimension_numbers = #tpu.dot_dimension_numbers<[1], [0], [0], [1], [0, 0, 1, 1], [], []>} : vector<4x128xbf16>, vector<128x128xbf16>, vector<4x128xf32> -> vector<4x128xf32>
    %c0_114 = arith.constant 0 : index
    %c1024 = arith.constant 1024 : index
    %164 = vector.load %arg11[%c0_114, %c1024] : memref<1x1152xf32, #tpu.memory_space<vmem>>, vector<1x128xf32>
    %165 = vector.broadcast %164 : vector<1x128xf32> to vector<4x128xf32>
    %166 = arith.addf %163, %165 : vector<4x128xf32>
    %c0_115 = arith.constant 0 : index
    %c0_116 = arith.constant 0 : index
    %c0_117 = arith.constant 0 : index
    %167 = vector.load %arg12[%c0_115, %c0_116, %c0_117] : memref<1x4x128xf32, #tpu.memory_space<vmem>>, vector<1x4x128xf32>
    %168 = vector.shape_cast %167 : vector<1x4x128xf32> to vector<4x128xf32>
    %169 = vector.shape_cast %166 : vector<4x128xf32> to vector<1x4x128xf32>
    tpu.vector_store %arg12[%c0_115, %c0_116, %c0_117], %169 {strides = array<i32>} : memref<1x4x128xf32, #tpu.memory_space<vmem>>, vector<1x4x128xf32>,
    return
  }
  func.func @transform_0(%arg0: i32) -> (i32, i32) {
    %c0_i32 = arith.constant 0 : i32
    %c0_i32_0 = arith.constant 0 : i32
    return %arg0, %c0_i32 : i32, i32
  }
  func.func @transform_1(%arg0: i32) -> (i32, i32) {
    %c0_i32 = arith.constant 0 : i32
    %c0_i32_0 = arith.constant 0 : i32
    %c0_i32_1 = arith.constant 0 : i32
    return %c0_i32, %c0_i32_0 : i32, i32
  }
  func.func @transform_2(%arg0: i32) -> (i32, i32) {
    %c0_i32 = arith.constant 0 : i32
    %c0_i32_0 = arith.constant 0 : i32
    %c0_i32_1 = arith.constant 0 : i32
    return %c0_i32, %c0_i32_0 : i32, i32
  }
  func.func @transform_3(%arg0: i32) -> (i32, i32) {
    %c0_i32 = arith.constant 0 : i32
    %c0_i32_0 = arith.constant 0 : i32
    %c0_i32_1 = arith.constant 0 : i32
    return %c0_i32, %c0_i32_0 : i32, i32
  }
  func.func @transform_4(%arg0: i32) -> (i32, i32) {
    %c0_i32 = arith.constant 0 : i32
    %c0_i32_0 = arith.constant 0 : i32
    %c0_i32_1 = arith.constant 0 : i32
    return %c0_i32, %c0_i32_0 : i32, i32
  }
  func.func @transform_5(%arg0: i32) -> (i32, i32) {
    %c0_i32 = arith.constant 0 : i32
    %c0_i32_0 = arith.constant 0 : i32
    %c0_i32_1 = arith.constant 0 : i32
    return %c0_i32, %c0_i32_0 : i32, i32
  }
  func.func @transform_6(%arg0: i32) -> (i32, i32) {
    %c0_i32 = arith.constant 0 : i32
    %c0_i32_0 = arith.constant 0 : i32
    %c0_i32_1 = arith.constant 0 : i32
    return %c0_i32, %c0_i32_0 : i32, i32
  }
  func.func @transform_7(%arg0: i32) -> (i32, i32) {
    %c0_i32 = arith.constant 0 : i32
    %c0_i32_0 = arith.constant 0 : i32
    %c0_i32_1 = arith.constant 0 : i32
    return %c0_i32, %c0_i32_0 : i32, i32
  }
  func.func @transform_8(%arg0: i32) -> (i32, i32) {
    %c0_i32 = arith.constant 0 : i32
    %c0_i32_0 = arith.constant 0 : i32
    %c0_i32_1 = arith.constant 0 : i32
    return %c0_i32, %c0_i32_0 : i32, i32
  }
  func.func @transform_9(%arg0: i32) -> (i32, i32) {
    %c0_i32 = arith.constant 0 : i32
    %c0_i32_0 = arith.constant 0 : i32
    %c0_i32_1 = arith.constant 0 : i32
    return %c0_i32, %c0_i32_0 : i32, i32
  }
  func.func @transform_10(%arg0: i32) -> (i32, i32) {
    %c0_i32 = arith.constant 0 : i32
    %c0_i32_0 = arith.constant 0 : i32
    %c0_i32_1 = arith.constant 0 : i32
    return %c0_i32, %c0_i32_0 : i32, i32
  }
  func.func @transform_11(%arg0: i32) -> (i32, i32, i32) {
    %c0_i32 = arith.constant 0 : i32
    %c0_i32_0 = arith.constant 0 : i32
    %c0_i32_1 = arith.constant 0 : i32
    return %arg0, %c0_i32, %c0_i32_0 : i32, i32, i32
  }
}

</mosaic_0001>

<llo_original>
// kernel: custom-call
$region0: #{custom-call}
  %s0 = inlined_call_operand.vmem [shape: f32[1152], index: 0, kind: output, shape index: {}]

// kernel: art_efficientnet_forward.1
$region0: #{art_efficientnet_forward.1}
  #allocation0 [shape = 'u32[]', space=smem, size = 0x4, offset = 0x4, fixed_abs, tag = 'smem constant byte address 0x4 - core index']
  #allocation1 [shape = 'u32[72,128]{1,0:T(1,128)}', space=vmem, size = 0x9000, scoped, tag = 'internal scratch']
  #allocation2 [shape = 'f32[4,10,10,64]{3,2,1,0:T(8,128)}', space=vmem, size = 0x50000, scoped, tag = 'scratch operand']
  %s0 = inlined_call_operand.vmem [shape: f32[512,32], index: 0, kind: input, shape index: {}]
  %s1 = inlined_call_operand.vmem [shape: bf16[32,32], index: 1, kind: input, shape index: {}]
  %s2 = inlined_call_operand.vmem [shape: bf16[32,64], index: 2, kind: input, shape index: {}]
  %s3 = inlined_call_operand.vmem [shape: f32[9,64], index: 3, kind: input, shape index: {}]
  %s4 = inlined_call_operand.vmem [shape: bf16[64,16], index: 4, kind: input, shape index: {}]
  %s5 = inlined_call_operand.vmem [shape: bf16[16,64], index: 5, kind: input, shape index: {}]
  %s6 = inlined_call_operand.vmem [shape: bf16[64,32], index: 6, kind: input, shape index: {}]
  %s7 = inlined_call_operand.vmem [shape: bf16[32,128], index: 7, kind: input, shape index: {}]
  %s8 = inlined_call_operand.vmem [shape: bf16[128,128], index: 8, kind: input, shape index: {}]
  %s9 = inlined_call_operand.vmem [shape: bf16[128,128], index: 9, kind: input, shape index: {}]
  %s10 = inlined_call_operand.vmem [shape: f32[1,1152], index: 10, kind: input, shape index: {}]
  %s11 = inlined_call_operand.hbm [shape: f32[2,4,128], index: 11, kind: output, shape index: {}]
  %s12 = sld [smem:[#allocation0]]
  $region77: #{art_efficientnet_forward.1} parent=0
    _
  %s14 = ssub.s32 1, %s12
  %s15 = scalar_select 0, %s14, %s12
  $region1: #{art_efficientnet_forward.1} parent=0
    #allocation3 [shape = 'u8[4096]{0}', space=vmem, size = 0x1000, scoped, tag = 'output window, operand 0']
    #allocation4 [shape = 's32[2]{0}', space=sflag, size = 0x8, scoped, tag = 'scoped memory for art_efficientnet_forward.1']
    %16 = vsyncpa [#allocation4], 0
    %s17 = scalar_lea.sflag [#allocation4], 1
    %18 = vsyncpa %s17, 0
    loop: start=0, step=1, limit=4
    $region2: #{art_efficientnet_forward.1} parent=1 // loop_pre_header
      _
    $region3: #{art_efficientnet_forward.1} parent=1 // loop_header
      %s20 = sphi 0, %s24
      %p21 = scmp.ge.s32.totalorder %s20, 4
      %s30 = sphi 0, %s32
      %s33 = sphi 0, %s30
      %s34 = sphi 0, %s33
      %s50 = sphi 0, %s34
      %s54 = sphi 0, %s54
      %s56 = sphi 0, %s54
      %s57 = sphi 0, %s56
      %s71 = sphi 0, %s57
      %s75 = sphi 0, %s75
      %s77 = sphi 0, %s75
      %s78 = sphi 0, %s77
      %s92 = sphi 0, %s78
      %s96 = sphi 0, %s96
      %s98 = sphi 0, %s96
      %s99 = sphi 0, %s98
      %s113 = sphi 0, %s99
      %s117 = sphi 0, %s117
      %s119 = sphi 0, %s117
      %s120 = sphi 0, %s119
      %s134 = sphi 0, %s120
      %s138 = sphi 0, %s138
      %s140 = sphi 0, %s138
      %s141 = sphi 0, %s140
      %s155 = sphi 0, %s141
      %s159 = sphi 0, %s159
      %s161 = sphi 0, %s159
      %s162 = sphi 0, %s161
      %s176 = sphi 0, %s162
      %s180 = sphi 0, %s180
      %s182 = sphi 0, %s180
      %s183 = sphi 0, %s182
      %s197 = sphi 0, %s183
      %s201 = sphi 0, %s201
      %s203 = sphi 0, %s201
      %s204 = sphi 0, %s203
      %s218 = sphi 0, %s204
      %s222 = sphi 0, %s222
      %s224 = sphi 0, %s222
      %s225 = sphi 0, %s224
      %s239 = sphi 0, %s225
      %s243 = sphi 0, %s243
      %s245 = sphi 0, %s243
      %s246 = sphi 0, %s245
      %s260 = sphi 0, %s246
      %s266 = sphi 0, %s268
      %s269 = sphi 0, %s266
      %s270 = sphi 0, %s269
      %s286 = sphi 0, %s270
    $region4: #{art_efficientnet_forward.1} parent=1 // loop_header_branch
      %23 = sbr.rel (%p21) target = $region8
    $region5: #{art_efficientnet_forward.1} parent=1 // loop_body
      %s25 = ssub.s32 %s20, 1
      %s26 = ssub.s32 %s20, 2
      %s27 = sadd.s32 %s20, 1
      %s28 = ssub.s32 %s20, %s27
      %p29 = scmp.eq.s32.totalorder %s28, 0
      %s31 = sadd.s32 %s30, 1
      %s32 = scalar_select %p29, %s30, %s31
      %p35 = pneg %p29
      %p36 = scmp.eq.s32.totalorder %s20, 1
      %p37 = por %p35, %p36
      %p38 = scmp.ne.s32.totalorder %s30, %s33
      %p39 = scmp.eq.s32.totalorder %s20, 0
      %p40 = por %p38, %p39
      %p41 = scmp.ne.s32.totalorder %s30, %s33
      %p42 = scmp.eq.s32.totalorder %s25, 1
      %p43 = por %p41, %p42
      %p44 = scmp.ne.s32.totalorder %s33, %s34
      %p45 = scmp.eq.s32.totalorder %s25, 0
      %p46 = por %p44, %p45
      %p47 = scmp.ne.s32.totalorder %s33, %s34
      %p48 = scmp.eq.s32.totalorder %s26, 1
      %p49 = por %p47, %p48
      %p51 = scmp.ne.s32.totalorder %s34, %s50
      %p52 = scmp.eq.s32.totalorder %s26, 0
      %p53 = por %p51, %p52
      %s55 = sadd.s32 %s54, 1
      %p58 = scmp.eq.s32.totalorder %s20, 1
      %p59 = scmp.ne.s32.totalorder %s54, %s56
      %p60 = scmp.eq.s32.totalorder %s20, 0
      %p61 = por %p59, %p60
      %p62 = scmp.ne.s32.totalorder %s54, %s56
      %p63 = scmp.eq.s32.totalorder %s25, 1
      %p64 = por %p62, %p63
      %p65 = scmp.ne.s32.totalorder %s56, %s57
      %p66 = scmp.eq.s32.totalorder %s25, 0
      %p67 = por %p65, %p66
      %p68 = scmp.ne.s32.totalorder %s56, %s57
      %p69 = scmp.eq.s32.totalorder %s26, 1
      %p70 = por %p68, %p69
      %p72 = scmp.ne.s32.totalorder %s57, %s71
      %p73 = scmp.eq.s32.totalorder %s26, 0
      %p74 = por %p72, %p73
      %s76 = sadd.s32 %s75, 1
      %p79 = scmp.eq.s32.totalorder %s20, 1
      %p80 = scmp.ne.s32.totalorder %s75, %s77
      %p81 = scmp.eq.s32.totalorder %s20, 0
      %p82 = por %p80, %p81
      %p83 = scmp.ne.s32.totalorder %s75, %s77
      %p84 = scmp.eq.s32.totalorder %s25, 1
      %p85 = por %p83, %p84
      %p86 = scmp.ne.s32.totalorder %s77, %s78
      %p87 = scmp.eq.s32.totalorder %s25, 0
      %p88 = por %p86, %p87
      %p89 = scmp.ne.s32.totalorder %s77, %s78
      %p90 = scmp.eq.s32.totalorder %s26, 1
      %p91 = por %p89, %p90
      %p93 = scmp.ne.s32.totalorder %s78, %s92
      %p94 = scmp.eq.s32.totalorder %s26, 0
      %p95 = por %p93, %p94
      %s97 = sadd.s32 %s96, 1
      %p100 = scmp.eq.s32.totalorder %s20, 1
      %p101 = scmp.ne.s32.totalorder %s96, %s98
      %p102 = scmp.eq.s32.totalorder %s20, 0
      %p103 = por %p101, %p102
      %p104 = scmp.ne.s32.totalorder %s96, %s98
      %p105 = scmp.eq.s32.totalorder %s25, 1
      %p106 = por %p104, %p105
      %p107 = scmp.ne.s32.totalorder %s98, %s99
      %p108 = scmp.eq.s32.totalorder %s25, 0
      %p109 = por %p107, %p108
      %p110 = scmp.ne.s32.totalorder %s98, %s99
      %p111 = scmp.eq.s32.totalorder %s26, 1
      %p112 = por %p110, %p111
      %p114 = scmp.ne.s32.totalorder %s99, %s113
      %p115 = scmp.eq.s32.totalorder %s26, 0
      %p116 = por %p114, %p115
      %s118 = sadd.s32 %s117, 1
      %p121 = scmp.eq.s32.totalorder %s20, 1
      %p122 = scmp.ne.s32.totalorder %s117, %s119
      %p123 = scmp.eq.s32.totalorder %s20, 0
      %p124 = por %p122, %p123
      %p125 = scmp.ne.s32.totalorder %s117, %s119
      %p126 = scmp.eq.s32.totalorder %s25, 1
      %p127 = por %p125, %p126
      %p128 = scmp.ne.s32.totalorder %s119, %s120
      %p129 = scmp.eq.s32.totalorder %s25, 0
      %p130 = por %p128, %p129
      %p131 = scmp.ne.s32.totalorder %s119, %s120
      %p132 = scmp.eq.s32.totalorder %s26, 1
      %p133 = por %p131, %p132
      %p135 = scmp.ne.s32.totalorder %s120, %s134
      %p136 = scmp.eq.s32.totalorder %s26, 0
      %p137 = por %p135, %p136
      %s139 = sadd.s32 %s138, 1
      %p142 = scmp.eq.s32.totalorder %s20, 1
      %p143 = scmp.ne.s32.totalorder %s138, %s140
      %p144 = scmp.eq.s32.totalorder %s20, 0
      %p145 = por %p143, %p144
      %p146 = scmp.ne.s32.totalorder %s138, %s140
      %p147 = scmp.eq.s32.totalorder %s25, 1
      %p148 = por %p146, %p147
      %p149 = scmp.ne.s32.totalorder %s140, %s141
      %p150 = scmp.eq.s32.totalorder %s25, 0
      %p151 = por %p149, %p150
      %p152 = scmp.ne.s32.totalorder %s140, %s141
      %p153 = scmp.eq.s32.totalorder %s26, 1
      %p154 = por %p152, %p153
      %p156 = scmp.ne.s32.totalorder %s141, %s155
      %p157 = scmp.eq.s32.totalorder %s26, 0
      %p158 = por %p156, %p157
      %s160 = sadd.s32 %s159, 1
      %p163 = scmp.eq.s32.totalorder %s20, 1
      %p164 = scmp.ne.s32.totalorder %s159, %s161
      %p165 = scmp.eq.s32.totalorder %s20, 0
      %p166 = por %p164, %p165
      %p167 = scmp.ne.s32.totalorder %s159, %s161
      %p168 = scmp.eq.s32.totalorder %s25, 1
      %p169 = por %p167, %p168
      %p170 = scmp.ne.s32.totalorder %s161, %s162
      %p171 = scmp.eq.s32.totalorder %s25, 0
      %p172 = por %p170, %p171
      %p173 = scmp.ne.s32.totalorder %s161, %s162
      %p174 = scmp.eq.s32.totalorder %s26, 1
      %p175 = por %p173, %p174
      %p177 = scmp.ne.s32.totalorder %s162, %s176
      %p178 = scmp.eq.s32.totalorder %s26, 0
      %p179 = por %p177, %p178
      %s181 = sadd.s32 %s180, 1
      %p184 = scmp.eq.s32.totalorder %s20, 1
      %p185 = scmp.ne.s32.totalorder %s180, %s182
      %p186 = scmp.eq.s32.totalorder %s20, 0
      %p187 = por %p185, %p186
      %p188 = scmp.ne.s32.totalorder %s180, %s182
      %p189 = scmp.eq.s32.totalorder %s25, 1
      %p190 = por %p188, %p189
      %p191 = scmp.ne.s32.totalorder %s182, %s183
      %p192 = scmp.eq.s32.totalorder %s25, 0
      %p193 = por %p191, %p192
      %p194 = scmp.ne.s32.totalorder %s182, %s183
      %p195 = scmp.eq.s32.totalorder %s26, 1
      %p196 = por %p194, %p195
      %p198 = scmp.ne.s32.totalorder %s183, %s197
      %p199 = scmp.eq.s32.totalorder %s26, 0
      %p200 = por %p198, %p199
      %s202 = sadd.s32 %s201, 1
      %p205 = scmp.eq.s32.totalorder %s20, 1
      %p206 = scmp.ne.s32.totalorder %s201, %s203
      %p207 = scmp.eq.s32.totalorder %s20, 0
      %p208 = por %p206, %p207
      %p209 = scmp.ne.s32.totalorder %s201, %s203
      %p210 = scmp.eq.s32.totalorder %s25, 1
      %p211 = por %p209, %p210
      %p212 = scmp.ne.s32.totalorder %s203, %s204
      %p213 = scmp.eq.s32.totalorder %s25, 0
      %p214 = por %p212, %p213
      %p215 = scmp.ne.s32.totalorder %s203, %s204
      %p216 = scmp.eq.s32.totalorder %s26, 1
      %p217 = por %p215, %p216
      %p219 = scmp.ne.s32.totalorder %s204, %s218
      %p220 = scmp.eq.s32.totalorder %s26, 0
      %p221 = por %p219, %p220
      %s223 = sadd.s32 %s222, 1
      %p226 = scmp.eq.s32.totalorder %s20, 1
      %p227 = scmp.ne.s32.totalorder %s222, %s224
      %p228 = scmp.eq.s32.totalorder %s20, 0
      %p229 = por %p227, %p228
      %p230 = scmp.ne.s32.totalorder %s222, %s224
      %p231 = scmp.eq.s32.totalorder %s25, 1
      %p232 = por %p230, %p231
      %p233 = scmp.ne.s32.totalorder %s224, %s225
      %p234 = scmp.eq.s32.totalorder %s25, 0
      %p235 = por %p233, %p234
      %p236 = scmp.ne.s32.totalorder %s224, %s225
      %p237 = scmp.eq.s32.totalorder %s26, 1
      %p238 = por %p236, %p237
      %p240 = scmp.ne.s32.totalorder %s225, %s239
      %p241 = scmp.eq.s32.totalorder %s26, 0
      %p242 = por %p240, %p241
      %s244 = sadd.s32 %s243, 1
      %p247 = scmp.eq.s32.totalorder %s20, 1
      %p248 = scmp.ne.s32.totalorder %s243, %s245
      %p249 = scmp.eq.s32.totalorder %s20, 0
      %p250 = por %p248, %p249
      %p251 = scmp.ne.s32.totalorder %s243, %s245
      %p252 = scmp.eq.s32.totalorder %s25, 1
      %p253 = por %p251, %p252
      %p254 = scmp.ne.s32.totalorder %s245, %s246
      %p255 = scmp.eq.s32.totalorder %s25, 0
      %p256 = por %p254, %p255
      %p257 = scmp.ne.s32.totalorder %s245, %s246
      %p258 = scmp.eq.s32.totalorder %s26, 1
      %p259 = por %p257, %p258
      %p261 = scmp.ne.s32.totalorder %s246, %s260
      %p262 = scmp.eq.s32.totalorder %s26, 0
      %p263 = por %p261, %p262
      %s264 = ssub.s32 %s20, %s27
      %p265 = scmp.eq.s32.totalorder %s264, 0
      %s267 = sadd.s32 %s266, 1
      %s268 = scalar_select %p265, %s266, %s267
      %p271 = pneg %p265
      %p272 = scmp.eq.s32.totalorder %s20, 1
      %p273 = por %p271, %p272
      %p274 = scmp.ne.s32.totalorder %s266, %s269
      %p275 = scmp.eq.s32.totalorder %s20, 0
      %p276 = por %p274, %p275
      %p277 = scmp.ne.s32.totalorder %s266, %s269
      %p278 = scmp.eq.s32.totalorder %s25, 1
      %p279 = por %p277, %p278
      %p280 = scmp.ne.s32.totalorder %s269, %s270
      %p281 = scmp.eq.s32.totalorder %s25, 0
      %p282 = por %p280, %p281
      %p283 = scmp.ne.s32.totalorder %s269, %s270
      %p284 = scmp.eq.s32.totalorder %s26, 1
      %p285 = por %p283, %p284
      %p287 = scmp.ne.s32.totalorder %s270, %s286
      %p288 = scmp.eq.s32.totalorder %s26, 0
      %p289 = por %p287, %p288
      %p290 = scmp.le.s32.totalorder 1, %s20
      %p291 = scmp.lt.s32.totalorder %s20, 3
      %p292 = pnand %p290, %p291
      %p293 = pneg %p292
      // Predicated region
      $region9: #{art_efficientnet_forward.1} parent=5 // pred_check
        _
      $region10: #{art_efficientnet_forward.1} parent=5 // pred_check_branch
        %295 = sbr.rel (%p292) target = $region12
      $region11: #{art_efficientnet_forward.1} parent=5 // pred_region
        %s296 = ssub.s32 %s20, 1
        // Predicated region
        $region13: #{art_efficientnet_forward.1} parent=11 // pred_check
          %p297 = pneg %p67
        $region14: #{art_efficientnet_forward.1} parent=11 // pred_check_branch
          %299 = sbr.rel (%p297) target = $region16
        $region15: #{art_efficientnet_forward.1} parent=11 // pred_region
          _
        $region16: #{art_efficientnet_forward.1} parent=11 // pred_fallthru
          _
        // Predicated region
        $region17: #{art_efficientnet_forward.1} parent=11 // pred_check
          %p300 = pneg %p88
        $region18: #{art_efficientnet_forward.1} parent=11 // pred_check_branch
          %302 = sbr.rel (%p300) target = $region20
        $region19: #{art_efficientnet_forward.1} parent=11 // pred_region
          _
        $region20: #{art_efficientnet_forward.1} parent=11 // pred_fallthru
          _
        // Predicated region
        $region21: #{art_efficientnet_forward.1} parent=11 // pred_check
          %p303 = pneg %p109
        $region22: #{art_efficientnet_forward.1} parent=11 // pred_check_branch
          %305 = sbr.rel (%p303) target = $region24
        $region23: #{art_efficientnet_forward.1} parent=11 // pred_region
          _
        $region24: #{art_efficientnet_forward.1} parent=11 // pred_fallthru
          _
        // Predicated region
        $region25: #{art_efficientnet_forward.1} parent=11 // pred_check
          %p306 = pneg %p130
        $region26: #{art_efficientnet_forward.1} parent=11 // pred_check_branch
          %308 = sbr.rel (%p306) target = $region28
        $region27: #{art_efficientnet_forward.1} parent=11 // pred_region
          _
        $region28: #{art_efficientnet_forward.1} parent=11 // pred_fallthru
          _
        // Predicated region
        $region29: #{art_efficientnet_forward.1} parent=11 // pred_check
          %p309 = pneg %p151
        $region30: #{art_efficientnet_forward.1} parent=11 // pred_check_branch
          %311 = sbr.rel (%p309) target = $region32
        $region31: #{art_efficientnet_forward.1} parent=11 // pred_region
          _
        $region32: #{art_efficientnet_forward.1} parent=11 // pred_fallthru
          _
        // Predicated region
        $region33: #{art_efficientnet_forward.1} parent=11 // pred_check
          %p312 = pneg %p172
        $region34: #{art_efficientnet_forward.1} parent=11 // pred_check_branch
          %314 = sbr.rel (%p312) target = $region36
        $region35: #{art_efficientnet_forward.1} parent=11 // pred_region
          _
        $region36: #{art_efficientnet_forward.1} parent=11 // pred_fallthru
          _
        // Predicated region
        $region37: #{art_efficientnet_forward.1} parent=11 // pred_check
          %p315 = pneg %p193
        $region38: #{art_efficientnet_forward.1} parent=11 // pred_check_branch
          %317 = sbr.rel (%p315) target = $region40
        $region39: #{art_efficientnet_forward.1} parent=11 // pred_region
          _
        $region40: #{art_efficientnet_forward.1} parent=11 // pred_fallthru
          _
        // Predicated region
        $region41: #{art_efficientnet_forward.1} parent=11 // pred_check
          %p318 = pneg %p214
        $region42: #{art_efficientnet_forward.1} parent=11 // pred_check_branch
          %320 = sbr.rel (%p318) target = $region44
        $region43: #{art_efficientnet_forward.1} parent=11 // pred_region
          _
        $region44: #{art_efficientnet_forward.1} parent=11 // pred_fallthru
          _
        // Predicated region
        $region45: #{art_efficientnet_forward.1} parent=11 // pred_check
          %p321 = pneg %p235
        $region46: #{art_efficientnet_forward.1} parent=11 // pred_check_branch
          %323 = sbr.rel (%p321) target = $region48
        $region47: #{art_efficientnet_forward.1} parent=11 // pred_region
          _
        $region48: #{art_efficientnet_forward.1} parent=11 // pred_fallthru
          _
        // Predicated region
        $region49: #{art_efficientnet_forward.1} parent=11 // pred_check
          %p324 = pneg %p256
        $region50: #{art_efficientnet_forward.1} parent=11 // pred_check_branch
          %326 = sbr.rel (%p324) target = $region52
        $region51: #{art_efficientnet_forward.1} parent=11 // pred_region
          _
        $region52: #{art_efficientnet_forward.1} parent=11 // pred_fallthru
          _
      $region12: #{art_efficientnet_forward.1} parent=5 // pred_fallthru
        _
      %p327 = scmp.lt.s32.totalorder %s20, 2
      // Predicated region
      $region53: #{art_efficientnet_forward.1} parent=5 // pred_check
        %p328 = pneg %p327
      $region54: #{art_efficientnet_forward.1} parent=5 // pred_check_branch
        %330 = sbr.rel (%p328) target = $region56
      $region55: #{art_efficientnet_forward.1} parent=5 // pred_region
        // Predicated region
        $region57: #{art_efficientnet_forward.1} parent=55 // pred_check
          %p331 = pneg %p40
        $region58: #{art_efficientnet_forward.1} parent=55 // pred_check_branch
          %333 = sbr.rel (%p331) target = $region60
        $region59: #{art_efficientnet_forward.1} parent=55 // pred_region
          %s334 = smul.u32 32, %s20
          %p335 = scmp.lt.s32.totalorder %s334, 63
          %s336 = scalar_select %p335, %s334, 63
          %s337 = smul.addr %s336, 8
          %s338 = scalar_lea.vmem %s0, %s337
          %s339 = smul.u32 32, %s20
        $region60: #{art_efficientnet_forward.1} parent=55 // pred_fallthru
          _
      $region56: #{art_efficientnet_forward.1} parent=5 // pred_fallthru
        _
      %p340 = scmp.le.s32.totalorder 1, %s20
      %p341 = scmp.lt.s32.totalorder %s20, 3
      %p342 = pnand %p340, %p341
      %p343 = pneg %p342
      // Predicated region
      $region61: #{art_efficientnet_forward.1} parent=5 // pred_check
        _
      $region62: #{art_efficientnet_forward.1} parent=5 // pred_check_branch
        %345 = sbr.rel (%p342) target = $region64
      $region63: #{art_efficientnet_forward.1} parent=5 // pred_region
        %s346 = ssub.s32 %s20, 1
        %s347 = smul.u32 32, %s25
        %p348 = scmp.lt.s32.totalorder %s347, 63
        %s349 = scalar_select %p348, %s347, 63
        %s350 = smul.addr %s349, 8
        %s351 = scalar_lea.vmem %s0, %s350
        %p352 = pneg %p46
        %p353 = pneg %p43
        %p354 = pneg %p67
        %p355 = pneg %p64
        %p356 = pneg %p88
        %p357 = pneg %p85
        %p358 = pneg %p109
        %p359 = pneg %p106
        %p360 = pneg %p130
        %p361 = pneg %p127
        %p362 = pneg %p151
        %p363 = pneg %p148
        %p364 = pneg %p172
        %p365 = pneg %p169
        %p366 = pneg %p193
        %p367 = pneg %p190
        %p368 = pneg %p214
        %p369 = pneg %p211
        %p370 = pneg %p235
        %p371 = pneg %p232
        %p372 = pneg %p256
        %p373 = pneg %p253
        %p374 = pneg %p282
        %p375 = pneg %p279
        %s376 = sand.u32 %s269, 1
        %s377 = scalar_lea.sflag [#allocation4], %s376
        %s378 = sand.u32 %s269, 1
        %s379 = smul.addr %s378, 4
        %s380 = scalar_lea.vmem [#allocation3], %s379
        %s381 = smul.u32 32, %s25
        %p382 = scmp.lt.s32.totalorder %s381, 63
        %s383 = scalar_select %p382, %s381, 63
        %s384 = smul.addr %s383, 8
        %s385 = scalar_lea.vmem %s0, %s384
        %s386 = smul.u32 32, %s25
        %v388 = vld [vmem:[%s385] sm:$0xff]
        %v389 = vld [vmem:[%s385 + $0x8] sm:$0xff]
        %v390 = vld [vmem:[%s385 + $0x10] sm:$0xff]
        %v391 = vld [vmem:[%s385 + $0x18] sm:$0xff]
        %v392 = vld [vmem:[%s385 + $0x20] sm:$0xff]
        %v393 = vld [vmem:[%s385 + $0x28] sm:$0xff]
        %v394 = vld [vmem:[%s385 + $0x30] sm:$0xff]
        %v395 = vld [vmem:[%s385 + $0x38] sm:$0xff]
        %v396 = vld [vmem:[%s385 + $0x40] sm:$0xff]
        %v397 = vld [vmem:[%s385 + $0x48] sm:$0xff]
        %v398 = vld [vmem:[%s385 + $0x50] sm:$0xff]
        %v399 = vld [vmem:[%s385 + $0x58] sm:$0xff]
        %v400 = vld [vmem:[%s385 + $0x60] sm:$0xff]
        %v401 = vld [vmem:[%s385 + $0x68] sm:$0xff]
        %v402 = vld [vmem:[%s385 + $0x70] sm:$0xff]
        %v403 = vld [vmem:[%s385 + $0x78] sm:$0xff]
        %v404 = vld [vmem:[%s385 + $0x80] sm:$0xff]
        %v405 = vld [vmem:[%s385 + $0x88] sm:$0xff]
        %v406 = vld [vmem:[%s385 + $0x90] sm:$0xff]
        %v407 = vld [vmem:[%s385 + $0x98] sm:$0xff]
        %v408 = vld [vmem:[%s385 + $0xa0] sm:$0xff]
        %v409 = vld [vmem:[%s385 + $0xa8] sm:$0xff]
        %v410 = vld [vmem:[%s385 + $0xb0] sm:$0xff]
        %v411 = vld [vmem:[%s385 + $0xb8] sm:$0xff]
        %v412 = vld [vmem:[%s385 + $0xc0] sm:$0xff]
        %v413 = vld [vmem:[%s385 + $0xc8] sm:$0xff]
        %v414 = vld [vmem:[%s385 + $0xd0] sm:$0xff]
        %v415 = vld [vmem:[%s385 + $0xd8] sm:$0xff]
        %v416 = vld [vmem:[%s385 + $0xe0] sm:$0xff]
        %v417 = vld [vmem:[%s385 + $0xe8] sm:$0xff]
        %v418 = vld [vmem:[%s385 + $0xf0] sm:$0xff]
        %v419 = vld [vmem:[%s385 + $0xf8] sm:$0xff]
        %v420 = vpack.c.bf16 %v389, %v388
        %v421 = vpack.c.bf16 %v391, %v390
        %v422 = vpack.c.bf16 %v393, %v392
        %v423 = vpack.c.bf16 %v395, %v394
        %v424 = vpack.c.bf16 %v397, %v396
        %v425 = vpack.c.bf16 %v399, %v398
        %v426 = vpack.c.bf16 %v401, %v400
        %v427 = vpack.c.bf16 %v403, %v402
        %v428 = vpack.c.bf16 %v405, %v404
        %v429 = vpack.c.bf16 %v407, %v406
        %v430 = vpack.c.bf16 %v409, %v408
        %v431 = vpack.c.bf16 %v411, %v410
        %v432 = vpack.c.bf16 %v413, %v412
        %v433 = vpack.c.bf16 %v415, %v414
        %v434 = vpack.c.bf16 %v417, %v416
        %v435 = vpack.c.bf16 %v419, %v418
        %v436 = vld [vmem:[%s1] sm:$0xf]
        %v437 = vld [vmem:[%s1 + $0x4] sm:$0xf]
        %v438 = vld [vmem:[%s1 + $0x8] sm:$0xf]
        %v439 = vld [vmem:[%s1 + $0xc] sm:$0xf]
        %v440 = vld [vmem:[%s10] sm:$0x1]
        %v442 = vperm.slane %v440, 0
        %v448 = vunpack.c.l.b16 %v436
        %v449 = vunpack.c.l.b16 %v437
        %v450 = vunpack.c.l.b16 %v438
        %v451 = vunpack.c.l.b16 %v439
        %v452 = vpack.c.b16 %v449, %v448
        %v453 = vpack.c.b16 %v451, %v450
        %vm456 = vcmask 261120
        %v458 = vsel %vm456, %v420, 0
        %v461 = vsel %vm456, %v421, 0
        %v464 = vsel %vm456, %v422, 0
        %v467 = vsel %vm456, %v423, 0
        %v470 = vsel %vm456, %v424, 0
        %v473 = vsel %vm456, %v425, 0
        %v476 = vsel %vm456, %v426, 0
        %v479 = vsel %vm456, %v427, 0
        %v482 = vsel %vm456, %v428, 0
        %v485 = vsel %vm456, %v429, 0
        %v488 = vsel %vm456, %v430, 0
        %v491 = vsel %vm456, %v431, 0
        %v494 = vsel %vm456, %v432, 0
        %v497 = vsel %vm456, %v433, 0
        %v500 = vsel %vm456, %v434, 0
        %v503 = vsel %vm456, %v435, 0
        %505 = vmatpush.bf16.msra.mxu0 0
        %506 = vmatpush.bf16.msra.mxu0 0
        %507 = vmatpush.bf16.msra.mxu0 0
        %508 = vmatpush.bf16.msra.mxu0 0
        %509 = vmatpush.bf16.msra.mxu0 0
        %510 = vmatpush.bf16.msra.mxu0 0
        %511 = vmatpush.bf16.msra.mxu0 %v453
        %512 = vmatpush.bf16.msra.mxu0 %v452
        %513 = vmatmul.bf16.gmra.mxu0 %v458
        %v514 = vpop.f32.mrf.mxu0
        %v515 = vadd.f32 %v442, %v514
        %v516 = vpop.f32.mrf.mxu0
        %v517 = vadd.f32 %v442, %v516
        %518 = vmatmul.bf16.gmra.mxu0 %v461
        %v519 = vpop.f32.mrf.mxu0
        %v520 = vadd.f32 %v442, %v519
        %v521 = vpop.f32.mrf.mxu0
        %v522 = vadd.f32 %v442, %v521
        %523 = vmatmul.bf16.gmra.mxu0 %v464
        %v524 = vpop.f32.mrf.mxu0
        %v525 = vadd.f32 %v442, %v524
        %v526 = vpop.f32.mrf.mxu0
        %v527 = vadd.f32 %v442, %v526
        %528 = vmatmul.bf16.gmra.mxu0 %v467
        %v529 = vpop.f32.mrf.mxu0
        %v530 = vadd.f32 %v442, %v529
        %v531 = vpop.f32.mrf.mxu0
        %v532 = vadd.f32 %v442, %v531
        %533 = vmatmul.bf16.gmra.mxu0 %v470
        %v534 = vpop.f32.mrf.mxu0
        %v535 = vadd.f32 %v442, %v534
        %v536 = vpop.f32.mrf.mxu0
        %v537 = vadd.f32 %v442, %v536
        %538 = vmatmul.bf16.gmra.mxu0 %v473
        %v539 = vpop.f32.mrf.mxu0
        %v540 = vadd.f32 %v442, %v539
        %v541 = vpop.f32.mrf.mxu0
        %v542 = vadd.f32 %v442, %v541
        %543 = vmatmul.bf16.gmra.mxu0 %v476
        %v544 = vpop.f32.mrf.mxu0
        %v545 = vadd.f32 %v442, %v544
        %v546 = vpop.f32.mrf.mxu0
        %v547 = vadd.f32 %v442, %v546
        %548 = vmatmul.bf16.gmra.mxu0 %v479
        %v549 = vpop.f32.mrf.mxu0
        %v550 = vadd.f32 %v442, %v549
        %v551 = vpop.f32.mrf.mxu0
        %v552 = vadd.f32 %v442, %v551
        %553 = vmatmul.bf16.gmra.mxu0 %v482
        %v554 = vpop.f32.mrf.mxu0
        %v555 = vadd.f32 %v442, %v554
        %v556 = vpop.f32.mrf.mxu0
        %v557 = vadd.f32 %v442, %v556
        %558 = vmatmul.bf16.gmra.mxu0 %v485
        %v559 = vpop.f32.mrf.mxu0
        %v560 = vadd.f32 %v442, %v559
        %v561 = vpop.f32.mrf.mxu0
        %v562 = vadd.f32 %v442, %v561
        %563 = vmatmul.bf16.gmra.mxu0 %v488
        %v564 = vpop.f32.mrf.mxu0
        %v565 = vadd.f32 %v442, %v564
        %v566 = vpop.f32.mrf.mxu0
        %v567 = vadd.f32 %v442, %v566
        %568 = vmatmul.bf16.gmra.mxu0 %v491
        %v569 = vpop.f32.mrf.mxu0
        %v570 = vadd.f32 %v442, %v569
        %v571 = vpop.f32.mrf.mxu0
        %v572 = vadd.f32 %v442, %v571
        %573 = vmatmul.bf16.gmra.mxu0 %v494
        %v574 = vpop.f32.mrf.mxu0
        %v575 = vadd.f32 %v442, %v574
        %v576 = vpop.f32.mrf.mxu0
        %v577 = vadd.f32 %v442, %v576
        %578 = vmatmul.bf16.gmra.mxu0 %v497
        %v579 = vpop.f32.mrf.mxu0
        %v580 = vadd.f32 %v442, %v579
        %v581 = vpop.f32.mrf.mxu0
        %v582 = vadd.f32 %v442, %v581
        %583 = vmatmul.bf16.gmra.mxu0 %v500
        %v584 = vpop.f32.mrf.mxu0
        %v585 = vadd.f32 %v442, %v584
        %v586 = vpop.f32.mrf.mxu0
        %v587 = vadd.f32 %v442, %v586
        %588 = vmatmul.bf16.gmra.mxu0 %v503
        %v589 = vpop.f32.mrf.mxu0
        %v590 = vadd.f32 %v442, %v589
        %v591 = vpop.f32.mrf.mxu0
        %v592 = vadd.f32 %v442, %v591
        %593 = vdwg.mxu0
        %v594 = vxor.u32 %v515, 2147483648
        %v595 = vxor.u32 %v517, 2147483648
        %v596 = vxor.u32 %v520, 2147483648
        %v597 = vxor.u32 %v522, 2147483648
        %v598 = vxor.u32 %v525, 2147483648
        %v599 = vxor.u32 %v527, 2147483648
        %v600 = vxor.u32 %v530, 2147483648
        %v601 = vxor.u32 %v532, 2147483648
        %v602 = vxor.u32 %v535, 2147483648
        %v603 = vxor.u32 %v537, 2147483648
        %v604 = vxor.u32 %v540, 2147483648
        %v605 = vxor.u32 %v542, 2147483648
        %v606 = vxor.u32 %v545, 2147483648
        %v607 = vxor.u32 %v547, 2147483648
        %v608 = vxor.u32 %v550, 2147483648
        %v609 = vxor.u32 %v552, 2147483648
        %v610 = vxor.u32 %v555, 2147483648
        %v611 = vxor.u32 %v557, 2147483648
        %v612 = vxor.u32 %v560, 2147483648
        %v613 = vxor.u32 %v562, 2147483648
        %v614 = vxor.u32 %v565, 2147483648
        %v615 = vxor.u32 %v567, 2147483648
        %v616 = vxor.u32 %v570, 2147483648
        %v617 = vxor.u32 %v572, 2147483648
        %v618 = vxor.u32 %v575, 2147483648
        %v619 = vxor.u32 %v577, 2147483648
        %v620 = vxor.u32 %v580, 2147483648
        %v621 = vxor.u32 %v582, 2147483648
        %v622 = vxor.u32 %v585, 2147483648
        %v623 = vxor.u32 %v587, 2147483648
        %v624 = vxor.u32 %v590, 2147483648
        %v625 = vxor.u32 %v592, 2147483648
        %v626 = vmul.f32 %v594, 1.442695
        %v627 = vpow.pop %v626
        %v628 = vmul.f32 %v595, 1.442695
        %v629 = vpow.pop %v628
        %v630 = vmul.f32 %v596, 1.442695
        %v631 = vpow.pop %v630
        %v632 = vmul.f32 %v597, 1.442695
        %v633 = vpow.pop %v632
        %v634 = vmul.f32 %v598, 1.442695
        %v635 = vpow.pop %v634
        %v636 = vmul.f32 %v599, 1.442695
        %v637 = vpow.pop %v636
        %v638 = vmul.f32 %v600, 1.442695
        %v639 = vpow.pop %v638
        %v640 = vmul.f32 %v601, 1.442695
        %v641 = vpow.pop %v640
        %v642 = vmul.f32 %v602, 1.442695
        %v643 = vpow.pop %v642
        %v644 = vmul.f32 %v603, 1.442695
        %v645 = vpow.pop %v644
        %v646 = vmul.f32 %v604, 1.442695
        %v647 = vpow.pop %v646
        %v648 = vmul.f32 %v605, 1.442695
        %v649 = vpow.pop %v648
        %v650 = vmul.f32 %v606, 1.442695
        %v651 = vpow.pop %v650
        %v652 = vmul.f32 %v607, 1.442695
        %v653 = vpow.pop %v652
        %v654 = vmul.f32 %v608, 1.442695
        %v655 = vpow.pop %v654
        %v656 = vmul.f32 %v609, 1.442695
        %v657 = vpow.pop %v656
        %v658 = vmul.f32 %v610, 1.442695
        %v659 = vpow.pop %v658
        %v660 = vmul.f32 %v611, 1.442695
        %v661 = vpow.pop %v660
        %v662 = vmul.f32 %v612, 1.442695
        %v663 = vpow.pop %v662
        %v664 = vmul.f32 %v613, 1.442695
        %v665 = vpow.pop %v664
        %v666 = vmul.f32 %v614, 1.442695
        %v667 = vpow.pop %v666
        %v668 = vmul.f32 %v615, 1.442695
        %v669 = vpow.pop %v668
        %v670 = vmul.f32 %v616, 1.442695
        %v671 = vpow.pop %v670
        %v672 = vmul.f32 %v617, 1.442695
        %v673 = vpow.pop %v672
        %v674 = vmul.f32 %v618, 1.442695
        %v675 = vpow.pop %v674
        %v676 = vmul.f32 %v619, 1.442695
        %v677 = vpow.pop %v676
        %v678 = vmul.f32 %v620, 1.442695
        %v679 = vpow.pop %v678
        %v680 = vmul.f32 %v621, 1.442695
        %v681 = vpow.pop %v680
        %v682 = vmul.f32 %v622, 1.442695
        %v683 = vpow.pop %v682
        %v684 = vmul.f32 %v623, 1.442695
        %v685 = vpow.pop %v684
        %v686 = vmul.f32 %v624, 1.442695
        %v687 = vpow.pop %v686
        %v688 = vmul.f32 %v625, 1.442695
        %v689 = vpow.pop %v688
        %v690 = vadd.f32 %v627, 1.0
        %v691 = vadd.f32 %v629, 1.0
        %v692 = vadd.f32 %v631, 1.0
        %v693 = vadd.f32 %v633, 1.0
        %v694 = vadd.f32 %v635, 1.0
        %v695 = vadd.f32 %v637, 1.0
        %v696 = vadd.f32 %v639, 1.0
        %v697 = vadd.f32 %v641, 1.0
        %v698 = vadd.f32 %v643, 1.0
        %v699 = vadd.f32 %v645, 1.0
        %v700 = vadd.f32 %v647, 1.0
        %v701 = vadd.f32 %v649, 1.0
        %v702 = vadd.f32 %v651, 1.0
        %v703 = vadd.f32 %v653, 1.0
        %v704 = vadd.f32 %v655, 1.0
        %v705 = vadd.f32 %v657, 1.0
        %v706 = vadd.f32 %v659, 1.0
        %v707 = vadd.f32 %v661, 1.0
        %v708 = vadd.f32 %v663, 1.0
        %v709 = vadd.f32 %v665, 1.0
        %v710 = vadd.f32 %v667, 1.0
        %v711 = vadd.f32 %v669, 1.0
        %v712 = vadd.f32 %v671, 1.0
        %v713 = vadd.f32 %v673, 1.0
        %v714 = vadd.f32 %v675, 1.0
        %v715 = vadd.f32 %v677, 1.0
        %v716 = vadd.f32 %v679, 1.0
        %v717 = vadd.f32 %v681, 1.0
        %v718 = vadd.f32 %v683, 1.0
        %v719 = vadd.f32 %v685, 1.0
        %v720 = vadd.f32 %v687, 1.0
        %v721 = vadd.f32 %v689, 1.0
        %v722 = vrcp.pop %v690
        %v723 = vmul.f32 %v690, %v722
        %v724 = vsub.f32 1.0, %v723
        %v725 = vmul.f32 %v722, %v724
        %v726 = vadd.f32 %v722, %v725
        %vm727 = vweird.f32 %v690
        %vm728 = vweird.f32 %v722
        %vm729 = vmor %vm727, %vm728
        %v730 = vsel %vm729, %v722, %v726
        %v731 = vand.u32 2147483647, %v690
        %vm732 = vcmp.eq.f32.partialorder %v731, 8.507059e+37
        %v733 = vand.u32 %v690, 2147483648
        %v734 = vor.u32 1.1754944e-38, %v733
        %v735 = vsel %vm732, %v734, %v730
        %v736 = vmul.f32 1.0, %v735
        %v737 = vrcp.pop %v691
        %v738 = vmul.f32 %v691, %v737
        %v739 = vsub.f32 1.0, %v738
        %v740 = vmul.f32 %v737, %v739
        %v741 = vadd.f32 %v737, %v740
        %vm742 = vweird.f32 %v691
        %vm743 = vweird.f32 %v737
        %vm744 = vmor %vm742, %vm743
        %v745 = vsel %vm744, %v737, %v741
        %v746 = vand.u32 2147483647, %v691
        %vm747 = vcmp.eq.f32.partialorder %v746, 8.507059e+37
        %v748 = vand.u32 %v691, 2147483648
        %v749 = vor.u32 1.1754944e-38, %v748
        %v750 = vsel %vm747, %v749, %v745
        %v751 = vmul.f32 1.0, %v750
        %v752 = vrcp.pop %v692
        %v753 = vmul.f32 %v692, %v752
        %v754 = vsub.f32 1.0, %v753
        %v755 = vmul.f32 %v752, %v754
        %v756 = vadd.f32 %v752, %v755
        %vm757 = vweird.f32 %v692
        %vm758 = vweird.f32 %v752
        %vm759 = vmor %vm757, %vm758
        %v760 = vsel %vm759, %v752, %v756
        %v761 = vand.u32 2147483647, %v692
        %vm762 = vcmp.eq.f32.partialorder %v761, 8.507059e+37
        %v763 = vand.u32 %v692, 2147483648
        %v764 = vor.u32 1.1754944e-38, %v763
        %v765 = vsel %vm762, %v764, %v760
        %v766 = vmul.f32 1.0, %v765
        %v767 = vrcp.pop %v693
        %v768 = vmul.f32 %v693, %v767
        %v769 = vsub.f32 1.0, %v768
        %v770 = vmul.f32 %v767, %v769
        %v771 = vadd.f32 %v767, %v770
        %vm772 = vweird.f32 %v693
        %vm773 = vweird.f32 %v767
        %vm774 = vmor %vm772, %vm773
        %v775 = vsel %vm774, %v767, %v771
        %v776 = vand.u32 2147483647, %v693
        %vm777 = vcmp.eq.f32.partialorder %v776, 8.507059e+37
        %v778 = vand.u32 %v693, 2147483648
        %v779 = vor.u32 1.1754944e-38, %v778
        %v780 = vsel %vm777, %v779, %v775
        %v781 = vmul.f32 1.0, %v780
        %v782 = vrcp.pop %v694
        %v783 = vmul.f32 %v694, %v782
        %v784 = vsub.f32 1.0, %v783
        %v785 = vmul.f32 %v782, %v784
        %v786 = vadd.f32 %v782, %v785
        %vm787 = vweird.f32 %v694
        %vm788 = vweird.f32 %v782
        %vm789 = vmor %vm787, %vm788
        %v790 = vsel %vm789, %v782, %v786
        %v791 = vand.u32 2147483647, %v694
        %vm792 = vcmp.eq.f32.partialorder %v791, 8.507059e+37
        %v793 = vand.u32 %v694, 2147483648
        %v794 = vor.u32 1.1754944e-38, %v793
        %v795 = vsel %vm792, %v794, %v790
        %v796 = vmul.f32 1.0, %v795
        %v797 = vrcp.pop %v695
        %v798 = vmul.f32 %v695, %v797
        %v799 = vsub.f32 1.0, %v798
        %v800 = vmul.f32 %v797, %v799
        %v801 = vadd.f32 %v797, %v800
        %vm802 = vweird.f32 %v695
        %vm803 = vweird.f32 %v797
        %vm804 = vmor %vm802, %vm803
        %v805 = vsel %vm804, %v797, %v801
        %v806 = vand.u32 2147483647, %v695
        %vm807 = vcmp.eq.f32.partialorder %v806, 8.507059e+37
        %v808 = vand.u32 %v695, 2147483648
        %v809 = vor.u32 1.1754944e-38, %v808
        %v810 = vsel %vm807, %v809, %v805
        %v811 = vmul.f32 1.0, %v810
        %v812 = vrcp.pop %v696
        %v813 = vmul.f32 %v696, %v812
        %v814 = vsub.f32 1.0, %v813
        %v815 = vmul.f32 %v812, %v814
        %v816 = vadd.f32 %v812, %v815
        %vm817 = vweird.f32 %v696
        %vm818 = vweird.f32 %v812
        %vm819 = vmor %vm817, %vm818
        %v820 = vsel %vm819, %v812, %v816
        %v821 = vand.u32 2147483647, %v696
        %vm822 = vcmp.eq.f32.partialorder %v821, 8.507059e+37
        %v823 = vand.u32 %v696, 2147483648
        %v824 = vor.u32 1.1754944e-38, %v823
        %v825 = vsel %vm822, %v824, %v820
        %v826 = vmul.f32 1.0, %v825
        %v827 = vrcp.pop %v697
        %v828 = vmul.f32 %v697, %v827
        %v829 = vsub.f32 1.0, %v828
        %v830 = vmul.f32 %v827, %v829
        %v831 = vadd.f32 %v827, %v830
        %vm832 = vweird.f32 %v697
        %vm833 = vweird.f32 %v827
        %vm834 = vmor %vm832, %vm833
        %v835 = vsel %vm834, %v827, %v831
        %v836 = vand.u32 2147483647, %v697
        %vm837 = vcmp.eq.f32.partialorder %v836, 8.507059e+37
        %v838 = vand.u32 %v697, 2147483648
        %v839 = vor.u32 1.1754944e-38, %v838
        %v840 = vsel %vm837, %v839, %v835
        %v841 = vmul.f32 1.0, %v840
        %v842 = vrcp.pop %v698
        %v843 = vmul.f32 %v698, %v842
        %v844 = vsub.f32 1.0, %v843
        %v845 = vmul.f32 %v842, %v844
        %v846 = vadd.f32 %v842, %v845
        %vm847 = vweird.f32 %v698
        %vm848 = vweird.f32 %v842
        %vm849 = vmor %vm847, %vm848
        %v850 = vsel %vm849, %v842, %v846
        %v851 = vand.u32 2147483647, %v698
        %vm852 = vcmp.eq.f32.partialorder %v851, 8.507059e+37
        %v853 = vand.u32 %v698, 2147483648
        %v854 = vor.u32 1.1754944e-38, %v853
        %v855 = vsel %vm852, %v854, %v850
        %v856 = vmul.f32 1.0, %v855
        %v857 = vrcp.pop %v699
        %v858 = vmul.f32 %v699, %v857
        %v859 = vsub.f32 1.0, %v858
        %v860 = vmul.f32 %v857, %v859
        %v861 = vadd.f32 %v857, %v860
        %vm862 = vweird.f32 %v699
        %vm863 = vweird.f32 %v857
        %vm864 = vmor %vm862, %vm863
        %v865 = vsel %vm864, %v857, %v861
        %v866 = vand.u32 2147483647, %v699
        %vm867 = vcmp.eq.f32.partialorder %v866, 8.507059e+37
        %v868 = vand.u32 %v699, 2147483648
        %v869 = vor.u32 1.1754944e-38, %v868
        %v870 = vsel %vm867, %v869, %v865
        %v871 = vmul.f32 1.0, %v870
        %v872 = vrcp.pop %v700
        %v873 = vmul.f32 %v700, %v872
        %v874 = vsub.f32 1.0, %v873
        %v875 = vmul.f32 %v872, %v874
        %v876 = vadd.f32 %v872, %v875
        %vm877 = vweird.f32 %v700
        %vm878 = vweird.f32 %v872
        %vm879 = vmor %vm877, %vm878
        %v880 = vsel %vm879, %v872, %v876
        %v881 = vand.u32 2147483647, %v700
        %vm882 = vcmp.eq.f32.partialorder %v881, 8.507059e+37
        %v883 = vand.u32 %v700, 2147483648
        %v884 = vor.u32 1.1754944e-38, %v883
        %v885 = vsel %vm882, %v884, %v880
        %v886 = vmul.f32 1.0, %v885
        %v887 = vrcp.pop %v701
        %v888 = vmul.f32 %v701, %v887
        %v889 = vsub.f32 1.0, %v888
        %v890 = vmul.f32 %v887, %v889
        %v891 = vadd.f32 %v887, %v890
        %vm892 = vweird.f32 %v701
        %vm893 = vweird.f32 %v887
        %vm894 = vmor %vm892, %vm893
        %v895 = vsel %vm894, %v887, %v891
        %v896 = vand.u32 2147483647, %v701
        %vm897 = vcmp.eq.f32.partialorder %v896, 8.507059e+37
        %v898 = vand.u32 %v701, 2147483648
        %v899 = vor.u32 1.1754944e-38, %v898
        %v900 = vsel %vm897, %v899, %v895
        %v901 = vmul.f32 1.0, %v900
        %v902 = vrcp.pop %v702
        %v903 = vmul.f32 %v702, %v902
        %v904 = vsub.f32 1.0, %v903
        %v905 = vmul.f32 %v902, %v904
        %v906 = vadd.f32 %v902, %v905
        %vm907 = vweird.f32 %v702
        %vm908 = vweird.f32 %v902
        %vm909 = vmor %vm907, %vm908
        %v910 = vsel %vm909, %v902, %v906
        %v911 = vand.u32 2147483647, %v702
        %vm912 = vcmp.eq.f32.partialorder %v911, 8.507059e+37
        %v913 = vand.u32 %v702, 2147483648
        %v914 = vor.u32 1.1754944e-38, %v913
        %v915 = vsel %vm912, %v914, %v910
        %v916 = vmul.f32 1.0, %v915
        %v917 = vrcp.pop %v703
        %v918 = vmul.f32 %v703, %v917
        %v919 = vsub.f32 1.0, %v918
        %v920 = vmul.f32 %v917, %v919
        %v921 = vadd.f32 %v917, %v920
        %vm922 = vweird.f32 %v703
        %vm923 = vweird.f32 %v917
        %vm924 = vmor %vm922, %vm923
        %v925 = vsel %vm924, %v917, %v921
        %v926 = vand.u32 2147483647, %v703
        %vm927 = vcmp.eq.f32.partialorder %v926, 8.507059e+37
        %v928 = vand.u32 %v703, 2147483648
        %v929 = vor.u32 1.1754944e-38, %v928
        %v930 = vsel %vm927, %v929, %v925
        %v931 = vmul.f32 1.0, %v930
        %v932 = vrcp.pop %v704
        %v933 = vmul.f32 %v704, %v932
        %v934 = vsub.f32 1.0, %v933
        %v935 = vmul.f32 %v932, %v934
        %v936 = vadd.f32 %v932, %v935
        %vm937 = vweird.f32 %v704
        %vm938 = vweird.f32 %v932
        %vm939 = vmor %vm937, %vm938
        %v940 = vsel %vm939, %v932, %v936
        %v941 = vand.u32 2147483647, %v704
        %vm942 = vcmp.eq.f32.partialorder %v941, 8.507059e+37
        %v943 = vand.u32 %v704, 2147483648
        %v944 = vor.u32 1.1754944e-38, %v943
        %v945 = vsel %vm942, %v944, %v940
        %v946 = vmul.f32 1.0, %v945
        %v947 = vrcp.pop %v705
        %v948 = vmul.f32 %v705, %v947
        %v949 = vsub.f32 1.0, %v948
        %v950 = vmul.f32 %v947, %v949
        %v951 = vadd.f32 %v947, %v950
        %vm952 = vweird.f32 %v705
        %vm953 = vweird.f32 %v947
        %vm954 = vmor %vm952, %vm953
        %v955 = vsel %vm954, %v947, %v951
        %v956 = vand.u32 2147483647, %v705
        %vm957 = vcmp.eq.f32.partialorder %v956, 8.507059e+37
        %v958 = vand.u32 %v705, 2147483648
        %v959 = vor.u32 1.1754944e-38, %v958
        %v960 = vsel %vm957, %v959, %v955
        %v961 = vmul.f32 1.0, %v960
        %v962 = vrcp.pop %v706
        %v963 = vmul.f32 %v706, %v962
        %v964 = vsub.f32 1.0, %v963
        %v965 = vmul.f32 %v962, %v964
        %v966 = vadd.f32 %v962, %v965
        %vm967 = vweird.f32 %v706
        %vm968 = vweird.f32 %v962
        %vm969 = vmor %vm967, %vm968
        %v970 = vsel %vm969, %v962, %v966
        %v971 = vand.u32 2147483647, %v706
        %vm972 = vcmp.eq.f32.partialorder %v971, 8.507059e+37
        %v973 = vand.u32 %v706, 2147483648
        %v974 = vor.u32 1.1754944e-38, %v973
        %v975 = vsel %vm972, %v974, %v970
        %v976 = vmul.f32 1.0, %v975
        %v977 = vrcp.pop %v707
        %v978 = vmul.f32 %v707, %v977
        %v979 = vsub.f32 1.0, %v978
        %v980 = vmul.f32 %v977, %v979
        %v981 = vadd.f32 %v977, %v980
        %vm982 = vweird.f32 %v707
        %vm983 = vweird.f32 %v977
        %vm984 = vmor %vm982, %vm983
        %v985 = vsel %vm984, %v977, %v981
        %v986 = vand.u32 2147483647, %v707
        %vm987 = vcmp.eq.f32.partialorder %v986, 8.507059e+37
        %v988 = vand.u32 %v707, 2147483648
        %v989 = vor.u32 1.1754944e-38, %v988
        %v990 = vsel %vm987, %v989, %v985
        %v991 = vmul.f32 1.0, %v990
        %v992 = vrcp.pop %v708
        %v993 = vmul.f32 %v708, %v992
        %v994 = vsub.f32 1.0, %v993
        %v995 = vmul.f32 %v992, %v994
        %v996 = vadd.f32 %v992, %v995
        %vm997 = vweird.f32 %v708
        %vm998 = vweird.f32 %v992
        %vm999 = vmor %vm997, %vm998
        %v1000 = vsel %vm999, %v992, %v996
        %v1001 = vand.u32 2147483647, %v708
        %vm1002 = vcmp.eq.f32.partialorder %v1001, 8.507059e+37
        %v1003 = vand.u32 %v708, 2147483648
        %v1004 = vor.u32 1.1754944e-38, %v1003
        %v1005 = vsel %vm1002, %v1004, %v1000
        %v1006 = vmul.f32 1.0, %v1005
        %v1007 = vrcp.pop %v709
        %v1008 = vmul.f32 %v709, %v1007
        %v1009 = vsub.f32 1.0, %v1008
        %v1010 = vmul.f32 %v1007, %v1009
        %v1011 = vadd.f32 %v1007, %v1010
        %vm1012 = vweird.f32 %v709
        %vm1013 = vweird.f32 %v1007
        %vm1014 = vmor %vm1012, %vm1013
        %v1015 = vsel %vm1014, %v1007, %v1011
        %v1016 = vand.u32 2147483647, %v709
        %vm1017 = vcmp.eq.f32.partialorder %v1016, 8.507059e+37
        %v1018 = vand.u32 %v709, 2147483648
        %v1019 = vor.u32 1.1754944e-38, %v1018
        %v1020 = vsel %vm1017, %v1019, %v1015
        %v1021 = vmul.f32 1.0, %v1020
        %v1022 = vrcp.pop %v710
        %v1023 = vmul.f32 %v710, %v1022
        %v1024 = vsub.f32 1.0, %v1023
        %v1025 = vmul.f32 %v1022, %v1024
        %v1026 = vadd.f32 %v1022, %v1025
        %vm1027 = vweird.f32 %v710
        %vm1028 = vweird.f32 %v1022
        %vm1029 = vmor %vm1027, %vm1028
        %v1030 = vsel %vm1029, %v1022, %v1026
        %v1031 = vand.u32 2147483647, %v710
        %vm1032 = vcmp.eq.f32.partialorder %v1031, 8.507059e+37
        %v1033 = vand.u32 %v710, 2147483648
        %v1034 = vor.u32 1.1754944e-38, %v1033
        %v1035 = vsel %vm1032, %v1034, %v1030
        %v1036 = vmul.f32 1.0, %v1035
        %v1037 = vrcp.pop %v711
        %v1038 = vmul.f32 %v711, %v1037
        %v1039 = vsub.f32 1.0, %v1038
        %v1040 = vmul.f32 %v1037, %v1039
        %v1041 = vadd.f32 %v1037, %v1040
        %vm1042 = vweird.f32 %v711
        %vm1043 = vweird.f32 %v1037
        %vm1044 = vmor %vm1042, %vm1043
        %v1045 = vsel %vm1044, %v1037, %v1041
        %v1046 = vand.u32 2147483647, %v711
        %vm1047 = vcmp.eq.f32.partialorder %v1046, 8.507059e+37
        %v1048 = vand.u32 %v711, 2147483648
        %v1049 = vor.u32 1.1754944e-38, %v1048
        %v1050 = vsel %vm1047, %v1049, %v1045
        %v1051 = vmul.f32 1.0, %v1050
        %v1052 = vrcp.pop %v712
        %v1053 = vmul.f32 %v712, %v1052
        %v1054 = vsub.f32 1.0, %v1053
        %v1055 = vmul.f32 %v1052, %v1054
        %v1056 = vadd.f32 %v1052, %v1055
        %vm1057 = vweird.f32 %v712
        %vm1058 = vweird.f32 %v1052
        %vm1059 = vmor %vm1057, %vm1058
        %v1060 = vsel %vm1059, %v1052, %v1056
        %v1061 = vand.u32 2147483647, %v712
        %vm1062 = vcmp.eq.f32.partialorder %v1061, 8.507059e+37
        %v1063 = vand.u32 %v712, 2147483648
        %v1064 = vor.u32 1.1754944e-38, %v1063
        %v1065 = vsel %vm1062, %v1064, %v1060
        %v1066 = vmul.f32 1.0, %v1065
        %v1067 = vrcp.pop %v713
        %v1068 = vmul.f32 %v713, %v1067
        %v1069 = vsub.f32 1.0, %v1068
        %v1070 = vmul.f32 %v1067, %v1069
        %v1071 = vadd.f32 %v1067, %v1070
        %vm1072 = vweird.f32 %v713
        %vm1073 = vweird.f32 %v1067
        %vm1074 = vmor %vm1072, %vm1073
        %v1075 = vsel %vm1074, %v1067, %v1071
        %v1076 = vand.u32 2147483647, %v713
        %vm1077 = vcmp.eq.f32.partialorder %v1076, 8.507059e+37
        %v1078 = vand.u32 %v713, 2147483648
        %v1079 = vor.u32 1.1754944e-38, %v1078
        %v1080 = vsel %vm1077, %v1079, %v1075
        %v1081 = vmul.f32 1.0, %v1080
        %v1082 = vrcp.pop %v714
        %v1083 = vmul.f32 %v714, %v1082
        %v1084 = vsub.f32 1.0, %v1083
        %v1085 = vmul.f32 %v1082, %v1084
        %v1086 = vadd.f32 %v1082, %v1085
        %vm1087 = vweird.f32 %v714
        %vm1088 = vweird.f32 %v1082
        %vm1089 = vmor %vm1087, %vm1088
        %v1090 = vsel %vm1089, %v1082, %v1086
        %v1091 = vand.u32 2147483647, %v714
        %vm1092 = vcmp.eq.f32.partialorder %v1091, 8.507059e+37
        %v1093 = vand.u32 %v714, 2147483648
        %v1094 = vor.u32 1.1754944e-38, %v1093
        %v1095 = vsel %vm1092, %v1094, %v1090
        %v1096 = vmul.f32 1.0, %v1095
        %v1097 = vrcp.pop %v715
        %v1098 = vmul.f32 %v715, %v1097
        %v1099 = vsub.f32 1.0, %v1098
        %v1100 = vmul.f32 %v1097, %v1099
        %v1101 = vadd.f32 %v1097, %v1100
        %vm1102 = vweird.f32 %v715
        %vm1103 = vweird.f32 %v1097
        %vm1104 = vmor %vm1102, %vm1103
        %v1105 = vsel %vm1104, %v1097, %v1101
        %v1106 = vand.u32 2147483647, %v715
        %vm1107 = vcmp.eq.f32.partialorder %v1106, 8.507059e+37
        %v1108 = vand.u32 %v715, 2147483648
        %v1109 = vor.u32 1.1754944e-38, %v1108
        %v1110 = vsel %vm1107, %v1109, %v1105
        %v1111 = vmul.f32 1.0, %v1110
        %v1112 = vrcp.pop %v716
        %v1113 = vmul.f32 %v716, %v1112
        %v1114 = vsub.f32 1.0, %v1113
        %v1115 = vmul.f32 %v1112, %v1114
        %v1116 = vadd.f32 %v1112, %v1115
        %vm1117 = vweird.f32 %v716
        %vm1118 = vweird.f32 %v1112
        %vm1119 = vmor %vm1117, %vm1118
        %v1120 = vsel %vm1119, %v1112, %v1116
        %v1121 = vand.u32 2147483647, %v716
        %vm1122 = vcmp.eq.f32.partialorder %v1121, 8.507059e+37
        %v1123 = vand.u32 %v716, 2147483648
        %v1124 = vor.u32 1.1754944e-38, %v1123
        %v1125 = vsel %vm1122, %v1124, %v1120
        %v1126 = vmul.f32 1.0, %v1125
        %v1127 = vrcp.pop %v717
        %v1128 = vmul.f32 %v717, %v1127
        %v1129 = vsub.f32 1.0, %v1128
        %v1130 = vmul.f32 %v1127, %v1129
        %v1131 = vadd.f32 %v1127, %v1130
        %vm1132 = vweird.f32 %v717
        %vm1133 = vweird.f32 %v1127
        %vm1134 = vmor %vm1132, %vm1133
        %v1135 = vsel %vm1134, %v1127, %v1131
        %v1136 = vand.u32 2147483647, %v717
        %vm1137 = vcmp.eq.f32.partialorder %v1136, 8.507059e+37
        %v1138 = vand.u32 %v717, 2147483648
        %v1139 = vor.u32 1.1754944e-38, %v1138
        %v1140 = vsel %vm1137, %v1139, %v1135
        %v1141 = vmul.f32 1.0, %v1140
        %v1142 = vrcp.pop %v718
        %v1143 = vmul.f32 %v718, %v1142
        %v1144 = vsub.f32 1.0, %v1143
        %v1145 = vmul.f32 %v1142, %v1144
        %v1146 = vadd.f32 %v1142, %v1145
        %vm1147 = vweird.f32 %v718
        %vm1148 = vweird.f32 %v1142
        %vm1149 = vmor %vm1147, %vm1148
        %v1150 = vsel %vm1149, %v1142, %v1146
        %v1151 = vand.u32 2147483647, %v718
        %vm1152 = vcmp.eq.f32.partialorder %v1151, 8.507059e+37
        %v1153 = vand.u32 %v718, 2147483648
        %v1154 = vor.u32 1.1754944e-38, %v1153
        %v1155 = vsel %vm1152, %v1154, %v1150
        %v1156 = vmul.f32 1.0, %v1155
        %v1157 = vrcp.pop %v719
        %v1158 = vmul.f32 %v719, %v1157
        %v1159 = vsub.f32 1.0, %v1158
        %v1160 = vmul.f32 %v1157, %v1159
        %v1161 = vadd.f32 %v1157, %v1160
        %vm1162 = vweird.f32 %v719
        %vm1163 = vweird.f32 %v1157
        %vm1164 = vmor %vm1162, %vm1163
        %v1165 = vsel %vm1164, %v1157, %v1161
        %v1166 = vand.u32 2147483647, %v719
        %vm1167 = vcmp.eq.f32.partialorder %v1166, 8.507059e+37
        %v1168 = vand.u32 %v719, 2147483648
        %v1169 = vor.u32 1.1754944e-38, %v1168
        %v1170 = vsel %vm1167, %v1169, %v1165
        %v1171 = vmul.f32 1.0, %v1170
        %v1172 = vrcp.pop %v720
        %v1173 = vmul.f32 %v720, %v1172
        %v1174 = vsub.f32 1.0, %v1173
        %v1175 = vmul.f32 %v1172, %v1174
        %v1176 = vadd.f32 %v1172, %v1175
        %vm1177 = vweird.f32 %v720
        %vm1178 = vweird.f32 %v1172
        %vm1179 = vmor %vm1177, %vm1178
        %v1180 = vsel %vm1179, %v1172, %v1176
        %v1181 = vand.u32 2147483647, %v720
        %vm1182 = vcmp.eq.f32.partialorder %v1181, 8.507059e+37
        %v1183 = vand.u32 %v720, 2147483648
        %v1184 = vor.u32 1.1754944e-38, %v1183
        %v1185 = vsel %vm1182, %v1184, %v1180
        %v1186 = vmul.f32 1.0, %v1185
        %v1187 = vrcp.pop %v721
        %v1188 = vmul.f32 %v721, %v1187
        %v1189 = vsub.f32 1.0, %v1188
        %v1190 = vmul.f32 %v1187, %v1189
        %v1191 = vadd.f32 %v1187, %v1190
        %vm1192 = vweird.f32 %v721
        %vm1193 = vweird.f32 %v1187
        %vm1194 = vmor %vm1192, %vm1193
        %v1195 = vsel %vm1194, %v1187, %v1191
        %v1196 = vand.u32 2147483647, %v721
        %vm1197 = vcmp.eq.f32.partialorder %v1196, 8.507059e+37
        %v1198 = vand.u32 %v721, 2147483648
        %v1199 = vor.u32 1.1754944e-38, %v1198
        %v1200 = vsel %vm1197, %v1199, %v1195
        %v1201 = vmul.f32 1.0, %v1200
        %v1202 = vmul.f32 %v515, %v736
        %v1203 = vmul.f32 %v517, %v751
        %v1204 = vmul.f32 %v520, %v766
        %v1205 = vmul.f32 %v522, %v781
        %v1206 = vmul.f32 %v525, %v796
        %v1207 = vmul.f32 %v527, %v811
        %v1208 = vmul.f32 %v530, %v826
        %v1209 = vmul.f32 %v532, %v841
        %v1210 = vmul.f32 %v535, %v856
        %v1211 = vmul.f32 %v537, %v871
        %v1212 = vmul.f32 %v540, %v886
        %v1213 = vmul.f32 %v542, %v901
        %v1214 = vmul.f32 %v545, %v916
        %v1215 = vmul.f32 %v547, %v931
        %v1216 = vmul.f32 %v550, %v946
        %v1217 = vmul.f32 %v552, %v961
        %v1218 = vmul.f32 %v555, %v976
        %v1219 = vmul.f32 %v557, %v991
        %v1220 = vmul.f32 %v560, %v1006
        %v1221 = vmul.f32 %v562, %v1021
        %v1222 = vmul.f32 %v565, %v1036
        %v1223 = vmul.f32 %v567, %v1051
        %v1224 = vmul.f32 %v570, %v1066
        %v1225 = vmul.f32 %v572, %v1081
        %v1226 = vmul.f32 %v575, %v1096
        %v1227 = vmul.f32 %v577, %v1111
        %v1228 = vmul.f32 %v580, %v1126
        %v1229 = vmul.f32 %v582, %v1141
        %v1230 = vmul.f32 %v585, %v1156
        %v1231 = vmul.f32 %v587, %v1171
        %v1232 = vmul.f32 %v590, %v1186
        %v1233 = vmul.f32 %v592, %v1201
        %v1234 = vpack.c.bf16 %v1203, %v1202
        %v1235 = vpack.c.bf16 %v1205, %v1204
        %v1236 = vpack.c.bf16 %v1207, %v1206
        %v1237 = vpack.c.bf16 %v1209, %v1208
        %v1238 = vpack.c.bf16 %v1211, %v1210
        %v1239 = vpack.c.bf16 %v1213, %v1212
        %v1240 = vpack.c.bf16 %v1215, %v1214
        %v1241 = vpack.c.bf16 %v1217, %v1216
        %v1242 = vpack.c.bf16 %v1219, %v1218
        %v1243 = vpack.c.bf16 %v1221, %v1220
        %v1244 = vpack.c.bf16 %v1223, %v1222
        %v1245 = vpack.c.bf16 %v1225, %v1224
        %v1246 = vpack.c.bf16 %v1227, %v1226
        %v1247 = vpack.c.bf16 %v1229, %v1228
        %v1248 = vpack.c.bf16 %v1231, %v1230
        %v1249 = vpack.c.bf16 %v1233, %v1232
        %v1250 = vld [vmem:[%s2] sm:$0xf]
        %v1251 = vld [vmem:[%s2 + $0x4] sm:$0xf]
        %v1252 = vld [vmem:[%s2 + $0x8] sm:$0xf]
        %v1253 = vld [vmem:[%s2 + $0xc] sm:$0xf]
        %v1254 = vld [vmem:[%s10 + $0x1] sm:$0x1]
        %v1256 = vperm.slane %v1254, 0
        %v1262 = vunpack.c.l.b16 %v1250
        %v1263 = vunpack.c.l.b16 %v1251
        %v1264 = vunpack.c.l.b16 %v1252
        %v1265 = vunpack.c.l.b16 %v1253
        %v1266 = vpack.c.b16 %v1263, %v1262
        %v1267 = vpack.c.b16 %v1265, %v1264
        %v1271 = vsel %vm456, %v1234, 0
        %v1274 = vsel %vm456, %v1235, 0
        %v1277 = vsel %vm456, %v1236, 0
        %v1280 = vsel %vm456, %v1237, 0
        %v1283 = vsel %vm456, %v1238, 0
        %v1286 = vsel %vm456, %v1239, 0
        %v1289 = vsel %vm456, %v1240, 0
        %v1292 = vsel %vm456, %v1241, 0
        %v1295 = vsel %vm456, %v1242, 0
        %v1298 = vsel %vm456, %v1243, 0
        %v1301 = vsel %vm456, %v1244, 0
        %v1304 = vsel %vm456, %v1245, 0
        %v1307 = vsel %vm456, %v1246, 0
        %v1310 = vsel %vm456, %v1247, 0
        %v1313 = vsel %vm456, %v1248, 0
        %v1316 = vsel %vm456, %v1249, 0
        %1318 = vmatpush.bf16.msra.mxu0 0
        %1319 = vmatpush.bf16.msra.mxu0 0
        %1320 = vmatpush.bf16.msra.mxu0 0
        %1321 = vmatpush.bf16.msra.mxu0 0
        %1322 = vmatpush.bf16.msra.mxu0 0
        %1323 = vmatpush.bf16.msra.mxu0 0
        %1324 = vmatpush.bf16.msra.mxu0 %v1267
        %1325 = vmatpush.bf16.msra.mxu0 %v1266
        %1326 = vmatmul.bf16.gmra.mxu0 %v1271
        %v1327 = vpop.f32.mrf.mxu0
        %v1328 = vadd.f32 %v1256, %v1327
        %v1329 = vpop.f32.mrf.mxu0
        %v1330 = vadd.f32 %v1256, %v1329
        %1331 = vmatmul.bf16.gmra.mxu0 %v1274
        %v1332 = vpop.f32.mrf.mxu0
        %v1333 = vadd.f32 %v1256, %v1332
        %v1334 = vpop.f32.mrf.mxu0
        %v1335 = vadd.f32 %v1256, %v1334
        %1336 = vmatmul.bf16.gmra.mxu0 %v1277
        %v1337 = vpop.f32.mrf.mxu0
        %v1338 = vadd.f32 %v1256, %v1337
        %v1339 = vpop.f32.mrf.mxu0
        %v1340 = vadd.f32 %v1256, %v1339
        %1341 = vmatmul.bf16.gmra.mxu0 %v1280
        %v1342 = vpop.f32.mrf.mxu0
        %v1343 = vadd.f32 %v1256, %v1342
        %v1344 = vpop.f32.mrf.mxu0
        %v1345 = vadd.f32 %v1256, %v1344
        %1346 = vmatmul.bf16.gmra.mxu0 %v1283
        %v1347 = vpop.f32.mrf.mxu0
        %v1348 = vadd.f32 %v1256, %v1347
        %v1349 = vpop.f32.mrf.mxu0
        %v1350 = vadd.f32 %v1256, %v1349
        %1351 = vmatmul.bf16.gmra.mxu0 %v1286
        %v1352 = vpop.f32.mrf.mxu0
        %v1353 = vadd.f32 %v1256, %v1352
        %v1354 = vpop.f32.mrf.mxu0
        %v1355 = vadd.f32 %v1256, %v1354
        %1356 = vmatmul.bf16.gmra.mxu0 %v1289
        %v1357 = vpop.f32.mrf.mxu0
        %v1358 = vadd.f32 %v1256, %v1357
        %v1359 = vpop.f32.mrf.mxu0
        %v1360 = vadd.f32 %v1256, %v1359
        %1361 = vmatmul.bf16.gmra.mxu0 %v1292
        %v1362 = vpop.f32.mrf.mxu0
        %v1363 = vadd.f32 %v1256, %v1362
        %v1364 = vpop.f32.mrf.mxu0
        %v1365 = vadd.f32 %v1256, %v1364
        %1366 = vmatmul.bf16.gmra.mxu0 %v1295
        %v1367 = vpop.f32.mrf.mxu0
        %v1368 = vadd.f32 %v1256, %v1367
        %v1369 = vpop.f32.mrf.mxu0
        %v1370 = vadd.f32 %v1256, %v1369
        %1371 = vmatmul.bf16.gmra.mxu0 %v1298
        %v1372 = vpop.f32.mrf.mxu0
        %v1373 = vadd.f32 %v1256, %v1372
        %v1374 = vpop.f32.mrf.mxu0
        %v1375 = vadd.f32 %v1256, %v1374
        %1376 = vmatmul.bf16.gmra.mxu0 %v1301
        %v1377 = vpop.f32.mrf.mxu0
        %v1378 = vadd.f32 %v1256, %v1377
        %v1379 = vpop.f32.mrf.mxu0
        %v1380 = vadd.f32 %v1256, %v1379
        %1381 = vmatmul.bf16.gmra.mxu0 %v1304
        %v1382 = vpop.f32.mrf.mxu0
        %v1383 = vadd.f32 %v1256, %v1382
        %v1384 = vpop.f32.mrf.mxu0
        %v1385 = vadd.f32 %v1256, %v1384
        %1386 = vmatmul.bf16.gmra.mxu0 %v1307
        %v1387 = vpop.f32.mrf.mxu0
        %v1388 = vadd.f32 %v1256, %v1387
        %v1389 = vpop.f32.mrf.mxu0
        %v1390 = vadd.f32 %v1256, %v1389
        %1391 = vmatmul.bf16.gmra.mxu0 %v1310
        %v1392 = vpop.f32.mrf.mxu0
        %v1393 = vadd.f32 %v1256, %v1392
        %v1394 = vpop.f32.mrf.mxu0
        %v1395 = vadd.f32 %v1256, %v1394
        %1396 = vmatmul.bf16.gmra.mxu0 %v1313
        %v1397 = vpop.f32.mrf.mxu0
        %v1398 = vadd.f32 %v1256, %v1397
        %v1399 = vpop.f32.mrf.mxu0
        %v1400 = vadd.f32 %v1256, %v1399
        %1401 = vmatmul.bf16.gmra.mxu0 %v1316
        %v1402 = vpop.f32.mrf.mxu0
        %v1403 = vadd.f32 %v1256, %v1402
        %v1404 = vpop.f32.mrf.mxu0
        %v1405 = vadd.f32 %v1256, %v1404
        %1406 = vdwg.mxu0
        %v1407 = vxor.u32 %v1328, 2147483648
        %v1408 = vxor.u32 %v1330, 2147483648
        %v1409 = vxor.u32 %v1333, 2147483648
        %v1410 = vxor.u32 %v1335, 2147483648
        %v1411 = vxor.u32 %v1338, 2147483648
        %v1412 = vxor.u32 %v1340, 2147483648
        %v1413 = vxor.u32 %v1343, 2147483648
        %v1414 = vxor.u32 %v1345, 2147483648
        %v1415 = vxor.u32 %v1348, 2147483648
        %v1416 = vxor.u32 %v1350, 2147483648
        %v1417 = vxor.u32 %v1353, 2147483648
        %v1418 = vxor.u32 %v1355, 2147483648
        %v1419 = vxor.u32 %v1358, 2147483648
        %v1420 = vxor.u32 %v1360, 2147483648
        %v1421 = vxor.u32 %v1363, 2147483648
        %v1422 = vxor.u32 %v1365, 2147483648
        %v1423 = vxor.u32 %v1368, 2147483648
        %v1424 = vxor.u32 %v1370, 2147483648
        %v1425 = vxor.u32 %v1373, 2147483648
        %v1426 = vxor.u32 %v1375, 2147483648
        %v1427 = vxor.u32 %v1378, 2147483648
        %v1428 = vxor.u32 %v1380, 2147483648
        %v1429 = vxor.u32 %v1383, 2147483648
        %v1430 = vxor.u32 %v1385, 2147483648
        %v1431 = vxor.u32 %v1388, 2147483648
        %v1432 = vxor.u32 %v1390, 2147483648
        %v1433 = vxor.u32 %v1393, 2147483648
        %v1434 = vxor.u32 %v1395, 2147483648
        %v1435 = vxor.u32 %v1398, 2147483648
        %v1436 = vxor.u32 %v1400, 2147483648
        %v1437 = vxor.u32 %v1403, 2147483648
        %v1438 = vxor.u32 %v1405, 2147483648
        %v1439 = vmul.f32 %v1407, 1.442695
        %v1440 = vpow.pop %v1439
        %v1441 = vmul.f32 %v1408, 1.442695
        %v1442 = vpow.pop %v1441
        %v1443 = vmul.f32 %v1409, 1.442695
        %v1444 = vpow.pop %v1443
        %v1445 = vmul.f32 %v1410, 1.442695
        %v1446 = vpow.pop %v1445
        %v1447 = vmul.f32 %v1411, 1.442695
        %v1448 = vpow.pop %v1447
        %v1449 = vmul.f32 %v1412, 1.442695
        %v1450 = vpow.pop %v1449
        %v1451 = vmul.f32 %v1413, 1.442695
        %v1452 = vpow.pop %v1451
        %v1453 = vmul.f32 %v1414, 1.442695
        %v1454 = vpow.pop %v1453
        %v1455 = vmul.f32 %v1415, 1.442695
        %v1456 = vpow.pop %v1455
        %v1457 = vmul.f32 %v1416, 1.442695
        %v1458 = vpow.pop %v1457
        %v1459 = vmul.f32 %v1417, 1.442695
        %v1460 = vpow.pop %v1459
        %v1461 = vmul.f32 %v1418, 1.442695
        %v1462 = vpow.pop %v1461
        %v1463 = vmul.f32 %v1419, 1.442695
        %v1464 = vpow.pop %v1463
        %v1465 = vmul.f32 %v1420, 1.442695
        %v1466 = vpow.pop %v1465
        %v1467 = vmul.f32 %v1421, 1.442695
        %v1468 = vpow.pop %v1467
        %v1469 = vmul.f32 %v1422, 1.442695
        %v1470 = vpow.pop %v1469
        %v1471 = vmul.f32 %v1423, 1.442695
        %v1472 = vpow.pop %v1471
        %v1473 = vmul.f32 %v1424, 1.442695
        %v1474 = vpow.pop %v1473
        %v1475 = vmul.f32 %v1425, 1.442695
        %v1476 = vpow.pop %v1475
        %v1477 = vmul.f32 %v1426, 1.442695
        %v1478 = vpow.pop %v1477
        %v1479 = vmul.f32 %v1427, 1.442695
        %v1480 = vpow.pop %v1479
        %v1481 = vmul.f32 %v1428, 1.442695
        %v1482 = vpow.pop %v1481
        %v1483 = vmul.f32 %v1429, 1.442695
        %v1484 = vpow.pop %v1483
        %v1485 = vmul.f32 %v1430, 1.442695
        %v1486 = vpow.pop %v1485
        %v1487 = vmul.f32 %v1431, 1.442695
        %v1488 = vpow.pop %v1487
        %v1489 = vmul.f32 %v1432, 1.442695
        %v1490 = vpow.pop %v1489
        %v1491 = vmul.f32 %v1433, 1.442695
        %v1492 = vpow.pop %v1491
        %v1493 = vmul.f32 %v1434, 1.442695
        %v1494 = vpow.pop %v1493
        %v1495 = vmul.f32 %v1435, 1.442695
        %v1496 = vpow.pop %v1495
        %v1497 = vmul.f32 %v1436, 1.442695
        %v1498 = vpow.pop %v1497
        %v1499 = vmul.f32 %v1437, 1.442695
        %v1500 = vpow.pop %v1499
        %v1501 = vmul.f32 %v1438, 1.442695
        %v1502 = vpow.pop %v1501
        %v1503 = vadd.f32 %v1440, 1.0
        %v1504 = vadd.f32 %v1442, 1.0
        %v1505 = vadd.f32 %v1444, 1.0
        %v1506 = vadd.f32 %v1446, 1.0
        %v1507 = vadd.f32 %v1448, 1.0
        %v1508 = vadd.f32 %v1450, 1.0
        %v1509 = vadd.f32 %v1452, 1.0
        %v1510 = vadd.f32 %v1454, 1.0
        %v1511 = vadd.f32 %v1456, 1.0
        %v1512 = vadd.f32 %v1458, 1.0
        %v1513 = vadd.f32 %v1460, 1.0
        %v1514 = vadd.f32 %v1462, 1.0
        %v1515 = vadd.f32 %v1464, 1.0
        %v1516 = vadd.f32 %v1466, 1.0
        %v1517 = vadd.f32 %v1468, 1.0
        %v1518 = vadd.f32 %v1470, 1.0
        %v1519 = vadd.f32 %v1472, 1.0
        %v1520 = vadd.f32 %v1474, 1.0
        %v1521 = vadd.f32 %v1476, 1.0
        %v1522 = vadd.f32 %v1478, 1.0
        %v1523 = vadd.f32 %v1480, 1.0
        %v1524 = vadd.f32 %v1482, 1.0
        %v1525 = vadd.f32 %v1484, 1.0
        %v1526 = vadd.f32 %v1486, 1.0
        %v1527 = vadd.f32 %v1488, 1.0
        %v1528 = vadd.f32 %v1490, 1.0
        %v1529 = vadd.f32 %v1492, 1.0
        %v1530 = vadd.f32 %v1494, 1.0
        %v1531 = vadd.f32 %v1496, 1.0
        %v1532 = vadd.f32 %v1498, 1.0
        %v1533 = vadd.f32 %v1500, 1.0
        %v1534 = vadd.f32 %v1502, 1.0
        %v1535 = vrcp.pop %v1503
        %v1536 = vmul.f32 %v1503, %v1535
        %v1537 = vsub.f32 1.0, %v1536
        %v1538 = vmul.f32 %v1535, %v1537
        %v1539 = vadd.f32 %v1535, %v1538
        %vm1540 = vweird.f32 %v1503
        %vm1541 = vweird.f32 %v1535
        %vm1542 = vmor %vm1540, %vm1541
        %v1543 = vsel %vm1542, %v1535, %v1539
        %v1544 = vand.u32 2147483647, %v1503
        %vm1545 = vcmp.eq.f32.partialorder %v1544, 8.507059e+37
        %v1546 = vand.u32 %v1503, 2147483648
        %v1547 = vor.u32 1.1754944e-38, %v1546
        %v1548 = vsel %vm1545, %v1547, %v1543
        %v1549 = vmul.f32 1.0, %v1548
        %v1550 = vrcp.pop %v1504
        %v1551 = vmul.f32 %v1504, %v1550
        %v1552 = vsub.f32 1.0, %v1551
        %v1553 = vmul.f32 %v1550, %v1552
        %v1554 = vadd.f32 %v1550, %v1553
        %vm1555 = vweird.f32 %v1504
        %vm1556 = vweird.f32 %v1550
        %vm1557 = vmor %vm1555, %vm1556
        %v1558 = vsel %vm1557, %v1550, %v1554
        %v1559 = vand.u32 2147483647, %v1504
        %vm1560 = vcmp.eq.f32.partialorder %v1559, 8.507059e+37
        %v1561 = vand.u32 %v1504, 2147483648
        %v1562 = vor.u32 1.1754944e-38, %v1561
        %v1563 = vsel %vm1560, %v1562, %v1558
        %v1564 = vmul.f32 1.0, %v1563
        %v1565 = vrcp.pop %v1505
        %v1566 = vmul.f32 %v1505, %v1565
        %v1567 = vsub.f32 1.0, %v1566
        %v1568 = vmul.f32 %v1565, %v1567
        %v1569 = vadd.f32 %v1565, %v1568
        %vm1570 = vweird.f32 %v1505
        %vm1571 = vweird.f32 %v1565
        %vm1572 = vmor %vm1570, %vm1571
        %v1573 = vsel %vm1572, %v1565, %v1569
        %v1574 = vand.u32 2147483647, %v1505
        %vm1575 = vcmp.eq.f32.partialorder %v1574, 8.507059e+37
        %v1576 = vand.u32 %v1505, 2147483648
        %v1577 = vor.u32 1.1754944e-38, %v1576
        %v1578 = vsel %vm1575, %v1577, %v1573
        %v1579 = vmul.f32 1.0, %v1578
        %v1580 = vrcp.pop %v1506
        %v1581 = vmul.f32 %v1506, %v1580
        %v1582 = vsub.f32 1.0, %v1581
        %v1583 = vmul.f32 %v1580, %v1582
        %v1584 = vadd.f32 %v1580, %v1583
        %vm1585 = vweird.f32 %v1506
        %vm1586 = vweird.f32 %v1580
        %vm1587 = vmor %vm1585, %vm1586
        %v1588 = vsel %vm1587, %v1580, %v1584
        %v1589 = vand.u32 2147483647, %v1506
        %vm1590 = vcmp.eq.f32.partialorder %v1589, 8.507059e+37
        %v1591 = vand.u32 %v1506, 2147483648
        %v1592 = vor.u32 1.1754944e-38, %v1591
        %v1593 = vsel %vm1590, %v1592, %v1588
        %v1594 = vmul.f32 1.0, %v1593
        %v1595 = vrcp.pop %v1507
        %v1596 = vmul.f32 %v1507, %v1595
        %v1597 = vsub.f32 1.0, %v1596
        %v1598 = vmul.f32 %v1595, %v1597
        %v1599 = vadd.f32 %v1595, %v1598
        %vm1600 = vweird.f32 %v1507
        %vm1601 = vweird.f32 %v1595
        %vm1602 = vmor %vm1600, %vm1601
        %v1603 = vsel %vm1602, %v1595, %v1599
        %v1604 = vand.u32 2147483647, %v1507
        %vm1605 = vcmp.eq.f32.partialorder %v1604, 8.507059e+37
        %v1606 = vand.u32 %v1507, 2147483648
        %v1607 = vor.u32 1.1754944e-38, %v1606
        %v1608 = vsel %vm1605, %v1607, %v1603
        %v1609 = vmul.f32 1.0, %v1608
        %v1610 = vrcp.pop %v1508
        %v1611 = vmul.f32 %v1508, %v1610
        %v1612 = vsub.f32 1.0, %v1611
        %v1613 = vmul.f32 %v1610, %v1612
        %v1614 = vadd.f32 %v1610, %v1613
        %vm1615 = vweird.f32 %v1508
        %vm1616 = vweird.f32 %v1610
        %vm1617 = vmor %vm1615, %vm1616
        %v1618 = vsel %vm1617, %v1610, %v1614
        %v1619 = vand.u32 2147483647, %v1508
        %vm1620 = vcmp.eq.f32.partialorder %v1619, 8.507059e+37
        %v1621 = vand.u32 %v1508, 2147483648
        %v1622 = vor.u32 1.1754944e-38, %v1621
        %v1623 = vsel %vm1620, %v1622, %v1618
        %v1624 = vmul.f32 1.0, %v1623
        %v1625 = vrcp.pop %v1509
        %v1626 = vmul.f32 %v1509, %v1625
        %v1627 = vsub.f32 1.0, %v1626
        %v1628 = vmul.f32 %v1625, %v1627
        %v1629 = vadd.f32 %v1625, %v1628
        %vm1630 = vweird.f32 %v1509
        %vm1631 = vweird.f32 %v1625
        %vm1632 = vmor %vm1630, %vm1631
        %v1633 = vsel %vm1632, %v1625, %v1629
        %v1634 = vand.u32 2147483647, %v1509
        %vm1635 = vcmp.eq.f32.partialorder %v1634, 8.507059e+37
        %v1636 = vand.u32 %v1509, 2147483648
        %v1637 = vor.u32 1.1754944e-38, %v1636
        %v1638 = vsel %vm1635, %v1637, %v1633
        %v1639 = vmul.f32 1.0, %v1638
        %v1640 = vrcp.pop %v1510
        %v1641 = vmul.f32 %v1510, %v1640
        %v1642 = vsub.f32 1.0, %v1641
        %v1643 = vmul.f32 %v1640, %v1642
        %v1644 = vadd.f32 %v1640, %v1643
        %vm1645 = vweird.f32 %v1510
        %vm1646 = vweird.f32 %v1640
        %vm1647 = vmor %vm1645, %vm1646
        %v1648 = vsel %vm1647, %v1640, %v1644
        %v1649 = vand.u32 2147483647, %v1510
        %vm1650 = vcmp.eq.f32.partialorder %v1649, 8.507059e+37
        %v1651 = vand.u32 %v1510, 2147483648
        %v1652 = vor.u32 1.1754944e-38, %v1651
        %v1653 = vsel %vm1650, %v1652, %v1648
        %v1654 = vmul.f32 1.0, %v1653
        %v1655 = vrcp.pop %v1511
        %v1656 = vmul.f32 %v1511, %v1655
        %v1657 = vsub.f32 1.0, %v1656
        %v1658 = vmul.f32 %v1655, %v1657
        %v1659 = vadd.f32 %v1655, %v1658
        %vm1660 = vweird.f32 %v1511
        %vm1661 = vweird.f32 %v1655
        %vm1662 = vmor %vm1660, %vm1661
        %v1663 = vsel %vm1662, %v1655, %v1659
        %v1664 = vand.u32 2147483647, %v1511
        %vm1665 = vcmp.eq.f32.partialorder %v1664, 8.507059e+37
        %v1666 = vand.u32 %v1511, 2147483648
        %v1667 = vor.u32 1.1754944e-38, %v1666
        %v1668 = vsel %vm1665, %v1667, %v1663
        %v1669 = vmul.f32 1.0, %v1668
        %v1670 = vrcp.pop %v1512
        %v1671 = vmul.f32 %v1512, %v1670
        %v1672 = vsub.f32 1.0, %v1671
        %v1673 = vmul.f32 %v1670, %v1672
        %v1674 = vadd.f32 %v1670, %v1673
        %vm1675 = vweird.f32 %v1512
        %vm1676 = vweird.f32 %v1670
        %vm1677 = vmor %vm1675, %vm1676
        %v1678 = vsel %vm1677, %v1670, %v1674
        %v1679 = vand.u32 2147483647, %v1512
        %vm1680 = vcmp.eq.f32.partialorder %v1679, 8.507059e+37
        %v1681 = vand.u32 %v1512, 2147483648
        %v1682 = vor.u32 1.1754944e-38, %v1681
        %v1683 = vsel %vm1680, %v1682, %v1678
        %v1684 = vmul.f32 1.0, %v1683
        %v1685 = vrcp.pop %v1513
        %v1686 = vmul.f32 %v1513, %v1685
        %v1687 = vsub.f32 1.0, %v1686
        %v1688 = vmul.f32 %v1685, %v1687
        %v1689 = vadd.f32 %v1685, %v1688
        %vm1690 = vweird.f32 %v1513
        %vm1691 = vweird.f32 %v1685
        %vm1692 = vmor %vm1690, %vm1691
        %v1693 = vsel %vm1692, %v1685, %v1689
        %v1694 = vand.u32 2147483647, %v1513
        %vm1695 = vcmp.eq.f32.partialorder %v1694, 8.507059e+37
        %v1696 = vand.u32 %v1513, 2147483648
        %v1697 = vor.u32 1.1754944e-38, %v1696
        %v1698 = vsel %vm1695, %v1697, %v1693
        %v1699 = vmul.f32 1.0, %v1698
        %v1700 = vrcp.pop %v1514
        %v1701 = vmul.f32 %v1514, %v1700
        %v1702 = vsub.f32 1.0, %v1701
        %v1703 = vmul.f32 %v1700, %v1702
        %v1704 = vadd.f32 %v1700, %v1703
        %vm1705 = vweird.f32 %v1514
        %vm1706 = vweird.f32 %v1700
        %vm1707 = vmor %vm1705, %vm1706
        %v1708 = vsel %vm1707, %v1700, %v1704
        %v1709 = vand.u32 2147483647, %v1514
        %vm1710 = vcmp.eq.f32.partialorder %v1709, 8.507059e+37
        %v1711 = vand.u32 %v1514, 2147483648
        %v1712 = vor.u32 1.1754944e-38, %v1711
        %v1713 = vsel %vm1710, %v1712, %v1708
        %v1714 = vmul.f32 1.0, %v1713
        %v1715 = vrcp.pop %v1515
        %v1716 = vmul.f32 %v1515, %v1715
        %v1717 = vsub.f32 1.0, %v1716
        %v1718 = vmul.f32 %v1715, %v1717
        %v1719 = vadd.f32 %v1715, %v1718
        %vm1720 = vweird.f32 %v1515
        %vm1721 = vweird.f32 %v1715
        %vm1722 = vmor %vm1720, %vm1721
        %v1723 = vsel %vm1722, %v1715, %v1719
        %v1724 = vand.u32 2147483647, %v1515
        %vm1725 = vcmp.eq.f32.partialorder %v1724, 8.507059e+37
        %v1726 = vand.u32 %v1515, 2147483648
        %v1727 = vor.u32 1.1754944e-38, %v1726
        %v1728 = vsel %vm1725, %v1727, %v1723
        %v1729 = vmul.f32 1.0, %v1728
        %v1730 = vrcp.pop %v1516
        %v1731 = vmul.f32 %v1516, %v1730
        %v1732 = vsub.f32 1.0, %v1731
        %v1733 = vmul.f32 %v1730, %v1732
        %v1734 = vadd.f32 %v1730, %v1733
        %vm1735 = vweird.f32 %v1516
        %vm1736 = vweird.f32 %v1730
        %vm1737 = vmor %vm1735, %vm1736
        %v1738 = vsel %vm1737, %v1730, %v1734
        %v1739 = vand.u32 2147483647, %v1516
        %vm1740 = vcmp.eq.f32.partialorder %v1739, 8.507059e+37
        %v1741 = vand.u32 %v1516, 2147483648
        %v1742 = vor.u32 1.1754944e-38, %v1741
        %v1743 = vsel %vm1740, %v1742, %v1738
        %v1744 = vmul.f32 1.0, %v1743
        %v1745 = vrcp.pop %v1517
        %v1746 = vmul.f32 %v1517, %v1745
        %v1747 = vsub.f32 1.0, %v1746
        %v1748 = vmul.f32 %v1745, %v1747
        %v1749 = vadd.f32 %v1745, %v1748
        %vm1750 = vweird.f32 %v1517
        %vm1751 = vweird.f32 %v1745
        %vm1752 = vmor %vm1750, %vm1751
        %v1753 = vsel %vm1752, %v1745, %v1749
        %v1754 = vand.u32 2147483647, %v1517
        %vm1755 = vcmp.eq.f32.partialorder %v1754, 8.507059e+37
        %v1756 = vand.u32 %v1517, 2147483648
        %v1757 = vor.u32 1.1754944e-38, %v1756
        %v1758 = vsel %vm1755, %v1757, %v1753
        %v1759 = vmul.f32 1.0, %v1758
        %v1760 = vrcp.pop %v1518
        %v1761 = vmul.f32 %v1518, %v1760
        %v1762 = vsub.f32 1.0, %v1761
        %v1763 = vmul.f32 %v1760, %v1762
        %v1764 = vadd.f32 %v1760, %v1763
        %vm1765 = vweird.f32 %v1518
        %vm1766 = vweird.f32 %v1760
        %vm1767 = vmor %vm1765, %vm1766
        %v1768 = vsel %vm1767, %v1760, %v1764
        %v1769 = vand.u32 2147483647, %v1518
        %vm1770 = vcmp.eq.f32.partialorder %v1769, 8.507059e+37
        %v1771 = vand.u32 %v1518, 2147483648
        %v1772 = vor.u32 1.1754944e-38, %v1771
        %v1773 = vsel %vm1770, %v1772, %v1768
        %v1774 = vmul.f32 1.0, %v1773
        %v1775 = vrcp.pop %v1519
        %v1776 = vmul.f32 %v1519, %v1775
        %v1777 = vsub.f32 1.0, %v1776
        %v1778 = vmul.f32 %v1775, %v1777
        %v1779 = vadd.f32 %v1775, %v1778
        %vm1780 = vweird.f32 %v1519
        %vm1781 = vweird.f32 %v1775
        %vm1782 = vmor %vm1780, %vm1781
        %v1783 = vsel %vm1782, %v1775, %v1779
        %v1784 = vand.u32 2147483647, %v1519
        %vm1785 = vcmp.eq.f32.partialorder %v1784, 8.507059e+37
        %v1786 = vand.u32 %v1519, 2147483648
        %v1787 = vor.u32 1.1754944e-38, %v1786
        %v1788 = vsel %vm1785, %v1787, %v1783
        %v1789 = vmul.f32 1.0, %v1788
        %v1790 = vrcp.pop %v1520
        %v1791 = vmul.f32 %v1520, %v1790
        %v1792 = vsub.f32 1.0, %v1791
        %v1793 = vmul.f32 %v1790, %v1792
        %v1794 = vadd.f32 %v1790, %v1793
        %vm1795 = vweird.f32 %v1520
        %vm1796 = vweird.f32 %v1790
        %vm1797 = vmor %vm1795, %vm1796
        %v1798 = vsel %vm1797, %v1790, %v1794
        %v1799 = vand.u32 2147483647, %v1520
        %vm1800 = vcmp.eq.f32.partialorder %v1799, 8.507059e+37
        %v1801 = vand.u32 %v1520, 2147483648
        %v1802 = vor.u32 1.1754944e-38, %v1801
        %v1803 = vsel %vm1800, %v1802, %v1798
        %v1804 = vmul.f32 1.0, %v1803
        %v1805 = vrcp.pop %v1521
        %v1806 = vmul.f32 %v1521, %v1805
        %v1807 = vsub.f32 1.0, %v1806
        %v1808 = vmul.f32 %v1805, %v1807
        %v1809 = vadd.f32 %v1805, %v1808
        %vm1810 = vweird.f32 %v1521
        %vm1811 = vweird.f32 %v1805
        %vm1812 = vmor %vm1810, %vm1811
        %v1813 = vsel %vm1812, %v1805, %v1809
        %v1814 = vand.u32 2147483647, %v1521
        %vm1815 = vcmp.eq.f32.partialorder %v1814, 8.507059e+37
        %v1816 = vand.u32 %v1521, 2147483648
        %v1817 = vor.u32 1.1754944e-38, %v1816
        %v1818 = vsel %vm1815, %v1817, %v1813
        %v1819 = vmul.f32 1.0, %v1818
        %v1820 = vrcp.pop %v1522
        %v1821 = vmul.f32 %v1522, %v1820
        %v1822 = vsub.f32 1.0, %v1821
        %v1823 = vmul.f32 %v1820, %v1822
        %v1824 = vadd.f32 %v1820, %v1823
        %vm1825 = vweird.f32 %v1522
        %vm1826 = vweird.f32 %v1820
        %vm1827 = vmor %vm1825, %vm1826
        %v1828 = vsel %vm1827, %v1820, %v1824
        %v1829 = vand.u32 2147483647, %v1522
        %vm1830 = vcmp.eq.f32.partialorder %v1829, 8.507059e+37
        %v1831 = vand.u32 %v1522, 2147483648
        %v1832 = vor.u32 1.1754944e-38, %v1831
        %v1833 = vsel %vm1830, %v1832, %v1828
        %v1834 = vmul.f32 1.0, %v1833
        %v1835 = vrcp.pop %v1523
        %v1836 = vmul.f32 %v1523, %v1835
        %v1837 = vsub.f32 1.0, %v1836
        %v1838 = vmul.f32 %v1835, %v1837
        %v1839 = vadd.f32 %v1835, %v1838
        %vm1840 = vweird.f32 %v1523
        %vm1841 = vweird.f32 %v1835
        %vm1842 = vmor %vm1840, %vm1841
        %v1843 = vsel %vm1842, %v1835, %v1839
        %v1844 = vand.u32 2147483647, %v1523
        %vm1845 = vcmp.eq.f32.partialorder %v1844, 8.507059e+37
        %v1846 = vand.u32 %v1523, 2147483648
        %v1847 = vor.u32 1.1754944e-38, %v1846
        %v1848 = vsel %vm1845, %v1847, %v1843
        %v1849 = vmul.f32 1.0, %v1848
        %v1850 = vrcp.pop %v1524
        %v1851 = vmul.f32 %v1524, %v1850
        %v1852 = vsub.f32 1.0, %v1851
        %v1853 = vmul.f32 %v1850, %v1852
        %v1854 = vadd.f32 %v1850, %v1853
        %vm1855 = vweird.f32 %v1524
        %vm1856 = vweird.f32 %v1850
        %vm1857 = vmor %vm1855, %vm1856
        %v1858 = vsel %vm1857, %v1850, %v1854
        %v1859 = vand.u32 2147483647, %v1524
        %vm1860 = vcmp.eq.f32.partialorder %v1859, 8.507059e+37
        %v1861 = vand.u32 %v1524, 2147483648
        %v1862 = vor.u32 1.1754944e-38, %v1861
        %v1863 = vsel %vm1860, %v1862, %v1858
        %v1864 = vmul.f32 1.0, %v1863
        %v1865 = vrcp.pop %v1525
        %v1866 = vmul.f32 %v1525, %v1865
        %v1867 = vsub.f32 1.0, %v1866
        %v1868 = vmul.f32 %v1865, %v1867
        %v1869 = vadd.f32 %v1865, %v1868
        %vm1870 = vweird.f32 %v1525
        %vm1871 = vweird.f32 %v1865
        %vm1872 = vmor %vm1870, %vm1871
        %v1873 = vsel %vm1872, %v1865, %v1869
        %v1874 = vand.u32 2147483647, %v1525
        %vm1875 = vcmp.eq.f32.partialorder %v1874, 8.507059e+37
        %v1876 = vand.u32 %v1525, 2147483648
        %v1877 = vor.u32 1.1754944e-38, %v1876
        %v1878 = vsel %vm1875, %v1877, %v1873
        %v1879 = vmul.f32 1.0, %v1878
        %v1880 = vrcp.pop %v1526
        %v1881 = vmul.f32 %v1526, %v1880
        %v1882 = vsub.f32 1.0, %v1881
        %v1883 = vmul.f32 %v1880, %v1882
        %v1884 = vadd.f32 %v1880, %v1883
        %vm1885 = vweird.f32 %v1526
        %vm1886 = vweird.f32 %v1880
        %vm1887 = vmor %vm1885, %vm1886
        %v1888 = vsel %vm1887, %v1880, %v1884
        %v1889 = vand.u32 2147483647, %v1526
        %vm1890 = vcmp.eq.f32.partialorder %v1889, 8.507059e+37
        %v1891 = vand.u32 %v1526, 2147483648
        %v1892 = vor.u32 1.1754944e-38, %v1891
        %v1893 = vsel %vm1890, %v1892, %v1888
        %v1894 = vmul.f32 1.0, %v1893
        %v1895 = vrcp.pop %v1527
        %v1896 = vmul.f32 %v1527, %v1895
        %v1897 = vsub.f32 1.0, %v1896
        %v1898 = vmul.f32 %v1895, %v1897
        %v1899 = vadd.f32 %v1895, %v1898
        %vm1900 = vweird.f32 %v1527
        %vm1901 = vweird.f32 %v1895
        %vm1902 = vmor %vm1900, %vm1901
        %v1903 = vsel %vm1902, %v1895, %v1899
        %v1904 = vand.u32 2147483647, %v1527
        %vm1905 = vcmp.eq.f32.partialorder %v1904, 8.507059e+37
        %v1906 = vand.u32 %v1527, 2147483648
        %v1907 = vor.u32 1.1754944e-38, %v1906
        %v1908 = vsel %vm1905, %v1907, %v1903
        %v1909 = vmul.f32 1.0, %v1908
        %v1910 = vrcp.pop %v1528
        %v1911 = vmul.f32 %v1528, %v1910
        %v1912 = vsub.f32 1.0, %v1911
        %v1913 = vmul.f32 %v1910, %v1912
        %v1914 = vadd.f32 %v1910, %v1913
        %vm1915 = vweird.f32 %v1528
        %vm1916 = vweird.f32 %v1910
        %vm1917 = vmor %vm1915, %vm1916
        %v1918 = vsel %vm1917, %v1910, %v1914
        %v1919 = vand.u32 2147483647, %v1528
        %vm1920 = vcmp.eq.f32.partialorder %v1919, 8.507059e+37
        %v1921 = vand.u32 %v1528, 2147483648
        %v1922 = vor.u32 1.1754944e-38, %v1921
        %v1923 = vsel %vm1920, %v1922, %v1918
        %v1924 = vmul.f32 1.0, %v1923
        %v1925 = vrcp.pop %v1529
        %v1926 = vmul.f32 %v1529, %v1925
        %v1927 = vsub.f32 1.0, %v1926
        %v1928 = vmul.f32 %v1925, %v1927
        %v1929 = vadd.f32 %v1925, %v1928
        %vm1930 = vweird.f32 %v1529
        %vm1931 = vweird.f32 %v1925
        %vm1932 = vmor %vm1930, %vm1931
        %v1933 = vsel %vm1932, %v1925, %v1929
        %v1934 = vand.u32 2147483647, %v1529
        %vm1935 = vcmp.eq.f32.partialorder %v1934, 8.507059e+37
        %v1936 = vand.u32 %v1529, 2147483648
        %v1937 = vor.u32 1.1754944e-38, %v1936
        %v1938 = vsel %vm1935, %v1937, %v1933
        %v1939 = vmul.f32 1.0, %v1938
        %v1940 = vrcp.pop %v1530
        %v1941 = vmul.f32 %v1530, %v1940
        %v1942 = vsub.f32 1.0, %v1941
        %v1943 = vmul.f32 %v1940, %v1942
        %v1944 = vadd.f32 %v1940, %v1943
        %vm1945 = vweird.f32 %v1530
        %vm1946 = vweird.f32 %v1940
        %vm1947 = vmor %vm1945, %vm1946
        %v1948 = vsel %vm1947, %v1940, %v1944
        %v1949 = vand.u32 2147483647, %v1530
        %vm1950 = vcmp.eq.f32.partialorder %v1949, 8.507059e+37
        %v1951 = vand.u32 %v1530, 2147483648
        %v1952 = vor.u32 1.1754944e-38, %v1951
        %v1953 = vsel %vm1950, %v1952, %v1948
        %v1954 = vmul.f32 1.0, %v1953
        %v1955 = vrcp.pop %v1531
        %v1956 = vmul.f32 %v1531, %v1955
        %v1957 = vsub.f32 1.0, %v1956
        %v1958 = vmul.f32 %v1955, %v1957
        %v1959 = vadd.f32 %v1955, %v1958
        %vm1960 = vweird.f32 %v1531
        %vm1961 = vweird.f32 %v1955
        %vm1962 = vmor %vm1960, %vm1961
        %v1963 = vsel %vm1962, %v1955, %v1959
        %v1964 = vand.u32 2147483647, %v1531
        %vm1965 = vcmp.eq.f32.partialorder %v1964, 8.507059e+37
        %v1966 = vand.u32 %v1531, 2147483648
        %v1967 = vor.u32 1.1754944e-38, %v1966
        %v1968 = vsel %vm1965, %v1967, %v1963
        %v1969 = vmul.f32 1.0, %v1968
        %v1970 = vrcp.pop %v1532
        %v1971 = vmul.f32 %v1532, %v1970
        %v1972 = vsub.f32 1.0, %v1971
        %v1973 = vmul.f32 %v1970, %v1972
        %v1974 = vadd.f32 %v1970, %v1973
        %vm1975 = vweird.f32 %v1532
        %vm1976 = vweird.f32 %v1970
        %vm1977 = vmor %vm1975, %vm1976
        %v1978 = vsel %vm1977, %v1970, %v1974
        %v1979 = vand.u32 2147483647, %v1532
        %vm1980 = vcmp.eq.f32.partialorder %v1979, 8.507059e+37
        %v1981 = vand.u32 %v1532, 2147483648
        %v1982 = vor.u32 1.1754944e-38, %v1981
        %v1983 = vsel %vm1980, %v1982, %v1978
        %v1984 = vmul.f32 1.0, %v1983
        %v1985 = vrcp.pop %v1533
        %v1986 = vmul.f32 %v1533, %v1985
        %v1987 = vsub.f32 1.0, %v1986
        %v1988 = vmul.f32 %v1985, %v1987
        %v1989 = vadd.f32 %v1985, %v1988
        %vm1990 = vweird.f32 %v1533
        %vm1991 = vweird.f32 %v1985
        %vm1992 = vmor %vm1990, %vm1991
        %v1993 = vsel %vm1992, %v1985, %v1989
        %v1994 = vand.u32 2147483647, %v1533
        %vm1995 = vcmp.eq.f32.partialorder %v1994, 8.507059e+37
        %v1996 = vand.u32 %v1533, 2147483648
        %v1997 = vor.u32 1.1754944e-38, %v1996
        %v1998 = vsel %vm1995, %v1997, %v1993
        %v1999 = vmul.f32 1.0, %v1998
        %v2000 = vrcp.pop %v1534
        %v2001 = vmul.f32 %v1534, %v2000
        %v2002 = vsub.f32 1.0, %v2001
        %v2003 = vmul.f32 %v2000, %v2002
        %v2004 = vadd.f32 %v2000, %v2003
        %vm2005 = vweird.f32 %v1534
        %vm2006 = vweird.f32 %v2000
        %vm2007 = vmor %vm2005, %vm2006
        %v2008 = vsel %vm2007, %v2000, %v2004
        %v2009 = vand.u32 2147483647, %v1534
        %vm2010 = vcmp.eq.f32.partialorder %v2009, 8.507059e+37
        %v2011 = vand.u32 %v1534, 2147483648
        %v2012 = vor.u32 1.1754944e-38, %v2011
        %v2013 = vsel %vm2010, %v2012, %v2008
        %v2014 = vmul.f32 1.0, %v2013
        %v2015 = vmul.f32 %v1328, %v1549
        %v2016 = vmul.f32 %v1330, %v1564
        %v2017 = vmul.f32 %v1333, %v1579
        %v2018 = vmul.f32 %v1335, %v1594
        %v2019 = vmul.f32 %v1338, %v1609
        %v2020 = vmul.f32 %v1340, %v1624
        %v2021 = vmul.f32 %v1343, %v1639
        %v2022 = vmul.f32 %v1345, %v1654
        %v2023 = vmul.f32 %v1348, %v1669
        %v2024 = vmul.f32 %v1350, %v1684
        %v2025 = vmul.f32 %v1353, %v1699
        %v2026 = vmul.f32 %v1355, %v1714
        %v2027 = vmul.f32 %v1358, %v1729
        %v2028 = vmul.f32 %v1360, %v1744
        %v2029 = vmul.f32 %v1363, %v1759
        %v2030 = vmul.f32 %v1365, %v1774
        %v2031 = vmul.f32 %v1368, %v1789
        %v2032 = vmul.f32 %v1370, %v1804
        %v2033 = vmul.f32 %v1373, %v1819
        %v2034 = vmul.f32 %v1375, %v1834
        %v2035 = vmul.f32 %v1378, %v1849
        %v2036 = vmul.f32 %v1380, %v1864
        %v2037 = vmul.f32 %v1383, %v1879
        %v2038 = vmul.f32 %v1385, %v1894
        %v2039 = vmul.f32 %v1388, %v1909
        %v2040 = vmul.f32 %v1390, %v1924
        %v2041 = vmul.f32 %v1393, %v1939
        %v2042 = vmul.f32 %v1395, %v1954
        %v2043 = vmul.f32 %v1398, %v1969
        %v2044 = vmul.f32 %v1400, %v1984
        %v2045 = vmul.f32 %v1403, %v1999
        %v2046 = vmul.f32 %v1405, %v2014
        %vm2047 = vcmask 523264
        %2048 = vst.msk [vmem:[#allocation2] sm:$0xff] %vm2047, 0.0
        %vm2049 = vcmask 517120
        %2050 = vst.msk [vmem:[#allocation2 + $0x8] sm:$0x3] %vm2049, 0.0
        %2051 = vst.msk [vmem:[#allocation2 + $0xa0] sm:$0xff] %vm2047, 0.0
        %2052 = vst.msk [vmem:[#allocation2 + $0xa8] sm:$0x3] %vm2049, 0.0
        %2053 = vst.msk [vmem:[#allocation2 + $0x140] sm:$0xff] %vm2047, 0.0
        %2054 = vst.msk [vmem:[#allocation2 + $0x148] sm:$0x3] %vm2049, 0.0
        %2055 = vst.msk [vmem:[#allocation2 + $0x1e0] sm:$0xff] %vm2047, 0.0
        %2056 = vst.msk [vmem:[#allocation2 + $0x1e8] sm:$0x3] %vm2049, 0.0
        %s2057 = scalar_lea.vmem [#allocation2], 144
        %2058 = vst.msk [vmem:[%s2057] sm:$0xff] %vm2047, 0.0
        %2059 = vst.msk [vmem:[%s2057 + $0x8] sm:$0x3] %vm2049, 0.0
        %2060 = vst.msk [vmem:[%s2057 + $0xa0] sm:$0xff] %vm2047, 0.0
        %2061 = vst.msk [vmem:[%s2057 + $0xa8] sm:$0x3] %vm2049, 0.0
        %2062 = vst.msk [vmem:[%s2057 + $0x140] sm:$0xff] %vm2047, 0.0
        %2063 = vst.msk [vmem:[%s2057 + $0x148] sm:$0x3] %vm2049, 0.0
        %2064 = vst.msk [vmem:[%s2057 + $0x1e0] sm:$0xff] %vm2047, 0.0
        %2065 = vst.msk [vmem:[%s2057 + $0x1e8] sm:$0x3] %vm2049, 0.0
        %vm2066 = vcmask 516096
        %2067 = vst.msk [vmem:[#allocation2] sm:$0x1] %vm2066, 0.0
        %2068 = vst.msk [vmem:[#allocation2 + $0x10] sm:$0x1] %vm2066, 0.0
        %2069 = vst.msk [vmem:[#allocation2 + $0x20] sm:$0x1] %vm2066, 0.0
        %2070 = vst.msk [vmem:[#allocation2 + $0x30] sm:$0x1] %vm2066, 0.0
        %2071 = vst.msk [vmem:[#allocation2 + $0x40] sm:$0x1] %vm2066, 0.0
        %2072 = vst.msk [vmem:[#allocation2 + $0x50] sm:$0x1] %vm2066, 0.0
        %2073 = vst.msk [vmem:[#allocation2 + $0x60] sm:$0x1] %vm2066, 0.0
        %2074 = vst.msk [vmem:[#allocation2 + $0x70] sm:$0x1] %vm2066, 0.0
        %2075 = vst.msk [vmem:[#allocation2 + $0x80] sm:$0x1] %vm2066, 0.0
        %2076 = vst.msk [vmem:[#allocation2 + $0x90] sm:$0x1] %vm2066, 0.0
        %2077 = vst.msk [vmem:[#allocation2 + $0xa0] sm:$0x1] %vm2066, 0.0
        %2078 = vst.msk [vmem:[#allocation2 + $0xb0] sm:$0x1] %vm2066, 0.0
        %2079 = vst.msk [vmem:[#allocation2 + $0xc0] sm:$0x1] %vm2066, 0.0
        %2080 = vst.msk [vmem:[#allocation2 + $0xd0] sm:$0x1] %vm2066, 0.0
        %2081 = vst.msk [vmem:[#allocation2 + $0xe0] sm:$0x1] %vm2066, 0.0
        %2082 = vst.msk [vmem:[#allocation2 + $0xf0] sm:$0x1] %vm2066, 0.0
        %2083 = vst.msk [vmem:[#allocation2 + $0x100] sm:$0x1] %vm2066, 0.0
        %2084 = vst.msk [vmem:[#allocation2 + $0x110] sm:$0x1] %vm2066, 0.0
        %2085 = vst.msk [vmem:[#allocation2 + $0x120] sm:$0x1] %vm2066, 0.0
        %2086 = vst.msk [vmem:[#allocation2 + $0x130] sm:$0x1] %vm2066, 0.0
        %2087 = vst.msk [vmem:[#allocation2 + $0x140] sm:$0x1] %vm2066, 0.0
        %2088 = vst.msk [vmem:[#allocation2 + $0x150] sm:$0x1] %vm2066, 0.0
        %2089 = vst.msk [vmem:[#allocation2 + $0x160] sm:$0x1] %vm2066, 0.0
        %2090 = vst.msk [vmem:[#allocation2 + $0x170] sm:$0x1] %vm2066, 0.0
        %2091 = vst.msk [vmem:[#allocation2 + $0x180] sm:$0x1] %vm2066, 0.0
        %2092 = vst.msk [vmem:[#allocation2 + $0x190] sm:$0x1] %vm2066, 0.0
        %2093 = vst.msk [vmem:[#allocation2 + $0x1a0] sm:$0x1] %vm2066, 0.0
        %2094 = vst.msk [vmem:[#allocation2 + $0x1b0] sm:$0x1] %vm2066, 0.0
        %2095 = vst.msk [vmem:[#allocation2 + $0x1c0] sm:$0x1] %vm2066, 0.0
        %2096 = vst.msk [vmem:[#allocation2 + $0x1d0] sm:$0x1] %vm2066, 0.0
        %2097 = vst.msk [vmem:[#allocation2 + $0x1e0] sm:$0x1] %vm2066, 0.0
        %2098 = vst.msk [vmem:[#allocation2 + $0x1f0] sm:$0x1] %vm2066, 0.0
        %2099 = vst.msk [vmem:[#allocation2 + $0x200] sm:$0x1] %vm2066, 0.0
        %2100 = vst.msk [vmem:[#allocation2 + $0x210] sm:$0x1] %vm2066, 0.0
        %2101 = vst.msk [vmem:[#allocation2 + $0x220] sm:$0x1] %vm2066, 0.0
        %2102 = vst.msk [vmem:[#allocation2 + $0x230] sm:$0x1] %vm2066, 0.0
        %2103 = vst.msk [vmem:[#allocation2 + $0x240] sm:$0x1] %vm2066, 0.0
        %2104 = vst.msk [vmem:[#allocation2 + $0x250] sm:$0x1] %vm2066, 0.0
        %2105 = vst.msk [vmem:[#allocation2 + $0x260] sm:$0x1] %vm2066, 0.0
        %2106 = vst.msk [vmem:[#allocation2 + $0x270] sm:$0x1] %vm2066, 0.0
        %2107 = vst.msk [vmem:[#allocation2 + $0x9] sm:$0x1] %vm2066, 0.0
        %2108 = vst.msk [vmem:[#allocation2 + $0x19] sm:$0x1] %vm2066, 0.0
        %2109 = vst.msk [vmem:[#allocation2 + $0x29] sm:$0x1] %vm2066, 0.0
        %2110 = vst.msk [vmem:[#allocation2 + $0x39] sm:$0x1] %vm2066, 0.0
        %2111 = vst.msk [vmem:[#allocation2 + $0x49] sm:$0x1] %vm2066, 0.0
        %2112 = vst.msk [vmem:[#allocation2 + $0x59] sm:$0x1] %vm2066, 0.0
        %2113 = vst.msk [vmem:[#allocation2 + $0x69] sm:$0x1] %vm2066, 0.0
        %2114 = vst.msk [vmem:[#allocation2 + $0x79] sm:$0x1] %vm2066, 0.0
        %2115 = vst.msk [vmem:[#allocation2 + $0x89] sm:$0x1] %vm2066, 0.0
        %2116 = vst.msk [vmem:[#allocation2 + $0x99] sm:$0x1] %vm2066, 0.0
        %2117 = vst.msk [vmem:[#allocation2 + $0xa9] sm:$0x1] %vm2066, 0.0
        %2118 = vst.msk [vmem:[#allocation2 + $0xb9] sm:$0x1] %vm2066, 0.0
        %2119 = vst.msk [vmem:[#allocation2 + $0xc9] sm:$0x1] %vm2066, 0.0
        %2120 = vst.msk [vmem:[#allocation2 + $0xd9] sm:$0x1] %vm2066, 0.0
        %2121 = vst.msk [vmem:[#allocation2 + $0xe9] sm:$0x1] %vm2066, 0.0
        %2122 = vst.msk [vmem:[#allocation2 + $0xf9] sm:$0x1] %vm2066, 0.0
        %2123 = vst.msk [vmem:[#allocation2 + $0x109] sm:$0x1] %vm2066, 0.0
        %2124 = vst.msk [vmem:[#allocation2 + $0x119] sm:$0x1] %vm2066, 0.0
        %2125 = vst.msk [vmem:[#allocation2 + $0x129] sm:$0x1] %vm2066, 0.0
        %2126 = vst.msk [vmem:[#allocation2 + $0x139] sm:$0x1] %vm2066, 0.0
        %2127 = vst.msk [vmem:[#allocation2 + $0x149] sm:$0x1] %vm2066, 0.0
        %2128 = vst.msk [vmem:[#allocation2 + $0x159] sm:$0x1] %vm2066, 0.0
        %2129 = vst.msk [vmem:[#allocation2 + $0x169] sm:$0x1] %vm2066, 0.0
        %2130 = vst.msk [vmem:[#allocation2 + $0x179] sm:$0x1] %vm2066, 0.0
        %2131 = vst.msk [vmem:[#allocation2 + $0x189] sm:$0x1] %vm2066, 0.0
        %2132 = vst.msk [vmem:[#allocation2 + $0x199] sm:$0x1] %vm2066, 0.0
        %2133 = vst.msk [vmem:[#allocation2 + $0x1a9] sm:$0x1] %vm2066, 0.0
        %2134 = vst.msk [vmem:[#allocation2 + $0x1b9] sm:$0x1] %vm2066, 0.0
        %2135 = vst.msk [vmem:[#allocation2 + $0x1c9] sm:$0x1] %vm2066, 0.0
        %2136 = vst.msk [vmem:[#allocation2 + $0x1d9] sm:$0x1] %vm2066, 0.0
        %2137 = vst.msk [vmem:[#allocation2 + $0x1e9] sm:$0x1] %vm2066, 0.0
        %2138 = vst.msk [vmem:[#allocation2 + $0x1f9] sm:$0x1] %vm2066, 0.0
        %2139 = vst.msk [vmem:[#allocation2 + $0x209] sm:$0x1] %vm2066, 0.0
        %2140 = vst.msk [vmem:[#allocation2 + $0x219] sm:$0x1] %vm2066, 0.0
        %2141 = vst.msk [vmem:[#allocation2 + $0x229] sm:$0x1] %vm2066, 0.0
        %2142 = vst.msk [vmem:[#allocation2 + $0x239] sm:$0x1] %vm2066, 0.0
        %2143 = vst.msk [vmem:[#allocation2 + $0x249] sm:$0x1] %vm2066, 0.0
        %2144 = vst.msk [vmem:[#allocation2 + $0x259] sm:$0x1] %vm2066, 0.0
        %2145 = vst.msk [vmem:[#allocation2 + $0x269] sm:$0x1] %vm2066, 0.0
        %2146 = vst.msk [vmem:[#allocation2 + $0x279] sm:$0x1] %vm2066, 0.0
        %s2147 = scalar_lea.vmem [#allocation2], 16
        %2148 = vst.msk [vmem:[%s2147 + $0x1] sm:$0xff] %vm2047, %v2015
        %2149 = vst.msk [vmem:[%s2147 + $0x11] sm:$0xff] %vm2047, %v2016
        %2150 = vst.msk [vmem:[%s2147 + $0x21] sm:$0xff] %vm2047, %v2017
        %2151 = vst.msk [vmem:[%s2147 + $0x31] sm:$0xff] %vm2047, %v2018
        %2152 = vst.msk [vmem:[%s2147 + $0x41] sm:$0xff] %vm2047, %v2019
        %2153 = vst.msk [vmem:[%s2147 + $0x51] sm:$0xff] %vm2047, %v2020
        %2154 = vst.msk [vmem:[%s2147 + $0x61] sm:$0xff] %vm2047, %v2021
        %2155 = vst.msk [vmem:[%s2147 + $0x71] sm:$0xff] %vm2047, %v2022
        %2156 = vst.msk [vmem:[%s2147 + $0xa1] sm:$0xff] %vm2047, %v2023
        %2157 = vst.msk [vmem:[%s2147 + $0xb1] sm:$0xff] %vm2047, %v2024
        %2158 = vst.msk [vmem:[%s2147 + $0xc1] sm:$0xff] %vm2047, %v2025
        %2159 = vst.msk [vmem:[%s2147 + $0xd1] sm:$0xff] %vm2047, %v2026
        %2160 = vst.msk [vmem:[%s2147 + $0xe1] sm:$0xff] %vm2047, %v2027
        %2161 = vst.msk [vmem:[%s2147 + $0xf1] sm:$0xff] %vm2047, %v2028
        %2162 = vst.msk [vmem:[%s2147 + $0x101] sm:$0xff] %vm2047, %v2029
        %2163 = vst.msk [vmem:[%s2147 + $0x111] sm:$0xff] %vm2047, %v2030
        %2164 = vst.msk [vmem:[%s2147 + $0x141] sm:$0xff] %vm2047, %v2031
        %2165 = vst.msk [vmem:[%s2147 + $0x151] sm:$0xff] %vm2047, %v2032
        %2166 = vst.msk [vmem:[%s2147 + $0x161] sm:$0xff] %vm2047, %v2033
        %2167 = vst.msk [vmem:[%s2147 + $0x171] sm:$0xff] %vm2047, %v2034
        %2168 = vst.msk [vmem:[%s2147 + $0x181] sm:$0xff] %vm2047, %v2035
        %2169 = vst.msk [vmem:[%s2147 + $0x191] sm:$0xff] %vm2047, %v2036
        %2170 = vst.msk [vmem:[%s2147 + $0x1a1] sm:$0xff] %vm2047, %v2037
        %2171 = vst.msk [vmem:[%s2147 + $0x1b1] sm:$0xff] %vm2047, %v2038
        %2172 = vst.msk [vmem:[%s2147 + $0x1e1] sm:$0xff] %vm2047, %v2039
        %2173 = vst.msk [vmem:[%s2147 + $0x1f1] sm:$0xff] %vm2047, %v2040
        %2174 = vst.msk [vmem:[%s2147 + $0x201] sm:$0xff] %vm2047, %v2041
        %2175 = vst.msk [vmem:[%s2147 + $0x211] sm:$0xff] %vm2047, %v2042
        %2176 = vst.msk [vmem:[%s2147 + $0x221] sm:$0xff] %vm2047, %v2043
        %2177 = vst.msk [vmem:[%s2147 + $0x231] sm:$0xff] %vm2047, %v2044
        %2178 = vst.msk [vmem:[%s2147 + $0x241] sm:$0xff] %vm2047, %v2045
        %2179 = vst.msk [vmem:[%s2147 + $0x251] sm:$0xff] %vm2047, %v2046
        %v2180 = vld [vmem:[%s3] sm:$0x1]
        %v2181 = vld [vmem:[#allocation2] sm:$0xff]
        %v2182 = vld [vmem:[#allocation2 + $0x10] sm:$0xff]
        %v2183 = vld [vmem:[#allocation2 + $0x20] sm:$0xff]
        %v2184 = vld [vmem:[#allocation2 + $0x30] sm:$0xff]
        %v2185 = vld [vmem:[#allocation2 + $0x40] sm:$0xff]
        %v2186 = vld [vmem:[#allocation2 + $0x50] sm:$0xff]
        %v2187 = vld [vmem:[#allocation2 + $0x60] sm:$0xff]
        %v2188 = vld [vmem:[#allocation2 + $0x70] sm:$0xff]
        %v2189 = vld [vmem:[#allocation2 + $0xa0] sm:$0xff]
        %v2190 = vld [vmem:[#allocation2 + $0xb0] sm:$0xff]
        %v2191 = vld [vmem:[#allocation2 + $0xc0] sm:$0xff]
        %v2192 = vld [vmem:[#allocation2 + $0xd0] sm:$0xff]
        %v2193 = vld [vmem:[#allocation2 + $0xe0] sm:$0xff]
        %v2194 = vld [vmem:[#allocation2 + $0xf0] sm:$0xff]
        %v2195 = vld [vmem:[#allocation2 + $0x100] sm:$0xff]
        %v2196 = vld [vmem:[#allocation2 + $0x110] sm:$0xff]
        %v2197 = vld [vmem:[#allocation2 + $0x140] sm:$0xff]
        %v2198 = vld [vmem:[#allocation2 + $0x150] sm:$0xff]
        %v2199 = vld [vmem:[#allocation2 + $0x160] sm:$0xff]
        %v2200 = vld [vmem:[#allocation2 + $0x170] sm:$0xff]
        %v2201 = vld [vmem:[#allocation2 + $0x180] sm:$0xff]
        %v2202 = vld [vmem:[#allocation2 + $0x190] sm:$0xff]
        %v2203 = vld [vmem:[#allocation2 + $0x1a0] sm:$0xff]
        %v2204 = vld [vmem:[#allocation2 + $0x1b0] sm:$0xff]
        %v2205 = vld [vmem:[#allocation2 + $0x1e0] sm:$0xff]
        %v2206 = vld [vmem:[#allocation2 + $0x1f0] sm:$0xff]
        %v2207 = vld [vmem:[#allocation2 + $0x200] sm:$0xff]
        %v2208 = vld [vmem:[#allocation2 + $0x210] sm:$0xff]
        %v2209 = vld [vmem:[#allocation2 + $0x220] sm:$0xff]
        %v2210 = vld [vmem:[#allocation2 + $0x230] sm:$0xff]
        %v2211 = vld [vmem:[#allocation2 + $0x240] sm:$0xff]
        %v2212 = vld [vmem:[#allocation2 + $0x250] sm:$0xff]
        %v2213 = vperm.slane %v2180, 0
        %v2214 = vmul.f32 %v2181, %v2213
        %v2215 = vmul.f32 %v2182, %v2213
        %v2216 = vmul.f32 %v2183, %v2213
        %v2217 = vmul.f32 %v2184, %v2213
        %v2218 = vmul.f32 %v2185, %v2213
        %v2219 = vmul.f32 %v2186, %v2213
        %v2220 = vmul.f32 %v2187, %v2213
        %v2221 = vmul.f32 %v2188, %v2213
        %v2222 = vmul.f32 %v2189, %v2213
        %v2223 = vmul.f32 %v2190, %v2213
        %v2224 = vmul.f32 %v2191, %v2213
        %v2225 = vmul.f32 %v2192, %v2213
        %v2226 = vmul.f32 %v2193, %v2213
        %v2227 = vmul.f32 %v2194, %v2213
        %v2228 = vmul.f32 %v2195, %v2213
        %v2229 = vmul.f32 %v2196, %v2213
        %v2230 = vmul.f32 %v2197, %v2213
        %v2231 = vmul.f32 %v2198, %v2213
        %v2232 = vmul.f32 %v2199, %v2213
        %v2233 = vmul.f32 %v2200, %v2213
        %v2234 = vmul.f32 %v2201, %v2213
        %v2235 = vmul.f32 %v2202, %v2213
        %v2236 = vmul.f32 %v2203, %v2213
        %v2237 = vmul.f32 %v2204, %v2213
        %v2238 = vmul.f32 %v2205, %v2213
        %v2239 = vmul.f32 %v2206, %v2213
        %v2240 = vmul.f32 %v2207, %v2213
        %v2241 = vmul.f32 %v2208, %v2213
        %v2242 = vmul.f32 %v2209, %v2213
        %v2243 = vmul.f32 %v2210, %v2213
        %v2244 = vmul.f32 %v2211, %v2213
        %v2245 = vmul.f32 %v2212, %v2213
        %v2246 = vadd.f32 %v2214, 0.0
        %v2247 = vadd.f32 %v2215, 0.0
        %v2248 = vadd.f32 %v2216, 0.0
        %v2249 = vadd.f32 %v2217, 0.0
        %v2250 = vadd.f32 %v2218, 0.0
        %v2251 = vadd.f32 %v2219, 0.0
        %v2252 = vadd.f32 %v2220, 0.0
        %v2253 = vadd.f32 %v2221, 0.0
        %v2254 = vadd.f32 %v2222, 0.0
        %v2255 = vadd.f32 %v2223, 0.0
        %v2256 = vadd.f32 %v2224, 0.0
        %v2257 = vadd.f32 %v2225, 0.0
        %v2258 = vadd.f32 %v2226, 0.0
        %v2259 = vadd.f32 %v2227, 0.0
        %v2260 = vadd.f32 %v2228, 0.0
        %v2261 = vadd.f32 %v2229, 0.0
        %v2262 = vadd.f32 %v2230, 0.0
        %v2263 = vadd.f32 %v2231, 0.0
        %v2264 = vadd.f32 %v2232, 0.0
        %v2265 = vadd.f32 %v2233, 0.0
        %v2266 = vadd.f32 %v2234, 0.0
        %v2267 = vadd.f32 %v2235, 0.0
        %v2268 = vadd.f32 %v2236, 0.0
        %v2269 = vadd.f32 %v2237, 0.0
        %v2270 = vadd.f32 %v2238, 0.0
        %v2271 = vadd.f32 %v2239, 0.0
        %v2272 = vadd.f32 %v2240, 0.0
        %v2273 = vadd.f32 %v2241, 0.0
        %v2274 = vadd.f32 %v2242, 0.0
        %v2275 = vadd.f32 %v2243, 0.0
        %v2276 = vadd.f32 %v2244, 0.0
        %v2277 = vadd.f32 %v2245, 0.0
        %v2278 = vld [vmem:[%s3 + $0x1] sm:$0x1]
        %v2279 = vld [vmem:[#allocation2 + $0x1] sm:$0xff]
        %v2280 = vld [vmem:[#allocation2 + $0x11] sm:$0xff]
        %v2281 = vld [vmem:[#allocation2 + $0x21] sm:$0xff]
        %v2282 = vld [vmem:[#allocation2 + $0x31] sm:$0xff]
        %v2283 = vld [vmem:[#allocation2 + $0x41] sm:$0xff]
        %v2284 = vld [vmem:[#allocation2 + $0x51] sm:$0xff]
        %v2285 = vld [vmem:[#allocation2 + $0x61] sm:$0xff]
        %v2286 = vld [vmem:[#allocation2 + $0x71] sm:$0xff]
        %v2287 = vld [vmem:[#allocation2 + $0xa1] sm:$0xff]
        %v2288 = vld [vmem:[#allocation2 + $0xb1] sm:$0xff]
        %v2289 = vld [vmem:[#allocation2 + $0xc1] sm:$0xff]
        %v2290 = vld [vmem:[#allocation2 + $0xd1] sm:$0xff]
        %v2291 = vld [vmem:[#allocation2 + $0xe1] sm:$0xff]
        %v2292 = vld [vmem:[#allocation2 + $0xf1] sm:$0xff]
        %v2293 = vld [vmem:[#allocation2 + $0x101] sm:$0xff]
        %v2294 = vld [vmem:[#allocation2 + $0x111] sm:$0xff]
        %v2295 = vld [vmem:[#allocation2 + $0x141] sm:$0xff]
        %v2296 = vld [vmem:[#allocation2 + $0x151] sm:$0xff]
        %v2297 = vld [vmem:[#allocation2 + $0x161] sm:$0xff]
        %v2298 = vld [vmem:[#allocation2 + $0x171] sm:$0xff]
        %v2299 = vld [vmem:[#allocation2 + $0x181] sm:$0xff]
        %v2300 = vld [vmem:[#allocation2 + $0x191] sm:$0xff]
        %v2301 = vld [vmem:[#allocation2 + $0x1a1] sm:$0xff]
        %v2302 = vld [vmem:[#allocation2 + $0x1b1] sm:$0xff]
        %v2303 = vld [vmem:[#allocation2 + $0x1e1] sm:$0xff]
        %v2304 = vld [vmem:[#allocation2 + $0x1f1] sm:$0xff]
        %v2305 = vld [vmem:[#allocation2 + $0x201] sm:$0xff]
        %v2306 = vld [vmem:[#allocation2 + $0x211] sm:$0xff]
        %v2307 = vld [vmem:[#allocation2 + $0x221] sm:$0xff]
        %v2308 = vld [vmem:[#allocation2 + $0x231] sm:$0xff]
        %v2309 = vld [vmem:[#allocation2 + $0x241] sm:$0xff]
        %v2310 = vld [vmem:[#allocation2 + $0x251] sm:$0xff]
        %v2311 = vperm.slane %v2278, 0
        %v2312 = vmul.f32 %v2279, %v2311
        %v2313 = vmul.f32 %v2280, %v2311
        %v2314 = vmul.f32 %v2281, %v2311
        %v2315 = vmul.f32 %v2282, %v2311
        %v2316 = vmul.f32 %v2283, %v2311
        %v2317 = vmul.f32 %v2284, %v2311
        %v2318 = vmul.f32 %v2285, %v2311
        %v2319 = vmul.f32 %v2286, %v2311
        %v2320 = vmul.f32 %v2287, %v2311
        %v2321 = vmul.f32 %v2288, %v2311
        %v2322 = vmul.f32 %v2289, %v2311
        %v2323 = vmul.f32 %v2290, %v2311
        %v2324 = vmul.f32 %v2291, %v2311
        %v2325 = vmul.f32 %v2292, %v2311
        %v2326 = vmul.f32 %v2293, %v2311
        %v2327 = vmul.f32 %v2294, %v2311
        %v2328 = vmul.f32 %v2295, %v2311
        %v2329 = vmul.f32 %v2296, %v2311
        %v2330 = vmul.f32 %v2297, %v2311
        %v2331 = vmul.f32 %v2298, %v2311
        %v2332 = vmul.f32 %v2299, %v2311
        %v2333 = vmul.f32 %v2300, %v2311
        %v2334 = vmul.f32 %v2301, %v2311
        %v2335 = vmul.f32 %v2302, %v2311
        %v2336 = vmul.f32 %v2303, %v2311
        %v2337 = vmul.f32 %v2304, %v2311
        %v2338 = vmul.f32 %v2305, %v2311
        %v2339 = vmul.f32 %v2306, %v2311
        %v2340 = vmul.f32 %v2307, %v2311
        %v2341 = vmul.f32 %v2308, %v2311
        %v2342 = vmul.f32 %v2309, %v2311
        %v2343 = vmul.f32 %v2310, %v2311
        %v2344 = vadd.f32 %v2246, %v2312
        %v2345 = vadd.f32 %v2247, %v2313
        %v2346 = vadd.f32 %v2248, %v2314
        %v2347 = vadd.f32 %v2249, %v2315
        %v2348 = vadd.f32 %v2250, %v2316
        %v2349 = vadd.f32 %v2251, %v2317
        %v2350 = vadd.f32 %v2252, %v2318
        %v2351 = vadd.f32 %v2253, %v2319
        %v2352 = vadd.f32 %v2254, %v2320
        %v2353 = vadd.f32 %v2255, %v2321
        %v2354 = vadd.f32 %v2256, %v2322
        %v2355 = vadd.f32 %v2257, %v2323
        %v2356 = vadd.f32 %v2258, %v2324
        %v2357 = vadd.f32 %v2259, %v2325
        %v2358 = vadd.f32 %v2260, %v2326
        %v2359 = vadd.f32 %v2261, %v2327
        %v2360 = vadd.f32 %v2262, %v2328
        %v2361 = vadd.f32 %v2263, %v2329
        %v2362 = vadd.f32 %v2264, %v2330
        %v2363 = vadd.f32 %v2265, %v2331
        %v2364 = vadd.f32 %v2266, %v2332
        %v2365 = vadd.f32 %v2267, %v2333
        %v2366 = vadd.f32 %v2268, %v2334
        %v2367 = vadd.f32 %v2269, %v2335
        %v2368 = vadd.f32 %v2270, %v2336
        %v2369 = vadd.f32 %v2271, %v2337
        %v2370 = vadd.f32 %v2272, %v2338
        %v2371 = vadd.f32 %v2273, %v2339
        %v2372 = vadd.f32 %v2274, %v2340
        %v2373 = vadd.f32 %v2275, %v2341
        %v2374 = vadd.f32 %v2276, %v2342
        %v2375 = vadd.f32 %v2277, %v2343
        %v2376 = vld [vmem:[%s3 + $0x2] sm:$0x1]
        %v2377 = vld [vmem:[#allocation2 + $0x2] sm:$0xff]
        %v2378 = vld [vmem:[#allocation2 + $0x12] sm:$0xff]
        %v2379 = vld [vmem:[#allocation2 + $0x22] sm:$0xff]
        %v2380 = vld [vmem:[#allocation2 + $0x32] sm:$0xff]
        %v2381 = vld [vmem:[#allocation2 + $0x42] sm:$0xff]
        %v2382 = vld [vmem:[#allocation2 + $0x52] sm:$0xff]
        %v2383 = vld [vmem:[#allocation2 + $0x62] sm:$0xff]
        %v2384 = vld [vmem:[#allocation2 + $0x72] sm:$0xff]
        %v2385 = vld [vmem:[#allocation2 + $0xa2] sm:$0xff]
        %v2386 = vld [vmem:[#allocation2 + $0xb2] sm:$0xff]
        %v2387 = vld [vmem:[#allocation2 + $0xc2] sm:$0xff]
        %v2388 = vld [vmem:[#allocation2 + $0xd2] sm:$0xff]
        %v2389 = vld [vmem:[#allocation2 + $0xe2] sm:$0xff]
        %v2390 = vld [vmem:[#allocation2 + $0xf2] sm:$0xff]
        %v2391 = vld [vmem:[#allocation2 + $0x102] sm:$0xff]
        %v2392 = vld [vmem:[#allocation2 + $0x112] sm:$0xff]
        %v2393 = vld [vmem:[#allocation2 + $0x142] sm:$0xff]
        %v2394 = vld [vmem:[#allocation2 + $0x152] sm:$0xff]
        %v2395 = vld [vmem:[#allocation2 + $0x162] sm:$0xff]
        %v2396 = vld [vmem:[#allocation2 + $0x172] sm:$0xff]
        %v2397 = vld [vmem:[#allocation2 + $0x182] sm:$0xff]
        %v2398 = vld [vmem:[#allocation2 + $0x192] sm:$0xff]
        %v2399 = vld [vmem:[#allocation2 + $0x1a2] sm:$0xff]
        %v2400 = vld [vmem:[#allocation2 + $0x1b2] sm:$0xff]
        %v2401 = vld [vmem:[#allocation2 + $0x1e2] sm:$0xff]
        %v2402 = vld [vmem:[#allocation2 + $0x1f2] sm:$0xff]
        %v2403 = vld [vmem:[#allocation2 + $0x202] sm:$0xff]
        %v2404 = vld [vmem:[#allocation2 + $0x212] sm:$0xff]
        %v2405 = vld [vmem:[#allocation2 + $0x222] sm:$0xff]
        %v2406 = vld [vmem:[#allocation2 + $0x232] sm:$0xff]
        %v2407 = vld [vmem:[#allocation2 + $0x242] sm:$0xff]
        %v2408 = vld [vmem:[#allocation2 + $0x252] sm:$0xff]
        %v2409 = vperm.slane %v2376, 0
        %v2410 = vmul.f32 %v2377, %v2409
        %v2411 = vmul.f32 %v2378, %v2409
        %v2412 = vmul.f32 %v2379, %v2409
        %v2413 = vmul.f32 %v2380, %v2409
        %v2414 = vmul.f32 %v2381, %v2409
        %v2415 = vmul.f32 %v2382, %v2409
        %v2416 = vmul.f32 %v2383, %v2409
        %v2417 = vmul.f32 %v2384, %v2409
        %v2418 = vmul.f32 %v2385, %v2409
        %v2419 = vmul.f32 %v2386, %v2409
        %v2420 = vmul.f32 %v2387, %v2409
        %v2421 = vmul.f32 %v2388, %v2409
        %v2422 = vmul.f32 %v2389, %v2409
        %v2423 = vmul.f32 %v2390, %v2409
        %v2424 = vmul.f32 %v2391, %v2409
        %v2425 = vmul.f32 %v2392, %v2409
        %v2426 = vmul.f32 %v2393, %v2409
        %v2427 = vmul.f32 %v2394, %v2409
        %v2428 = vmul.f32 %v2395, %v2409
        %v2429 = vmul.f32 %v2396, %v2409
        %v2430 = vmul.f32 %v2397, %v2409
        %v2431 = vmul.f32 %v2398, %v2409
        %v2432 = vmul.f32 %v2399, %v2409
        %v2433 = vmul.f32 %v2400, %v2409
        %v2434 = vmul.f32 %v2401, %v2409
        %v2435 = vmul.f32 %v2402, %v2409
        %v2436 = vmul.f32 %v2403, %v2409
        %v2437 = vmul.f32 %v2404, %v2409
        %v2438 = vmul.f32 %v2405, %v2409
        %v2439 = vmul.f32 %v2406, %v2409
        %v2440 = vmul.f32 %v2407, %v2409
        %v2441 = vmul.f32 %v2408, %v2409
        %v2442 = vadd.f32 %v2344, %v2410
        %v2443 = vadd.f32 %v2345, %v2411
        %v2444 = vadd.f32 %v2346, %v2412
        %v2445 = vadd.f32 %v2347, %v2413
        %v2446 = vadd.f32 %v2348, %v2414
        %v2447 = vadd.f32 %v2349, %v2415
        %v2448 = vadd.f32 %v2350, %v2416
        %v2449 = vadd.f32 %v2351, %v2417
        %v2450 = vadd.f32 %v2352, %v2418
        %v2451 = vadd.f32 %v2353, %v2419
        %v2452 = vadd.f32 %v2354, %v2420
        %v2453 = vadd.f32 %v2355, %v2421
        %v2454 = vadd.f32 %v2356, %v2422
        %v2455 = vadd.f32 %v2357, %v2423
        %v2456 = vadd.f32 %v2358, %v2424
        %v2457 = vadd.f32 %v2359, %v2425
        %v2458 = vadd.f32 %v2360, %v2426
        %v2459 = vadd.f32 %v2361, %v2427
        %v2460 = vadd.f32 %v2362, %v2428
        %v2461 = vadd.f32 %v2363, %v2429
        %v2462 = vadd.f32 %v2364, %v2430
        %v2463 = vadd.f32 %v2365, %v2431
        %v2464 = vadd.f32 %v2366, %v2432
        %v2465 = vadd.f32 %v2367, %v2433
        %v2466 = vadd.f32 %v2368, %v2434
        %v2467 = vadd.f32 %v2369, %v2435
        %v2468 = vadd.f32 %v2370, %v2436
        %v2469 = vadd.f32 %v2371, %v2437
        %v2470 = vadd.f32 %v2372, %v2438
        %v2471 = vadd.f32 %v2373, %v2439
        %v2472 = vadd.f32 %v2374, %v2440
        %v2473 = vadd.f32 %v2375, %v2441
        %v2474 = vld [vmem:[%s3 + $0x3] sm:$0x1]
        %v2475 = vld [vmem:[%s2147] sm:$0xff]
        %v2476 = vld [vmem:[%s2147 + $0x10] sm:$0xff]
        %v2477 = vld [vmem:[%s2147 + $0x20] sm:$0xff]
        %v2478 = vld [vmem:[%s2147 + $0x30] sm:$0xff]
        %v2479 = vld [vmem:[%s2147 + $0x40] sm:$0xff]
        %v2480 = vld [vmem:[%s2147 + $0x50] sm:$0xff]
        %v2481 = vld [vmem:[%s2147 + $0x60] sm:$0xff]
        %v2482 = vld [vmem:[%s2147 + $0x70] sm:$0xff]
        %v2483 = vld [vmem:[%s2147 + $0xa0] sm:$0xff]
        %v2484 = vld [vmem:[%s2147 + $0xb0] sm:$0xff]
        %v2485 = vld [vmem:[%s2147 + $0xc0] sm:$0xff]
        %v2486 = vld [vmem:[%s2147 + $0xd0] sm:$0xff]
        %v2487 = vld [vmem:[%s2147 + $0xe0] sm:$0xff]
        %v2488 = vld [vmem:[%s2147 + $0xf0] sm:$0xff]
        %v2489 = vld [vmem:[%s2147 + $0x100] sm:$0xff]
        %v2490 = vld [vmem:[%s2147 + $0x110] sm:$0xff]
        %v2491 = vld [vmem:[%s2147 + $0x140] sm:$0xff]
        %v2492 = vld [vmem:[%s2147 + $0x150] sm:$0xff]
        %v2493 = vld [vmem:[%s2147 + $0x160] sm:$0xff]
        %v2494 = vld [vmem:[%s2147 + $0x170] sm:$0xff]
        %v2495 = vld [vmem:[%s2147 + $0x180] sm:$0xff]
        %v2496 = vld [vmem:[%s2147 + $0x190] sm:$0xff]
        %v2497 = vld [vmem:[%s2147 + $0x1a0] sm:$0xff]
        %v2498 = vld [vmem:[%s2147 + $0x1b0] sm:$0xff]
        %v2499 = vld [vmem:[%s2147 + $0x1e0] sm:$0xff]
        %v2500 = vld [vmem:[%s2147 + $0x1f0] sm:$0xff]
        %v2501 = vld [vmem:[%s2147 + $0x200] sm:$0xff]
        %v2502 = vld [vmem:[%s2147 + $0x210] sm:$0xff]
        %v2503 = vld [vmem:[%s2147 + $0x220] sm:$0xff]
        %v2504 = vld [vmem:[%s2147 + $0x230] sm:$0xff]
        %v2505 = vld [vmem:[%s2147 + $0x240] sm:$0xff]
        %v2506 = vld [vmem:[%s2147 + $0x250] sm:$0xff]
        %v2507 = vperm.slane %v2474, 0
        %v2508 = vmul.f32 %v2475, %v2507
        %v2509 = vmul.f32 %v2476, %v2507
        %v2510 = vmul.f32 %v2477, %v2507
        %v2511 = vmul.f32 %v2478, %v2507
        %v2512 = vmul.f32 %v2479, %v2507
        %v2513 = vmul.f32 %v2480, %v2507
        %v2514 = vmul.f32 %v2481, %v2507
        %v2515 = vmul.f32 %v2482, %v2507
        %v2516 = vmul.f32 %v2483, %v2507
        %v2517 = vmul.f32 %v2484, %v2507
        %v2518 = vmul.f32 %v2485, %v2507
        %v2519 = vmul.f32 %v2486, %v2507
        %v2520 = vmul.f32 %v2487, %v2507
        %v2521 = vmul.f32 %v2488, %v2507
        %v2522 = vmul.f32 %v2489, %v2507
        %v2523 = vmul.f32 %v2490, %v2507
        %v2524 = vmul.f32 %v2491, %v2507
        %v2525 = vmul.f32 %v2492, %v2507
        %v2526 = vmul.f32 %v2493, %v2507
        %v2527 = vmul.f32 %v2494, %v2507
        %v2528 = vmul.f32 %v2495, %v2507
        %v2529 = vmul.f32 %v2496, %v2507
        %v2530 = vmul.f32 %v2497, %v2507
        %v2531 = vmul.f32 %v2498, %v2507
        %v2532 = vmul.f32 %v2499, %v2507
        %v2533 = vmul.f32 %v2500, %v2507
        %v2534 = vmul.f32 %v2501, %v2507
        %v2535 = vmul.f32 %v2502, %v2507
        %v2536 = vmul.f32 %v2503, %v2507
        %v2537 = vmul.f32 %v2504, %v2507
        %v2538 = vmul.f32 %v2505, %v2507
        %v2539 = vmul.f32 %v2506, %v2507
        %v2540 = vadd.f32 %v2442, %v2508
        %v2541 = vadd.f32 %v2443, %v2509
        %v2542 = vadd.f32 %v2444, %v2510
        %v2543 = vadd.f32 %v2445, %v2511
        %v2544 = vadd.f32 %v2446, %v2512
        %v2545 = vadd.f32 %v2447, %v2513
        %v2546 = vadd.f32 %v2448, %v2514
        %v2547 = vadd.f32 %v2449, %v2515
        %v2548 = vadd.f32 %v2450, %v2516
        %v2549 = vadd.f32 %v2451, %v2517
        %v2550 = vadd.f32 %v2452, %v2518
        %v2551 = vadd.f32 %v2453, %v2519
        %v2552 = vadd.f32 %v2454, %v2520
        %v2553 = vadd.f32 %v2455, %v2521
        %v2554 = vadd.f32 %v2456, %v2522
        %v2555 = vadd.f32 %v2457, %v2523
        %v2556 = vadd.f32 %v2458, %v2524
        %v2557 = vadd.f32 %v2459, %v2525
        %v2558 = vadd.f32 %v2460, %v2526
        %v2559 = vadd.f32 %v2461, %v2527
        %v2560 = vadd.f32 %v2462, %v2528
        %v2561 = vadd.f32 %v2463, %v2529
        %v2562 = vadd.f32 %v2464, %v2530
        %v2563 = vadd.f32 %v2465, %v2531
        %v2564 = vadd.f32 %v2466, %v2532
        %v2565 = vadd.f32 %v2467, %v2533
        %v2566 = vadd.f32 %v2468, %v2534
        %v2567 = vadd.f32 %v2469, %v2535
        %v2568 = vadd.f32 %v2470, %v2536
        %v2569 = vadd.f32 %v2471, %v2537
        %v2570 = vadd.f32 %v2472, %v2538
        %v2571 = vadd.f32 %v2473, %v2539
        %v2572 = vld [vmem:[%s3 + $0x4] sm:$0x1]
        %v2573 = vld [vmem:[%s2147 + $0x1] sm:$0xff]
        %v2574 = vld [vmem:[%s2147 + $0x11] sm:$0xff]
        %v2575 = vld [vmem:[%s2147 + $0x21] sm:$0xff]
        %v2576 = vld [vmem:[%s2147 + $0x31] sm:$0xff]
        %v2577 = vld [vmem:[%s2147 + $0x41] sm:$0xff]
        %v2578 = vld [vmem:[%s2147 + $0x51] sm:$0xff]
        %v2579 = vld [vmem:[%s2147 + $0x61] sm:$0xff]
        %v2580 = vld [vmem:[%s2147 + $0x71] sm:$0xff]
        %v2581 = vld [vmem:[%s2147 + $0xa1] sm:$0xff]
        %v2582 = vld [vmem:[%s2147 + $0xb1] sm:$0xff]
        %v2583 = vld [vmem:[%s2147 + $0xc1] sm:$0xff]
        %v2584 = vld [vmem:[%s2147 + $0xd1] sm:$0xff]
        %v2585 = vld [vmem:[%s2147 + $0xe1] sm:$0xff]
        %v2586 = vld [vmem:[%s2147 + $0xf1] sm:$0xff]
        %v2587 = vld [vmem:[%s2147 + $0x101] sm:$0xff]
        %v2588 = vld [vmem:[%s2147 + $0x111] sm:$0xff]
        %v2589 = vld [vmem:[%s2147 + $0x141] sm:$0xff]
        %v2590 = vld [vmem:[%s2147 + $0x151] sm:$0xff]
        %v2591 = vld [vmem:[%s2147 + $0x161] sm:$0xff]
        %v2592 = vld [vmem:[%s2147 + $0x171] sm:$0xff]
        %v2593 = vld [vmem:[%s2147 + $0x181] sm:$0xff]
        %v2594 = vld [vmem:[%s2147 + $0x191] sm:$0xff]
        %v2595 = vld [vmem:[%s2147 + $0x1a1] sm:$0xff]
        %v2596 = vld [vmem:[%s2147 + $0x1b1] sm:$0xff]
        %v2597 = vld [vmem:[%s2147 + $0x1e1] sm:$0xff]
        %v2598 = vld [vmem:[%s2147 + $0x1f1] sm:$0xff]
        %v2599 = vld [vmem:[%s2147 + $0x201] sm:$0xff]
        %v2600 = vld [vmem:[%s2147 + $0x211] sm:$0xff]
        %v2601 = vld [vmem:[%s2147 + $0x221] sm:$0xff]
        %v2602 = vld [vmem:[%s2147 + $0x231] sm:$0xff]
        %v2603 = vld [vmem:[%s2147 + $0x241] sm:$0xff]
        %v2604 = vld [vmem:[%s2147 + $0x251] sm:$0xff]
        %v2605 = vperm.slane %v2572, 0
        %v2606 = vmul.f32 %v2573, %v2605
        %v2607 = vmul.f32 %v2574, %v2605
        %v2608 = vmul.f32 %v2575, %v2605
        %v2609 = vmul.f32 %v2576, %v2605
        %v2610 = vmul.f32 %v2577, %v2605
        %v2611 = vmul.f32 %v2578, %v2605
        %v2612 = vmul.f32 %v2579, %v2605
        %v2613 = vmul.f32 %v2580, %v2605
        %v2614 = vmul.f32 %v2581, %v2605
        %v2615 = vmul.f32 %v2582, %v2605
        %v2616 = vmul.f32 %v2583, %v2605
        %v2617 = vmul.f32 %v2584, %v2605
        %v2618 = vmul.f32 %v2585, %v2605
        %v2619 = vmul.f32 %v2586, %v2605
        %v2620 = vmul.f32 %v2587, %v2605
        %v2621 = vmul.f32 %v2588, %v2605
        %v2622 = vmul.f32 %v2589, %v2605
        %v2623 = vmul.f32 %v2590, %v2605
        %v2624 = vmul.f32 %v2591, %v2605
        %v2625 = vmul.f32 %v2592, %v2605
        %v2626 = vmul.f32 %v2593, %v2605
        %v2627 = vmul.f32 %v2594, %v2605
        %v2628 = vmul.f32 %v2595, %v2605
        %v2629 = vmul.f32 %v2596, %v2605
        %v2630 = vmul.f32 %v2597, %v2605
        %v2631 = vmul.f32 %v2598, %v2605
        %v2632 = vmul.f32 %v2599, %v2605
        %v2633 = vmul.f32 %v2600, %v2605
        %v2634 = vmul.f32 %v2601, %v2605
        %v2635 = vmul.f32 %v2602, %v2605
        %v2636 = vmul.f32 %v2603, %v2605
        %v2637 = vmul.f32 %v2604, %v2605
        %v2638 = vadd.f32 %v2540, %v2606
        %v2639 = vadd.f32 %v2541, %v2607
        %v2640 = vadd.f32 %v2542, %v2608
        %v2641 = vadd.f32 %v2543, %v2609
        %v2642 = vadd.f32 %v2544, %v2610
        %v2643 = vadd.f32 %v2545, %v2611
        %v2644 = vadd.f32 %v2546, %v2612
        %v2645 = vadd.f32 %v2547, %v2613
        %v2646 = vadd.f32 %v2548, %v2614
        %v2647 = vadd.f32 %v2549, %v2615
        %v2648 = vadd.f32 %v2550, %v2616
        %v2649 = vadd.f32 %v2551, %v2617
        %v2650 = vadd.f32 %v2552, %v2618
        %v2651 = vadd.f32 %v2553, %v2619
        %v2652 = vadd.f32 %v2554, %v2620
        %v2653 = vadd.f32 %v2555, %v2621
        %v2654 = vadd.f32 %v2556, %v2622
        %v2655 = vadd.f32 %v2557, %v2623
        %v2656 = vadd.f32 %v2558, %v2624
        %v2657 = vadd.f32 %v2559, %v2625
        %v2658 = vadd.f32 %v2560, %v2626
        %v2659 = vadd.f32 %v2561, %v2627
        %v2660 = vadd.f32 %v2562, %v2628
        %v2661 = vadd.f32 %v2563, %v2629
        %v2662 = vadd.f32 %v2564, %v2630
        %v2663 = vadd.f32 %v2565, %v2631
        %v2664 = vadd.f32 %v2566, %v2632
        %v2665 = vadd.f32 %v2567, %v2633
        %v2666 = vadd.f32 %v2568, %v2634
        %v2667 = vadd.f32 %v2569, %v2635
        %v2668 = vadd.f32 %v2570, %v2636
        %v2669 = vadd.f32 %v2571, %v2637
        %v2670 = vld [vmem:[%s3 + $0x5] sm:$0x1]
        %v2671 = vld [vmem:[%s2147 + $0x2] sm:$0xff]
        %v2672 = vld [vmem:[%s2147 + $0x12] sm:$0xff]
        %v2673 = vld [vmem:[%s2147 + $0x22] sm:$0xff]
        %v2674 = vld [vmem:[%s2147 + $0x32] sm:$0xff]
        %v2675 = vld [vmem:[%s2147 + $0x42] sm:$0xff]
        %v2676 = vld [vmem:[%s2147 + $0x52] sm:$0xff]
        %v2677 = vld [vmem:[%s2147 + $0x62] sm:$0xff]
        %v2678 = vld [vmem:[%s2147 + $0x72] sm:$0xff]
        %v2679 = vld [vmem:[%s2147 + $0xa2] sm:$0xff]
        %v2680 = vld [vmem:[%s2147 + $0xb2] sm:$0xff]
        %v2681 = vld [vmem:[%s2147 + $0xc2] sm:$0xff]
        %v2682 = vld [vmem:[%s2147 + $0xd2] sm:$0xff]
        %v2683 = vld [vmem:[%s2147 + $0xe2] sm:$0xff]
        %v2684 = vld [vmem:[%s2147 + $0xf2] sm:$0xff]
        %v2685 = vld [vmem:[%s2147 + $0x102] sm:$0xff]
        %v2686 = vld [vmem:[%s2147 + $0x112] sm:$0xff]
        %v2687 = vld [vmem:[%s2147 + $0x142] sm:$0xff]
        %v2688 = vld [vmem:[%s2147 + $0x152] sm:$0xff]
        %v2689 = vld [vmem:[%s2147 + $0x162] sm:$0xff]
        %v2690 = vld [vmem:[%s2147 + $0x172] sm:$0xff]
        %v2691 = vld [vmem:[%s2147 + $0x182] sm:$0xff]
        %v2692 = vld [vmem:[%s2147 + $0x192] sm:$0xff]
        %v2693 = vld [vmem:[%s2147 + $0x1a2] sm:$0xff]
        %v2694 = vld [vmem:[%s2147 + $0x1b2] sm:$0xff]
        %v2695 = vld [vmem:[%s2147 + $0x1e2] sm:$0xff]
        %v2696 = vld [vmem:[%s2147 + $0x1f2] sm:$0xff]
        %v2697 = vld [vmem:[%s2147 + $0x202] sm:$0xff]
        %v2698 = vld [vmem:[%s2147 + $0x212] sm:$0xff]
        %v2699 = vld [vmem:[%s2147 + $0x222] sm:$0xff]
        %v2700 = vld [vmem:[%s2147 + $0x232] sm:$0xff]
        %v2701 = vld [vmem:[%s2147 + $0x242] sm:$0xff]
        %v2702 = vld [vmem:[%s2147 + $0x252] sm:$0xff]
        %v2703 = vperm.slane %v2670, 0
        %v2704 = vmul.f32 %v2671, %v2703
        %v2705 = vmul.f32 %v2672, %v2703
        %v2706 = vmul.f32 %v2673, %v2703
        %v2707 = vmul.f32 %v2674, %v2703
        %v2708 = vmul.f32 %v2675, %v2703
        %v2709 = vmul.f32 %v2676, %v2703
        %v2710 = vmul.f32 %v2677, %v2703
        %v2711 = vmul.f32 %v2678, %v2703
        %v2712 = vmul.f32 %v2679, %v2703
        %v2713 = vmul.f32 %v2680, %v2703
        %v2714 = vmul.f32 %v2681, %v2703
        %v2715 = vmul.f32 %v2682, %v2703
        %v2716 = vmul.f32 %v2683, %v2703
        %v2717 = vmul.f32 %v2684, %v2703
        %v2718 = vmul.f32 %v2685, %v2703
        %v2719 = vmul.f32 %v2686, %v2703
        %v2720 = vmul.f32 %v2687, %v2703
        %v2721 = vmul.f32 %v2688, %v2703
        %v2722 = vmul.f32 %v2689, %v2703
        %v2723 = vmul.f32 %v2690, %v2703
        %v2724 = vmul.f32 %v2691, %v2703
        %v2725 = vmul.f32 %v2692, %v2703
        %v2726 = vmul.f32 %v2693, %v2703
        %v2727 = vmul.f32 %v2694, %v2703
        %v2728 = vmul.f32 %v2695, %v2703
        %v2729 = vmul.f32 %v2696, %v2703
        %v2730 = vmul.f32 %v2697, %v2703
        %v2731 = vmul.f32 %v2698, %v2703
        %v2732 = vmul.f32 %v2699, %v2703
        %v2733 = vmul.f32 %v2700, %v2703
        %v2734 = vmul.f32 %v2701, %v2703
        %v2735 = vmul.f32 %v2702, %v2703
        %v2736 = vadd.f32 %v2638, %v2704
        %v2737 = vadd.f32 %v2639, %v2705
        %v2738 = vadd.f32 %v2640, %v2706
        %v2739 = vadd.f32 %v2641, %v2707
        %v2740 = vadd.f32 %v2642, %v2708
        %v2741 = vadd.f32 %v2643, %v2709
        %v2742 = vadd.f32 %v2644, %v2710
        %v2743 = vadd.f32 %v2645, %v2711
        %v2744 = vadd.f32 %v2646, %v2712
        %v2745 = vadd.f32 %v2647, %v2713
        %v2746 = vadd.f32 %v2648, %v2714
        %v2747 = vadd.f32 %v2649, %v2715
        %v2748 = vadd.f32 %v2650, %v2716
        %v2749 = vadd.f32 %v2651, %v2717
        %v2750 = vadd.f32 %v2652, %v2718
        %v2751 = vadd.f32 %v2653, %v2719
        %v2752 = vadd.f32 %v2654, %v2720
        %v2753 = vadd.f32 %v2655, %v2721
        %v2754 = vadd.f32 %v2656, %v2722
        %v2755 = vadd.f32 %v2657, %v2723
        %v2756 = vadd.f32 %v2658, %v2724
        %v2757 = vadd.f32 %v2659, %v2725
        %v2758 = vadd.f32 %v2660, %v2726
        %v2759 = vadd.f32 %v2661, %v2727
        %v2760 = vadd.f32 %v2662, %v2728
        %v2761 = vadd.f32 %v2663, %v2729
        %v2762 = vadd.f32 %v2664, %v2730
        %v2763 = vadd.f32 %v2665, %v2731
        %v2764 = vadd.f32 %v2666, %v2732
        %v2765 = vadd.f32 %v2667, %v2733
        %v2766 = vadd.f32 %v2668, %v2734
        %v2767 = vadd.f32 %v2669, %v2735
        %v2768 = vld [vmem:[%s3 + $0x6] sm:$0x1]
        %s2769 = scalar_lea.vmem [#allocation2], 32
        %v2770 = vld [vmem:[%s2769] sm:$0xff]
        %v2771 = vld [vmem:[%s2769 + $0x10] sm:$0xff]
        %v2772 = vld [vmem:[%s2769 + $0x20] sm:$0xff]
        %v2773 = vld [vmem:[%s2769 + $0x30] sm:$0xff]
        %v2774 = vld [vmem:[%s2769 + $0x40] sm:$0xff]
        %v2775 = vld [vmem:[%s2769 + $0x50] sm:$0xff]
        %v2776 = vld [vmem:[%s2769 + $0x60] sm:$0xff]
        %v2777 = vld [vmem:[%s2769 + $0x70] sm:$0xff]
        %v2778 = vld [vmem:[%s2769 + $0xa0] sm:$0xff]
        %v2779 = vld [vmem:[%s2769 + $0xb0] sm:$0xff]
        %v2780 = vld [vmem:[%s2769 + $0xc0] sm:$0xff]
        %v2781 = vld [vmem:[%s2769 + $0xd0] sm:$0xff]
        %v2782 = vld [vmem:[%s2769 + $0xe0] sm:$0xff]
        %v2783 = vld [vmem:[%s2769 + $0xf0] sm:$0xff]
        %v2784 = vld [vmem:[%s2769 + $0x100] sm:$0xff]
        %v2785 = vld [vmem:[%s2769 + $0x110] sm:$0xff]
        %v2786 = vld [vmem:[%s2769 + $0x140] sm:$0xff]
        %v2787 = vld [vmem:[%s2769 + $0x150] sm:$0xff]
        %v2788 = vld [vmem:[%s2769 + $0x160] sm:$0xff]
        %v2789 = vld [vmem:[%s2769 + $0x170] sm:$0xff]
        %v2790 = vld [vmem:[%s2769 + $0x180] sm:$0xff]
        %v2791 = vld [vmem:[%s2769 + $0x190] sm:$0xff]
        %v2792 = vld [vmem:[%s2769 + $0x1a0] sm:$0xff]
        %v2793 = vld [vmem:[%s2769 + $0x1b0] sm:$0xff]
        %v2794 = vld [vmem:[%s2769 + $0x1e0] sm:$0xff]
        %v2795 = vld [vmem:[%s2769 + $0x1f0] sm:$0xff]
        %v2796 = vld [vmem:[%s2769 + $0x200] sm:$0xff]
        %v2797 = vld [vmem:[%s2769 + $0x210] sm:$0xff]
        %v2798 = vld [vmem:[%s2769 + $0x220] sm:$0xff]
        %v2799 = vld [vmem:[%s2769 + $0x230] sm:$0xff]
        %v2800 = vld [vmem:[%s2769 + $0x240] sm:$0xff]
        %v2801 = vld [vmem:[%s2769 + $0x250] sm:$0xff]
        %v2802 = vperm.slane %v2768, 0
        %v2803 = vmul.f32 %v2770, %v2802
        %v2804 = vmul.f32 %v2771, %v2802
        %v2805 = vmul.f32 %v2772, %v2802
        %v2806 = vmul.f32 %v2773, %v2802
        %v2807 = vmul.f32 %v2774, %v2802
        %v2808 = vmul.f32 %v2775, %v2802
        %v2809 = vmul.f32 %v2776, %v2802
        %v2810 = vmul.f32 %v2777, %v2802
        %v2811 = vmul.f32 %v2778, %v2802
        %v2812 = vmul.f32 %v2779, %v2802
        %v2813 = vmul.f32 %v2780, %v2802
        %v2814 = vmul.f32 %v2781, %v2802
        %v2815 = vmul.f32 %v2782, %v2802
        %v2816 = vmul.f32 %v2783, %v2802
        %v2817 = vmul.f32 %v2784, %v2802
        %v2818 = vmul.f32 %v2785, %v2802
        %v2819 = vmul.f32 %v2786, %v2802
        %v2820 = vmul.f32 %v2787, %v2802
        %v2821 = vmul.f32 %v2788, %v2802
        %v2822 = vmul.f32 %v2789, %v2802
        %v2823 = vmul.f32 %v2790, %v2802
        %v2824 = vmul.f32 %v2791, %v2802
        %v2825 = vmul.f32 %v2792, %v2802
        %v2826 = vmul.f32 %v2793, %v2802
        %v2827 = vmul.f32 %v2794, %v2802
        %v2828 = vmul.f32 %v2795, %v2802
        %v2829 = vmul.f32 %v2796, %v2802
        %v2830 = vmul.f32 %v2797, %v2802
        %v2831 = vmul.f32 %v2798, %v2802
        %v2832 = vmul.f32 %v2799, %v2802
        %v2833 = vmul.f32 %v2800, %v2802
        %v2834 = vmul.f32 %v2801, %v2802
        %v2835 = vadd.f32 %v2736, %v2803
        %v2836 = vadd.f32 %v2737, %v2804
        %v2837 = vadd.f32 %v2738, %v2805
        %v2838 = vadd.f32 %v2739, %v2806
        %v2839 = vadd.f32 %v2740, %v2807
        %v2840 = vadd.f32 %v2741, %v2808
        %v2841 = vadd.f32 %v2742, %v2809
        %v2842 = vadd.f32 %v2743, %v2810
        %v2843 = vadd.f32 %v2744, %v2811
        %v2844 = vadd.f32 %v2745, %v2812
        %v2845 = vadd.f32 %v2746, %v2813
        %v2846 = vadd.f32 %v2747, %v2814
        %v2847 = vadd.f32 %v2748, %v2815
        %v2848 = vadd.f32 %v2749, %v2816
        %v2849 = vadd.f32 %v2750, %v2817
        %v2850 = vadd.f32 %v2751, %v2818
        %v2851 = vadd.f32 %v2752, %v2819
        %v2852 = vadd.f32 %v2753, %v2820
        %v2853 = vadd.f32 %v2754, %v2821
        %v2854 = vadd.f32 %v2755, %v2822
        %v2855 = vadd.f32 %v2756, %v2823
        %v2856 = vadd.f32 %v2757, %v2824
        %v2857 = vadd.f32 %v2758, %v2825
        %v2858 = vadd.f32 %v2759, %v2826
        %v2859 = vadd.f32 %v2760, %v2827
        %v2860 = vadd.f32 %v2761, %v2828
        %v2861 = vadd.f32 %v2762, %v2829
        %v2862 = vadd.f32 %v2763, %v2830
        %v2863 = vadd.f32 %v2764, %v2831
        %v2864 = vadd.f32 %v2765, %v2832
        %v2865 = vadd.f32 %v2766, %v2833
        %v2866 = vadd.f32 %v2767, %v2834
        %v2867 = vld [vmem:[%s3 + $0x7] sm:$0x1]
        %v2868 = vld [vmem:[%s2769 + $0x1] sm:$0xff]
        %v2869 = vld [vmem:[%s2769 + $0x11] sm:$0xff]
        %v2870 = vld [vmem:[%s2769 + $0x21] sm:$0xff]
        %v2871 = vld [vmem:[%s2769 + $0x31] sm:$0xff]
        %v2872 = vld [vmem:[%s2769 + $0x41] sm:$0xff]
        %v2873 = vld [vmem:[%s2769 + $0x51] sm:$0xff]
        %v2874 = vld [vmem:[%s2769 + $0x61] sm:$0xff]
        %v2875 = vld [vmem:[%s2769 + $0x71] sm:$0xff]
        %v2876 = vld [vmem:[%s2769 + $0xa1] sm:$0xff]
        %v2877 = vld [vmem:[%s2769 + $0xb1] sm:$0xff]
        %v2878 = vld [vmem:[%s2769 + $0xc1] sm:$0xff]
        %v2879 = vld [vmem:[%s2769 + $0xd1] sm:$0xff]
        %v2880 = vld [vmem:[%s2769 + $0xe1] sm:$0xff]
        %v2881 = vld [vmem:[%s2769 + $0xf1] sm:$0xff]
        %v2882 = vld [vmem:[%s2769 + $0x101] sm:$0xff]
        %v2883 = vld [vmem:[%s2769 + $0x111] sm:$0xff]
        %v2884 = vld [vmem:[%s2769 + $0x141] sm:$0xff]
        %v2885 = vld [vmem:[%s2769 + $0x151] sm:$0xff]
        %v2886 = vld [vmem:[%s2769 + $0x161] sm:$0xff]
        %v2887 = vld [vmem:[%s2769 + $0x171] sm:$0xff]
        %v2888 = vld [vmem:[%s2769 + $0x181] sm:$0xff]
        %v2889 = vld [vmem:[%s2769 + $0x191] sm:$0xff]
        %v2890 = vld [vmem:[%s2769 + $0x1a1] sm:$0xff]
        %v2891 = vld [vmem:[%s2769 + $0x1b1] sm:$0xff]
        %v2892 = vld [vmem:[%s2769 + $0x1e1] sm:$0xff]
        %v2893 = vld [vmem:[%s2769 + $0x1f1] sm:$0xff]
        %v2894 = vld [vmem:[%s2769 + $0x201] sm:$0xff]
        %v2895 = vld [vmem:[%s2769 + $0x211] sm:$0xff]
        %v2896 = vld [vmem:[%s2769 + $0x221] sm:$0xff]
        %v2897 = vld [vmem:[%s2769 + $0x231] sm:$0xff]
        %v2898 = vld [vmem:[%s2769 + $0x241] sm:$0xff]
        %v2899 = vld [vmem:[%s2769 + $0x251] sm:$0xff]
        %v2900 = vperm.slane %v2867, 0
        %v2901 = vmul.f32 %v2868, %v2900
        %v2902 = vmul.f32 %v2869, %v2900
        %v2903 = vmul.f32 %v2870, %v2900
        %v2904 = vmul.f32 %v2871, %v2900
        %v2905 = vmul.f32 %v2872, %v2900
        %v2906 = vmul.f32 %v2873, %v2900
        %v2907 = vmul.f32 %v2874, %v2900
        %v2908 = vmul.f32 %v2875, %v2900
        %v2909 = vmul.f32 %v2876, %v2900
        %v2910 = vmul.f32 %v2877, %v2900
        %v2911 = vmul.f32 %v2878, %v2900
        %v2912 = vmul.f32 %v2879, %v2900
        %v2913 = vmul.f32 %v2880, %v2900
        %v2914 = vmul.f32 %v2881, %v2900
        %v2915 = vmul.f32 %v2882, %v2900
        %v2916 = vmul.f32 %v2883, %v2900
        %v2917 = vmul.f32 %v2884, %v2900
        %v2918 = vmul.f32 %v2885, %v2900
        %v2919 = vmul.f32 %v2886, %v2900
        %v2920 = vmul.f32 %v2887, %v2900
        %v2921 = vmul.f32 %v2888, %v2900
        %v2922 = vmul.f32 %v2889, %v2900
        %v2923 = vmul.f32 %v2890, %v2900
        %v2924 = vmul.f32 %v2891, %v2900
        %v2925 = vmul.f32 %v2892, %v2900
        %v2926 = vmul.f32 %v2893, %v2900
        %v2927 = vmul.f32 %v2894, %v2900
        %v2928 = vmul.f32 %v2895, %v2900
        %v2929 = vmul.f32 %v2896, %v2900
        %v2930 = vmul.f32 %v2897, %v2900
        %v2931 = vmul.f32 %v2898, %v2900
        %v2932 = vmul.f32 %v2899, %v2900
        %v2933 = vadd.f32 %v2835, %v2901
        %v2934 = vadd.f32 %v2836, %v2902
        %v2935 = vadd.f32 %v2837, %v2903
        %v2936 = vadd.f32 %v2838, %v2904
        %v2937 = vadd.f32 %v2839, %v2905
        %v2938 = vadd.f32 %v2840, %v2906
        %v2939 = vadd.f32 %v2841, %v2907
        %v2940 = vadd.f32 %v2842, %v2908
        %v2941 = vadd.f32 %v2843, %v2909
        %v2942 = vadd.f32 %v2844, %v2910
        %v2943 = vadd.f32 %v2845, %v2911
        %v2944 = vadd.f32 %v2846, %v2912
        %v2945 = vadd.f32 %v2847, %v2913
        %v2946 = vadd.f32 %v2848, %v2914
        %v2947 = vadd.f32 %v2849, %v2915
        %v2948 = vadd.f32 %v2850, %v2916
        %v2949 = vadd.f32 %v2851, %v2917
        %v2950 = vadd.f32 %v2852, %v2918
        %v2951 = vadd.f32 %v2853, %v2919
        %v2952 = vadd.f32 %v2854, %v2920
        %v2953 = vadd.f32 %v2855, %v2921
        %v2954 = vadd.f32 %v2856, %v2922
        %v2955 = vadd.f32 %v2857, %v2923
        %v2956 = vadd.f32 %v2858, %v2924
        %v2957 = vadd.f32 %v2859, %v2925
        %v2958 = vadd.f32 %v2860, %v2926
        %v2959 = vadd.f32 %v2861, %v2927
        %v2960 = vadd.f32 %v2862, %v2928
        %v2961 = vadd.f32 %v2863, %v2929
        %v2962 = vadd.f32 %v2864, %v2930
        %v2963 = vadd.f32 %v2865, %v2931
        %v2964 = vadd.f32 %v2866, %v2932
        %v2965 = vld [vmem:[%s3 + $0x8] sm:$0x1]
        %v2966 = vld [vmem:[%s2769 + $0x2] sm:$0xff]
        %v2967 = vld [vmem:[%s2769 + $0x12] sm:$0xff]
        %v2968 = vld [vmem:[%s2769 + $0x22] sm:$0xff]
        %v2969 = vld [vmem:[%s2769 + $0x32] sm:$0xff]
        %v2970 = vld [vmem:[%s2769 + $0x42] sm:$0xff]
        %v2971 = vld [vmem:[%s2769 + $0x52] sm:$0xff]
        %v2972 = vld [vmem:[%s2769 + $0x62] sm:$0xff]
        %v2973 = vld [vmem:[%s2769 + $0x72] sm:$0xff]
        %v2974 = vld [vmem:[%s2769 + $0xa2] sm:$0xff]
        %v2975 = vld [vmem:[%s2769 + $0xb2] sm:$0xff]
        %v2976 = vld [vmem:[%s2769 + $0xc2] sm:$0xff]
        %v2977 = vld [vmem:[%s2769 + $0xd2] sm:$0xff]
        %v2978 = vld [vmem:[%s2769 + $0xe2] sm:$0xff]
        %v2979 = vld [vmem:[%s2769 + $0xf2] sm:$0xff]
        %v2980 = vld [vmem:[%s2769 + $0x102] sm:$0xff]
        %v2981 = vld [vmem:[%s2769 + $0x112] sm:$0xff]
        %v2982 = vld [vmem:[%s2769 + $0x142] sm:$0xff]
        %v2983 = vld [vmem:[%s2769 + $0x152] sm:$0xff]
        %v2984 = vld [vmem:[%s2769 + $0x162] sm:$0xff]
        %v2985 = vld [vmem:[%s2769 + $0x172] sm:$0xff]
        %v2986 = vld [vmem:[%s2769 + $0x182] sm:$0xff]
        %v2987 = vld [vmem:[%s2769 + $0x192] sm:$0xff]
        %v2988 = vld [vmem:[%s2769 + $0x1a2] sm:$0xff]
        %v2989 = vld [vmem:[%s2769 + $0x1b2] sm:$0xff]
        %v2990 = vld [vmem:[%s2769 + $0x1e2] sm:$0xff]
        %v2991 = vld [vmem:[%s2769 + $0x1f2] sm:$0xff]
        %v2992 = vld [vmem:[%s2769 + $0x202] sm:$0xff]
        %v2993 = vld [vmem:[%s2769 + $0x212] sm:$0xff]
        %v2994 = vld [vmem:[%s2769 + $0x222] sm:$0xff]
        %v2995 = vld [vmem:[%s2769 + $0x232] sm:$0xff]
        %v2996 = vld [vmem:[%s2769 + $0x242] sm:$0xff]
        %v2997 = vld [vmem:[%s2769 + $0x252] sm:$0xff]
        %v2998 = vperm.slane %v2965, 0
        %v2999 = vmul.f32 %v2966, %v2998
        %v3000 = vmul.f32 %v2967, %v2998
        %v3001 = vmul.f32 %v2968, %v2998
        %v3002 = vmul.f32 %v2969, %v2998
        %v3003 = vmul.f32 %v2970, %v2998
        %v3004 = vmul.f32 %v2971, %v2998
        %v3005 = vmul.f32 %v2972, %v2998
        %v3006 = vmul.f32 %v2973, %v2998
        %v3007 = vmul.f32 %v2974, %v2998
        %v3008 = vmul.f32 %v2975, %v2998
        %v3009 = vmul.f32 %v2976, %v2998
        %v3010 = vmul.f32 %v2977, %v2998
        %v3011 = vmul.f32 %v2978, %v2998
        %v3012 = vmul.f32 %v2979, %v2998
        %v3013 = vmul.f32 %v2980, %v2998
        %v3014 = vmul.f32 %v2981, %v2998
        %v3015 = vmul.f32 %v2982, %v2998
        %v3016 = vmul.f32 %v2983, %v2998
        %v3017 = vmul.f32 %v2984, %v2998
        %v3018 = vmul.f32 %v2985, %v2998
        %v3019 = vmul.f32 %v2986, %v2998
        %v3020 = vmul.f32 %v2987, %v2998
        %v3021 = vmul.f32 %v2988, %v2998
        %v3022 = vmul.f32 %v2989, %v2998
        %v3023 = vmul.f32 %v2990, %v2998
        %v3024 = vmul.f32 %v2991, %v2998
        %v3025 = vmul.f32 %v2992, %v2998
        %v3026 = vmul.f32 %v2993, %v2998
        %v3027 = vmul.f32 %v2994, %v2998
        %v3028 = vmul.f32 %v2995, %v2998
        %v3029 = vmul.f32 %v2996, %v2998
        %v3030 = vmul.f32 %v2997, %v2998
        %v3031 = vadd.f32 %v2933, %v2999
        %v3032 = vadd.f32 %v2934, %v3000
        %v3033 = vadd.f32 %v2935, %v3001
        %v3034 = vadd.f32 %v2936, %v3002
        %v3035 = vadd.f32 %v2937, %v3003
        %v3036 = vadd.f32 %v2938, %v3004
        %v3037 = vadd.f32 %v2939, %v3005
        %v3038 = vadd.f32 %v2940, %v3006
        %v3039 = vadd.f32 %v2941, %v3007
        %v3040 = vadd.f32 %v2942, %v3008
        %v3041 = vadd.f32 %v2943, %v3009
        %v3042 = vadd.f32 %v2944, %v3010
        %v3043 = vadd.f32 %v2945, %v3011
        %v3044 = vadd.f32 %v2946, %v3012
        %v3045 = vadd.f32 %v2947, %v3013
        %v3046 = vadd.f32 %v2948, %v3014
        %v3047 = vadd.f32 %v2949, %v3015
        %v3048 = vadd.f32 %v2950, %v3016
        %v3049 = vadd.f32 %v2951, %v3017
        %v3050 = vadd.f32 %v2952, %v3018
        %v3051 = vadd.f32 %v2953, %v3019
        %v3052 = vadd.f32 %v2954, %v3020
        %v3053 = vadd.f32 %v2955, %v3021
        %v3054 = vadd.f32 %v2956, %v3022
        %v3055 = vadd.f32 %v2957, %v3023
        %v3056 = vadd.f32 %v2958, %v3024
        %v3057 = vadd.f32 %v2959, %v3025
        %v3058 = vadd.f32 %v2960, %v3026
        %v3059 = vadd.f32 %v2961, %v3027
        %v3060 = vadd.f32 %v2962, %v3028
        %v3061 = vadd.f32 %v2963, %v3029
        %v3062 = vadd.f32 %v2964, %v3030
        %v3063 = vld [vmem:[%s10 + $0x2] sm:$0x1]
        %v3065 = vperm.slane %v3063, 0
        %v3067 = vadd.f32 %v3031, %v3065
        %v3068 = vadd.f32 %v3032, %v3065
        %v3069 = vadd.f32 %v3033, %v3065
        %v3070 = vadd.f32 %v3034, %v3065
        %v3071 = vadd.f32 %v3035, %v3065
        %v3072 = vadd.f32 %v3036, %v3065
        %v3073 = vadd.f32 %v3037, %v3065
        %v3074 = vadd.f32 %v3038, %v3065
        %v3075 = vadd.f32 %v3039, %v3065
        %v3076 = vadd.f32 %v3040, %v3065
        %v3077 = vadd.f32 %v3041, %v3065
        %v3078 = vadd.f32 %v3042, %v3065
        %v3079 = vadd.f32 %v3043, %v3065
        %v3080 = vadd.f32 %v3044, %v3065
        %v3081 = vadd.f32 %v3045, %v3065
        %v3082 = vadd.f32 %v3046, %v3065
        %v3083 = vadd.f32 %v3047, %v3065
        %v3084 = vadd.f32 %v3048, %v3065
        %v3085 = vadd.f32 %v3049, %v3065
        %v3086 = vadd.f32 %v3050, %v3065
        %v3087 = vadd.f32 %v3051, %v3065
        %v3088 = vadd.f32 %v3052, %v3065
        %v3089 = vadd.f32 %v3053, %v3065
        %v3090 = vadd.f32 %v3054, %v3065
        %v3091 = vadd.f32 %v3055, %v3065
        %v3092 = vadd.f32 %v3056, %v3065
        %v3093 = vadd.f32 %v3057, %v3065
        %v3094 = vadd.f32 %v3058, %v3065
        %v3095 = vadd.f32 %v3059, %v3065
        %v3096 = vadd.f32 %v3060, %v3065
        %v3097 = vadd.f32 %v3061, %v3065
        %v3098 = vadd.f32 %v3062, %v3065
        %v3099 = vxor.u32 %v3067, 2147483648
        %v3100 = vxor.u32 %v3068, 2147483648
        %v3101 = vxor.u32 %v3069, 2147483648
        %v3102 = vxor.u32 %v3070, 2147483648
        %v3103 = vxor.u32 %v3071, 2147483648
        %v3104 = vxor.u32 %v3072, 2147483648
        %v3105 = vxor.u32 %v3073, 2147483648
        %v3106 = vxor.u32 %v3074, 2147483648
        %v3107 = vxor.u32 %v3075, 2147483648
        %v3108 = vxor.u32 %v3076, 2147483648
        %v3109 = vxor.u32 %v3077, 2147483648
        %v3110 = vxor.u32 %v3078, 2147483648
        %v3111 = vxor.u32 %v3079, 2147483648
        %v3112 = vxor.u32 %v3080, 2147483648
        %v3113 = vxor.u32 %v3081, 2147483648
        %v3114 = vxor.u32 %v3082, 2147483648
        %v3115 = vxor.u32 %v3083, 2147483648
        %v3116 = vxor.u32 %v3084, 2147483648
        %v3117 = vxor.u32 %v3085, 2147483648
        %v3118 = vxor.u32 %v3086, 2147483648
        %v3119 = vxor.u32 %v3087, 2147483648
        %v3120 = vxor.u32 %v3088, 2147483648
        %v3121 = vxor.u32 %v3089, 2147483648
        %v3122 = vxor.u32 %v3090, 2147483648
        %v3123 = vxor.u32 %v3091, 2147483648
        %v3124 = vxor.u32 %v3092, 2147483648
        %v3125 = vxor.u32 %v3093, 2147483648
        %v3126 = vxor.u32 %v3094, 2147483648
        %v3127 = vxor.u32 %v3095, 2147483648
        %v3128 = vxor.u32 %v3096, 2147483648
        %v3129 = vxor.u32 %v3097, 2147483648
        %v3130 = vxor.u32 %v3098, 2147483648
        %v3131 = vmul.f32 %v3099, 1.442695
        %v3132 = vpow.pop %v3131
        %v3133 = vmul.f32 %v3100, 1.442695
        %v3134 = vpow.pop %v3133
        %v3135 = vmul.f32 %v3101, 1.442695
        %v3136 = vpow.pop %v3135
        %v3137 = vmul.f32 %v3102, 1.442695
        %v3138 = vpow.pop %v3137
        %v3139 = vmul.f32 %v3103, 1.442695
        %v3140 = vpow.pop %v3139
        %v3141 = vmul.f32 %v3104, 1.442695
        %v3142 = vpow.pop %v3141
        %v3143 = vmul.f32 %v3105, 1.442695
        %v3144 = vpow.pop %v3143
        %v3145 = vmul.f32 %v3106, 1.442695
        %v3146 = vpow.pop %v3145
        %v3147 = vmul.f32 %v3107, 1.442695
        %v3148 = vpow.pop %v3147
        %v3149 = vmul.f32 %v3108, 1.442695
        %v3150 = vpow.pop %v3149
        %v3151 = vmul.f32 %v3109, 1.442695
        %v3152 = vpow.pop %v3151
        %v3153 = vmul.f32 %v3110, 1.442695
        %v3154 = vpow.pop %v3153
        %v3155 = vmul.f32 %v3111, 1.442695
        %v3156 = vpow.pop %v3155
        %v3157 = vmul.f32 %v3112, 1.442695
        %v3158 = vpow.pop %v3157
        %v3159 = vmul.f32 %v3113, 1.442695
        %v3160 = vpow.pop %v3159
        %v3161 = vmul.f32 %v3114, 1.442695
        %v3162 = vpow.pop %v3161
        %v3163 = vmul.f32 %v3115, 1.442695
        %v3164 = vpow.pop %v3163
        %v3165 = vmul.f32 %v3116, 1.442695
        %v3166 = vpow.pop %v3165
        %v3167 = vmul.f32 %v3117, 1.442695
        %v3168 = vpow.pop %v3167
        %v3169 = vmul.f32 %v3118, 1.442695
        %v3170 = vpow.pop %v3169
        %v3171 = vmul.f32 %v3119, 1.442695
        %v3172 = vpow.pop %v3171
        %v3173 = vmul.f32 %v3120, 1.442695
        %v3174 = vpow.pop %v3173
        %v3175 = vmul.f32 %v3121, 1.442695
        %v3176 = vpow.pop %v3175
        %v3177 = vmul.f32 %v3122, 1.442695
        %v3178 = vpow.pop %v3177
        %v3179 = vmul.f32 %v3123, 1.442695
        %v3180 = vpow.pop %v3179
        %v3181 = vmul.f32 %v3124, 1.442695
        %v3182 = vpow.pop %v3181
        %v3183 = vmul.f32 %v3125, 1.442695
        %v3184 = vpow.pop %v3183
        %v3185 = vmul.f32 %v3126, 1.442695
        %v3186 = vpow.pop %v3185
        %v3187 = vmul.f32 %v3127, 1.442695
        %v3188 = vpow.pop %v3187
        %v3189 = vmul.f32 %v3128, 1.442695
        %v3190 = vpow.pop %v3189
        %v3191 = vmul.f32 %v3129, 1.442695
        %v3192 = vpow.pop %v3191
        %v3193 = vmul.f32 %v3130, 1.442695
        %v3194 = vpow.pop %v3193
        %v3195 = vadd.f32 %v3132, 1.0
        %v3196 = vadd.f32 %v3134, 1.0
        %v3197 = vadd.f32 %v3136, 1.0
        %v3198 = vadd.f32 %v3138, 1.0
        %v3199 = vadd.f32 %v3140, 1.0
        %v3200 = vadd.f32 %v3142, 1.0
        %v3201 = vadd.f32 %v3144, 1.0
        %v3202 = vadd.f32 %v3146, 1.0
        %v3203 = vadd.f32 %v3148, 1.0
        %v3204 = vadd.f32 %v3150, 1.0
        %v3205 = vadd.f32 %v3152, 1.0
        %v3206 = vadd.f32 %v3154, 1.0
        %v3207 = vadd.f32 %v3156, 1.0
        %v3208 = vadd.f32 %v3158, 1.0
        %v3209 = vadd.f32 %v3160, 1.0
        %v3210 = vadd.f32 %v3162, 1.0
        %v3211 = vadd.f32 %v3164, 1.0
        %v3212 = vadd.f32 %v3166, 1.0
        %v3213 = vadd.f32 %v3168, 1.0
        %v3214 = vadd.f32 %v3170, 1.0
        %v3215 = vadd.f32 %v3172, 1.0
        %v3216 = vadd.f32 %v3174, 1.0
        %v3217 = vadd.f32 %v3176, 1.0
        %v3218 = vadd.f32 %v3178, 1.0
        %v3219 = vadd.f32 %v3180, 1.0
        %v3220 = vadd.f32 %v3182, 1.0
        %v3221 = vadd.f32 %v3184, 1.0
        %v3222 = vadd.f32 %v3186, 1.0
        %v3223 = vadd.f32 %v3188, 1.0
        %v3224 = vadd.f32 %v3190, 1.0
        %v3225 = vadd.f32 %v3192, 1.0
        %v3226 = vadd.f32 %v3194, 1.0
        %v3227 = vrcp.pop %v3195
        %v3228 = vmul.f32 %v3195, %v3227
        %v3229 = vsub.f32 1.0, %v3228
        %v3230 = vmul.f32 %v3227, %v3229
        %v3231 = vadd.f32 %v3227, %v3230
        %vm3232 = vweird.f32 %v3195
        %vm3233 = vweird.f32 %v3227
        %vm3234 = vmor %vm3232, %vm3233
        %v3235 = vsel %vm3234, %v3227, %v3231
        %v3236 = vand.u32 2147483647, %v3195
        %vm3237 = vcmp.eq.f32.partialorder %v3236, 8.507059e+37
        %v3238 = vand.u32 %v3195, 2147483648
        %v3239 = vor.u32 1.1754944e-38, %v3238
        %v3240 = vsel %vm3237, %v3239, %v3235
        %v3241 = vmul.f32 1.0, %v3240
        %v3242 = vrcp.pop %v3196
        %v3243 = vmul.f32 %v3196, %v3242
        %v3244 = vsub.f32 1.0, %v3243
        %v3245 = vmul.f32 %v3242, %v3244
        %v3246 = vadd.f32 %v3242, %v3245
        %vm3247 = vweird.f32 %v3196
        %vm3248 = vweird.f32 %v3242
        %vm3249 = vmor %vm3247, %vm3248
        %v3250 = vsel %vm3249, %v3242, %v3246
        %v3251 = vand.u32 2147483647, %v3196
        %vm3252 = vcmp.eq.f32.partialorder %v3251, 8.507059e+37
        %v3253 = vand.u32 %v3196, 2147483648
        %v3254 = vor.u32 1.1754944e-38, %v3253
        %v3255 = vsel %vm3252, %v3254, %v3250
        %v3256 = vmul.f32 1.0, %v3255
        %v3257 = vrcp.pop %v3197
        %v3258 = vmul.f32 %v3197, %v3257
        %v3259 = vsub.f32 1.0, %v3258
        %v3260 = vmul.f32 %v3257, %v3259
        %v3261 = vadd.f32 %v3257, %v3260
        %vm3262 = vweird.f32 %v3197
        %vm3263 = vweird.f32 %v3257
        %vm3264 = vmor %vm3262, %vm3263
        %v3265 = vsel %vm3264, %v3257, %v3261
        %v3266 = vand.u32 2147483647, %v3197
        %vm3267 = vcmp.eq.f32.partialorder %v3266, 8.507059e+37
        %v3268 = vand.u32 %v3197, 2147483648
        %v3269 = vor.u32 1.1754944e-38, %v3268
        %v3270 = vsel %vm3267, %v3269, %v3265
        %v3271 = vmul.f32 1.0, %v3270
        %v3272 = vrcp.pop %v3198
        %v3273 = vmul.f32 %v3198, %v3272
        %v3274 = vsub.f32 1.0, %v3273
        %v3275 = vmul.f32 %v3272, %v3274
        %v3276 = vadd.f32 %v3272, %v3275
        %vm3277 = vweird.f32 %v3198
        %vm3278 = vweird.f32 %v3272
        %vm3279 = vmor %vm3277, %vm3278
        %v3280 = vsel %vm3279, %v3272, %v3276
        %v3281 = vand.u32 2147483647, %v3198
        %vm3282 = vcmp.eq.f32.partialorder %v3281, 8.507059e+37
        %v3283 = vand.u32 %v3198, 2147483648
        %v3284 = vor.u32 1.1754944e-38, %v3283
        %v3285 = vsel %vm3282, %v3284, %v3280
        %v3286 = vmul.f32 1.0, %v3285
        %v3287 = vrcp.pop %v3199
        %v3288 = vmul.f32 %v3199, %v3287
        %v3289 = vsub.f32 1.0, %v3288
        %v3290 = vmul.f32 %v3287, %v3289
        %v3291 = vadd.f32 %v3287, %v3290
        %vm3292 = vweird.f32 %v3199
        %vm3293 = vweird.f32 %v3287
        %vm3294 = vmor %vm3292, %vm3293
        %v3295 = vsel %vm3294, %v3287, %v3291
        %v3296 = vand.u32 2147483647, %v3199
        %vm3297 = vcmp.eq.f32.partialorder %v3296, 8.507059e+37
        %v3298 = vand.u32 %v3199, 2147483648
        %v3299 = vor.u32 1.1754944e-38, %v3298
        %v3300 = vsel %vm3297, %v3299, %v3295
        %v3301 = vmul.f32 1.0, %v3300
        %v3302 = vrcp.pop %v3200
        %v3303 = vmul.f32 %v3200, %v3302
        %v3304 = vsub.f32 1.0, %v3303
        %v3305 = vmul.f32 %v3302, %v3304
        %v3306 = vadd.f32 %v3302, %v3305
        %vm3307 = vweird.f32 %v3200
        %vm3308 = vweird.f32 %v3302
        %vm3309 = vmor %vm3307, %vm3308
        %v3310 = vsel %vm3309, %v3302, %v3306
        %v3311 = vand.u32 2147483647, %v3200
        %vm3312 = vcmp.eq.f32.partialorder %v3311, 8.507059e+37
        %v3313 = vand.u32 %v3200, 2147483648
        %v3314 = vor.u32 1.1754944e-38, %v3313
        %v3315 = vsel %vm3312, %v3314, %v3310
        %v3316 = vmul.f32 1.0, %v3315
        %v3317 = vrcp.pop %v3201
        %v3318 = vmul.f32 %v3201, %v3317
        %v3319 = vsub.f32 1.0, %v3318
        %v3320 = vmul.f32 %v3317, %v3319
        %v3321 = vadd.f32 %v3317, %v3320
        %vm3322 = vweird.f32 %v3201
        %vm3323 = vweird.f32 %v3317
        %vm3324 = vmor %vm3322, %vm3323
        %v3325 = vsel %vm3324, %v3317, %v3321
        %v3326 = vand.u32 2147483647, %v3201
        %vm3327 = vcmp.eq.f32.partialorder %v3326, 8.507059e+37
        %v3328 = vand.u32 %v3201, 2147483648
        %v3329 = vor.u32 1.1754944e-38, %v3328
        %v3330 = vsel %vm3327, %v3329, %v3325
        %v3331 = vmul.f32 1.0, %v3330
        %v3332 = vrcp.pop %v3202
        %v3333 = vmul.f32 %v3202, %v3332
        %v3334 = vsub.f32 1.0, %v3333
        %v3335 = vmul.f32 %v3332, %v3334
        %v3336 = vadd.f32 %v3332, %v3335
        %vm3337 = vweird.f32 %v3202
        %vm3338 = vweird.f32 %v3332
        %vm3339 = vmor %vm3337, %vm3338
        %v3340 = vsel %vm3339, %v3332, %v3336
        %v3341 = vand.u32 2147483647, %v3202
        %vm3342 = vcmp.eq.f32.partialorder %v3341, 8.507059e+37
        %v3343 = vand.u32 %v3202, 2147483648
        %v3344 = vor.u32 1.1754944e-38, %v3343
        %v3345 = vsel %vm3342, %v3344, %v3340
        %v3346 = vmul.f32 1.0, %v3345
        %v3347 = vrcp.pop %v3203
        %v3348 = vmul.f32 %v3203, %v3347
        %v3349 = vsub.f32 1.0, %v3348
        %v3350 = vmul.f32 %v3347, %v3349
        %v3351 = vadd.f32 %v3347, %v3350
        %vm3352 = vweird.f32 %v3203
        %vm3353 = vweird.f32 %v3347
        %vm3354 = vmor %vm3352, %vm3353
        %v3355 = vsel %vm3354, %v3347, %v3351
        %v3356 = vand.u32 2147483647, %v3203
        %vm3357 = vcmp.eq.f32.partialorder %v3356, 8.507059e+37
        %v3358 = vand.u32 %v3203, 2147483648
        %v3359 = vor.u32 1.1754944e-38, %v3358
        %v3360 = vsel %vm3357, %v3359, %v3355
        %v3361 = vmul.f32 1.0, %v3360
        %v3362 = vrcp.pop %v3204
        %v3363 = vmul.f32 %v3204, %v3362
        %v3364 = vsub.f32 1.0, %v3363
        %v3365 = vmul.f32 %v3362, %v3364
        %v3366 = vadd.f32 %v3362, %v3365
        %vm3367 = vweird.f32 %v3204
        %vm3368 = vweird.f32 %v3362
        %vm3369 = vmor %vm3367, %vm3368
        %v3370 = vsel %vm3369, %v3362, %v3366
        %v3371 = vand.u32 2147483647, %v3204
        %vm3372 = vcmp.eq.f32.partialorder %v3371, 8.507059e+37
        %v3373 = vand.u32 %v3204, 2147483648
        %v3374 = vor.u32 1.1754944e-38, %v3373
        %v3375 = vsel %vm3372, %v3374, %v3370
        %v3376 = vmul.f32 1.0, %v3375
        %v3377 = vrcp.pop %v3205
        %v3378 = vmul.f32 %v3205, %v3377
        %v3379 = vsub.f32 1.0, %v3378
        %v3380 = vmul.f32 %v3377, %v3379
        %v3381 = vadd.f32 %v3377, %v3380
        %vm3382 = vweird.f32 %v3205
        %vm3383 = vweird.f32 %v3377
        %vm3384 = vmor %vm3382, %vm3383
        %v3385 = vsel %vm3384, %v3377, %v3381
        %v3386 = vand.u32 2147483647, %v3205
        %vm3387 = vcmp.eq.f32.partialorder %v3386, 8.507059e+37
        %v3388 = vand.u32 %v3205, 2147483648
        %v3389 = vor.u32 1.1754944e-38, %v3388
        %v3390 = vsel %vm3387, %v3389, %v3385
        %v3391 = vmul.f32 1.0, %v3390
        %v3392 = vrcp.pop %v3206
        %v3393 = vmul.f32 %v3206, %v3392
        %v3394 = vsub.f32 1.0, %v3393
        %v3395 = vmul.f32 %v3392, %v3394
        %v3396 = vadd.f32 %v3392, %v3395
        %vm3397 = vweird.f32 %v3206
        %vm3398 = vweird.f32 %v3392
        %vm3399 = vmor %vm3397, %vm3398
        %v3400 = vsel %vm3399, %v3392, %v3396
        %v3401 = vand.u32 2147483647, %v3206
        %vm3402 = vcmp.eq.f32.partialorder %v3401, 8.507059e+37
        %v3403 = vand.u32 %v3206, 2147483648
        %v3404 = vor.u32 1.1754944e-38, %v3403
        %v3405 = vsel %vm3402, %v3404, %v3400
        %v3406 = vmul.f32 1.0, %v3405
        %v3407 = vrcp.pop %v3207
        %v3408 = vmul.f32 %v3207, %v3407
        %v3409 = vsub.f32 1.0, %v3408
        %v3410 = vmul.f32 %v3407, %v3409
        %v3411 = vadd.f32 %v3407, %v3410
        %vm3412 = vweird.f32 %v3207
        %vm3413 = vweird.f32 %v3407
        %vm3414 = vmor %vm3412, %vm3413
        %v3415 = vsel %vm3414, %v3407, %v3411
        %v3416 = vand.u32 2147483647, %v3207
        %vm3417 = vcmp.eq.f32.partialorder %v3416, 8.507059e+37
        %v3418 = vand.u32 %v3207, 2147483648
        %v3419 = vor.u32 1.1754944e-38, %v3418
        %v3420 = vsel %vm3417, %v3419, %v3415
        %v3421 = vmul.f32 1.0, %v3420
        %v3422 = vrcp.pop %v3208
        %v3423 = vmul.f32 %v3208, %v3422
        %v3424 = vsub.f32 1.0, %v3423
        %v3425 = vmul.f32 %v3422, %v3424
        %v3426 = vadd.f32 %v3422, %v3425
        %vm3427 = vweird.f32 %v3208
        %vm3428 = vweird.f32 %v3422
        %vm3429 = vmor %vm3427, %vm3428
        %v3430 = vsel %vm3429, %v3422, %v3426
        %v3431 = vand.u32 2147483647, %v3208
        %vm3432 = vcmp.eq.f32.partialorder %v3431, 8.507059e+37
        %v3433 = vand.u32 %v3208, 2147483648
        %v3434 = vor.u32 1.1754944e-38, %v3433
        %v3435 = vsel %vm3432, %v3434, %v3430
        %v3436 = vmul.f32 1.0, %v3435
        %v3437 = vrcp.pop %v3209
        %v3438 = vmul.f32 %v3209, %v3437
        %v3439 = vsub.f32 1.0, %v3438
        %v3440 = vmul.f32 %v3437, %v3439
        %v3441 = vadd.f32 %v3437, %v3440
        %vm3442 = vweird.f32 %v3209
        %vm3443 = vweird.f32 %v3437
        %vm3444 = vmor %vm3442, %vm3443
        %v3445 = vsel %vm3444, %v3437, %v3441
        %v3446 = vand.u32 2147483647, %v3209
        %vm3447 = vcmp.eq.f32.partialorder %v3446, 8.507059e+37
        %v3448 = vand.u32 %v3209, 2147483648
        %v3449 = vor.u32 1.1754944e-38, %v3448
        %v3450 = vsel %vm3447, %v3449, %v3445
        %v3451 = vmul.f32 1.0, %v3450
        %v3452 = vrcp.pop %v3210
        %v3453 = vmul.f32 %v3210, %v3452
        %v3454 = vsub.f32 1.0, %v3453
        %v3455 = vmul.f32 %v3452, %v3454
        %v3456 = vadd.f32 %v3452, %v3455
        %vm3457 = vweird.f32 %v3210
        %vm3458 = vweird.f32 %v3452
        %vm3459 = vmor %vm3457, %vm3458
        %v3460 = vsel %vm3459, %v3452, %v3456
        %v3461 = vand.u32 2147483647, %v3210
        %vm3462 = vcmp.eq.f32.partialorder %v3461, 8.507059e+37
        %v3463 = vand.u32 %v3210, 2147483648
        %v3464 = vor.u32 1.1754944e-38, %v3463
        %v3465 = vsel %vm3462, %v3464, %v3460
        %v3466 = vmul.f32 1.0, %v3465
        %v3467 = vrcp.pop %v3211
        %v3468 = vmul.f32 %v3211, %v3467
        %v3469 = vsub.f32 1.0, %v3468
        %v3470 = vmul.f32 %v3467, %v3469
        %v3471 = vadd.f32 %v3467, %v3470
        %vm3472 = vweird.f32 %v3211
        %vm3473 = vweird.f32 %v3467
        %vm3474 = vmor %vm3472, %vm3473
        %v3475 = vsel %vm3474, %v3467, %v3471
        %v3476 = vand.u32 2147483647, %v3211
        %vm3477 = vcmp.eq.f32.partialorder %v3476, 8.507059e+37
        %v3478 = vand.u32 %v3211, 2147483648
        %v3479 = vor.u32 1.1754944e-38, %v3478
        %v3480 = vsel %vm3477, %v3479, %v3475
        %v3481 = vmul.f32 1.0, %v3480
        %v3482 = vrcp.pop %v3212
        %v3483 = vmul.f32 %v3212, %v3482
        %v3484 = vsub.f32 1.0, %v3483
        %v3485 = vmul.f32 %v3482, %v3484
        %v3486 = vadd.f32 %v3482, %v3485
        %vm3487 = vweird.f32 %v3212
        %vm3488 = vweird.f32 %v3482
        %vm3489 = vmor %vm3487, %vm3488
        %v3490 = vsel %vm3489, %v3482, %v3486
        %v3491 = vand.u32 2147483647, %v3212
        %vm3492 = vcmp.eq.f32.partialorder %v3491, 8.507059e+37
        %v3493 = vand.u32 %v3212, 2147483648
        %v3494 = vor.u32 1.1754944e-38, %v3493
        %v3495 = vsel %vm3492, %v3494, %v3490
        %v3496 = vmul.f32 1.0, %v3495
        %v3497 = vrcp.pop %v3213
        %v3498 = vmul.f32 %v3213, %v3497
        %v3499 = vsub.f32 1.0, %v3498
        %v3500 = vmul.f32 %v3497, %v3499
        %v3501 = vadd.f32 %v3497, %v3500
        %vm3502 = vweird.f32 %v3213
        %vm3503 = vweird.f32 %v3497
        %vm3504 = vmor %vm3502, %vm3503
        %v3505 = vsel %vm3504, %v3497, %v3501
        %v3506 = vand.u32 2147483647, %v3213
        %vm3507 = vcmp.eq.f32.partialorder %v3506, 8.507059e+37
        %v3508 = vand.u32 %v3213, 2147483648
        %v3509 = vor.u32 1.1754944e-38, %v3508
        %v3510 = vsel %vm3507, %v3509, %v3505
        %v3511 = vmul.f32 1.0, %v3510
        %v3512 = vrcp.pop %v3214
        %v3513 = vmul.f32 %v3214, %v3512
        %v3514 = vsub.f32 1.0, %v3513
        %v3515 = vmul.f32 %v3512, %v3514
        %v3516 = vadd.f32 %v3512, %v3515
        %vm3517 = vweird.f32 %v3214
        %vm3518 = vweird.f32 %v3512
        %vm3519 = vmor %vm3517, %vm3518
        %v3520 = vsel %vm3519, %v3512, %v3516
        %v3521 = vand.u32 2147483647, %v3214
        %vm3522 = vcmp.eq.f32.partialorder %v3521, 8.507059e+37
        %v3523 = vand.u32 %v3214, 2147483648
        %v3524 = vor.u32 1.1754944e-38, %v3523
        %v3525 = vsel %vm3522, %v3524, %v3520
        %v3526 = vmul.f32 1.0, %v3525
        %v3527 = vrcp.pop %v3215
        %v3528 = vmul.f32 %v3215, %v3527
        %v3529 = vsub.f32 1.0, %v3528
        %v3530 = vmul.f32 %v3527, %v3529
        %v3531 = vadd.f32 %v3527, %v3530
        %vm3532 = vweird.f32 %v3215
        %vm3533 = vweird.f32 %v3527
        %vm3534 = vmor %vm3532, %vm3533
        %v3535 = vsel %vm3534, %v3527, %v3531
        %v3536 = vand.u32 2147483647, %v3215
        %vm3537 = vcmp.eq.f32.partialorder %v3536, 8.507059e+37
        %v3538 = vand.u32 %v3215, 2147483648
        %v3539 = vor.u32 1.1754944e-38, %v3538
        %v3540 = vsel %vm3537, %v3539, %v3535
        %v3541 = vmul.f32 1.0, %v3540
        %v3542 = vrcp.pop %v3216
        %v3543 = vmul.f32 %v3216, %v3542
        %v3544 = vsub.f32 1.0, %v3543
        %v3545 = vmul.f32 %v3542, %v3544
        %v3546 = vadd.f32 %v3542, %v3545
        %vm3547 = vweird.f32 %v3216
        %vm3548 = vweird.f32 %v3542
        %vm3549 = vmor %vm3547, %vm3548
        %v3550 = vsel %vm3549, %v3542, %v3546
        %v3551 = vand.u32 2147483647, %v3216
        %vm3552 = vcmp.eq.f32.partialorder %v3551, 8.507059e+37
        %v3553 = vand.u32 %v3216, 2147483648
        %v3554 = vor.u32 1.1754944e-38, %v3553
        %v3555 = vsel %vm3552, %v3554, %v3550
        %v3556 = vmul.f32 1.0, %v3555
        %v3557 = vrcp.pop %v3217
        %v3558 = vmul.f32 %v3217, %v3557
        %v3559 = vsub.f32 1.0, %v3558
        %v3560 = vmul.f32 %v3557, %v3559
        %v3561 = vadd.f32 %v3557, %v3560
        %vm3562 = vweird.f32 %v3217
        %vm3563 = vweird.f32 %v3557
        %vm3564 = vmor %vm3562, %vm3563
        %v3565 = vsel %vm3564, %v3557, %v3561
        %v3566 = vand.u32 2147483647, %v3217
        %vm3567 = vcmp.eq.f32.partialorder %v3566, 8.507059e+37
        %v3568 = vand.u32 %v3217, 2147483648
        %v3569 = vor.u32 1.1754944e-38, %v3568
        %v3570 = vsel %vm3567, %v3569, %v3565
        %v3571 = vmul.f32 1.0, %v3570
        %v3572 = vrcp.pop %v3218
        %v3573 = vmul.f32 %v3218, %v3572
        %v3574 = vsub.f32 1.0, %v3573
        %v3575 = vmul.f32 %v3572, %v3574
        %v3576 = vadd.f32 %v3572, %v3575
        %vm3577 = vweird.f32 %v3218
        %vm3578 = vweird.f32 %v3572
        %vm3579 = vmor %vm3577, %vm3578
        %v3580 = vsel %vm3579, %v3572, %v3576
        %v3581 = vand.u32 2147483647, %v3218
        %vm3582 = vcmp.eq.f32.partialorder %v3581, 8.507059e+37
        %v3583 = vand.u32 %v3218, 2147483648
        %v3584 = vor.u32 1.1754944e-38, %v3583
        %v3585 = vsel %vm3582, %v3584, %v3580
        %v3586 = vmul.f32 1.0, %v3585
        %v3587 = vrcp.pop %v3219
        %v3588 = vmul.f32 %v3219, %v3587
        %v3589 = vsub.f32 1.0, %v3588
        %v3590 = vmul.f32 %v3587, %v3589
        %v3591 = vadd.f32 %v3587, %v3590
        %vm3592 = vweird.f32 %v3219
        %vm3593 = vweird.f32 %v3587
        %vm3594 = vmor %vm3592, %vm3593
        %v3595 = vsel %vm3594, %v3587, %v3591
        %v3596 = vand.u32 2147483647, %v3219
        %vm3597 = vcmp.eq.f32.partialorder %v3596, 8.507059e+37
        %v3598 = vand.u32 %v3219, 2147483648
        %v3599 = vor.u32 1.1754944e-38, %v3598
        %v3600 = vsel %vm3597, %v3599, %v3595
        %v3601 = vmul.f32 1.0, %v3600
        %v3602 = vrcp.pop %v3220
        %v3603 = vmul.f32 %v3220, %v3602
        %v3604 = vsub.f32 1.0, %v3603
        %v3605 = vmul.f32 %v3602, %v3604
        %v3606 = vadd.f32 %v3602, %v3605
        %vm3607 = vweird.f32 %v3220
        %vm3608 = vweird.f32 %v3602
        %vm3609 = vmor %vm3607, %vm3608
        %v3610 = vsel %vm3609, %v3602, %v3606
        %v3611 = vand.u32 2147483647, %v3220
        %vm3612 = vcmp.eq.f32.partialorder %v3611, 8.507059e+37
        %v3613 = vand.u32 %v3220, 2147483648
        %v3614 = vor.u32 1.1754944e-38, %v3613
        %v3615 = vsel %vm3612, %v3614, %v3610
        %v3616 = vmul.f32 1.0, %v3615
        %v3617 = vrcp.pop %v3221
        %v3618 = vmul.f32 %v3221, %v3617
        %v3619 = vsub.f32 1.0, %v3618
        %v3620 = vmul.f32 %v3617, %v3619
        %v3621 = vadd.f32 %v3617, %v3620
        %vm3622 = vweird.f32 %v3221
        %vm3623 = vweird.f32 %v3617
        %vm3624 = vmor %vm3622, %vm3623
        %v3625 = vsel %vm3624, %v3617, %v3621
        %v3626 = vand.u32 2147483647, %v3221
        %vm3627 = vcmp.eq.f32.partialorder %v3626, 8.507059e+37
        %v3628 = vand.u32 %v3221, 2147483648
        %v3629 = vor.u32 1.1754944e-38, %v3628
        %v3630 = vsel %vm3627, %v3629, %v3625
        %v3631 = vmul.f32 1.0, %v3630
        %v3632 = vrcp.pop %v3222
        %v3633 = vmul.f32 %v3222, %v3632
        %v3634 = vsub.f32 1.0, %v3633
        %v3635 = vmul.f32 %v3632, %v3634
        %v3636 = vadd.f32 %v3632, %v3635
        %vm3637 = vweird.f32 %v3222
        %vm3638 = vweird.f32 %v3632
        %vm3639 = vmor %vm3637, %vm3638
        %v3640 = vsel %vm3639, %v3632, %v3636
        %v3641 = vand.u32 2147483647, %v3222
        %vm3642 = vcmp.eq.f32.partialorder %v3641, 8.507059e+37
        %v3643 = vand.u32 %v3222, 2147483648
        %v3644 = vor.u32 1.1754944e-38, %v3643
        %v3645 = vsel %vm3642, %v3644, %v3640
        %v3646 = vmul.f32 1.0, %v3645
        %v3647 = vrcp.pop %v3223
        %v3648 = vmul.f32 %v3223, %v3647
        %v3649 = vsub.f32 1.0, %v3648
        %v3650 = vmul.f32 %v3647, %v3649
        %v3651 = vadd.f32 %v3647, %v3650
        %vm3652 = vweird.f32 %v3223
        %vm3653 = vweird.f32 %v3647
        %vm3654 = vmor %vm3652, %vm3653
        %v3655 = vsel %vm3654, %v3647, %v3651
        %v3656 = vand.u32 2147483647, %v3223
        %vm3657 = vcmp.eq.f32.partialorder %v3656, 8.507059e+37
        %v3658 = vand.u32 %v3223, 2147483648
        %v3659 = vor.u32 1.1754944e-38, %v3658
        %v3660 = vsel %vm3657, %v3659, %v3655
        %v3661 = vmul.f32 1.0, %v3660
        %v3662 = vrcp.pop %v3224
        %v3663 = vmul.f32 %v3224, %v3662
        %v3664 = vsub.f32 1.0, %v3663
        %v3665 = vmul.f32 %v3662, %v3664
        %v3666 = vadd.f32 %v3662, %v3665
        %vm3667 = vweird.f32 %v3224
        %vm3668 = vweird.f32 %v3662
        %vm3669 = vmor %vm3667, %vm3668
        %v3670 = vsel %vm3669, %v3662, %v3666
        %v3671 = vand.u32 2147483647, %v3224
        %vm3672 = vcmp.eq.f32.partialorder %v3671, 8.507059e+37
        %v3673 = vand.u32 %v3224, 2147483648
        %v3674 = vor.u32 1.1754944e-38, %v3673
        %v3675 = vsel %vm3672, %v3674, %v3670
        %v3676 = vmul.f32 1.0, %v3675
        %v3677 = vrcp.pop %v3225
        %v3678 = vmul.f32 %v3225, %v3677
        %v3679 = vsub.f32 1.0, %v3678
        %v3680 = vmul.f32 %v3677, %v3679
        %v3681 = vadd.f32 %v3677, %v3680
        %vm3682 = vweird.f32 %v3225
        %vm3683 = vweird.f32 %v3677
        %vm3684 = vmor %vm3682, %vm3683
        %v3685 = vsel %vm3684, %v3677, %v3681
        %v3686 = vand.u32 2147483647, %v3225
        %vm3687 = vcmp.eq.f32.partialorder %v3686, 8.507059e+37
        %v3688 = vand.u32 %v3225, 2147483648
        %v3689 = vor.u32 1.1754944e-38, %v3688
        %v3690 = vsel %vm3687, %v3689, %v3685
        %v3691 = vmul.f32 1.0, %v3690
        %v3692 = vrcp.pop %v3226
        %v3693 = vmul.f32 %v3226, %v3692
        %v3694 = vsub.f32 1.0, %v3693
        %v3695 = vmul.f32 %v3692, %v3694
        %v3696 = vadd.f32 %v3692, %v3695
        %vm3697 = vweird.f32 %v3226
        %vm3698 = vweird.f32 %v3692
        %vm3699 = vmor %vm3697, %vm3698
        %v3700 = vsel %vm3699, %v3692, %v3696
        %v3701 = vand.u32 2147483647, %v3226
        %vm3702 = vcmp.eq.f32.partialorder %v3701, 8.507059e+37
        %v3703 = vand.u32 %v3226, 2147483648
        %v3704 = vor.u32 1.1754944e-38, %v3703
        %v3705 = vsel %vm3702, %v3704, %v3700
        %v3706 = vmul.f32 1.0, %v3705
        %v3707 = vmul.f32 %v3067, %v3241
        %v3708 = vmul.f32 %v3068, %v3256
        %v3709 = vmul.f32 %v3069, %v3271
        %v3710 = vmul.f32 %v3070, %v3286
        %v3711 = vmul.f32 %v3071, %v3301
        %v3712 = vmul.f32 %v3072, %v3316
        %v3713 = vmul.f32 %v3073, %v3331
        %v3714 = vmul.f32 %v3074, %v3346
        %v3715 = vmul.f32 %v3075, %v3361
        %v3716 = vmul.f32 %v3076, %v3376
        %v3717 = vmul.f32 %v3077, %v3391
        %v3718 = vmul.f32 %v3078, %v3406
        %v3719 = vmul.f32 %v3079, %v3421
        %v3720 = vmul.f32 %v3080, %v3436
        %v3721 = vmul.f32 %v3081, %v3451
        %v3722 = vmul.f32 %v3082, %v3466
        %v3723 = vmul.f32 %v3083, %v3481
        %v3724 = vmul.f32 %v3084, %v3496
        %v3725 = vmul.f32 %v3085, %v3511
        %v3726 = vmul.f32 %v3086, %v3526
        %v3727 = vmul.f32 %v3087, %v3541
        %v3728 = vmul.f32 %v3088, %v3556
        %v3729 = vmul.f32 %v3089, %v3571
        %v3730 = vmul.f32 %v3090, %v3586
        %v3731 = vmul.f32 %v3091, %v3601
        %v3732 = vmul.f32 %v3092, %v3616
        %v3733 = vmul.f32 %v3093, %v3631
        %v3734 = vmul.f32 %v3094, %v3646
        %v3735 = vmul.f32 %v3095, %v3661
        %v3736 = vmul.f32 %v3096, %v3676
        %v3737 = vmul.f32 %v3097, %v3691
        %v3738 = vmul.f32 %v3098, %v3706
        %v3739 = vsel %vm2047, %v3707, 0.0
        %v3740 = vsel %vm2047, %v3708, 0.0
        %v3741 = vadd.f32 %v3739, %v3740
        %v3742 = vsel %vm2047, %v3709, 0.0
        %v3743 = vadd.f32 %v3741, %v3742
        %v3744 = vsel %vm2047, %v3710, 0.0
        %v3745 = vadd.f32 %v3743, %v3744
        %v3746 = vsel %vm2047, %v3711, 0.0
        %v3747 = vadd.f32 %v3745, %v3746
        %v3748 = vsel %vm2047, %v3712, 0.0
        %v3749 = vadd.f32 %v3747, %v3748
        %v3750 = vsel %vm2047, %v3713, 0.0
        %v3751 = vadd.f32 %v3749, %v3750
        %v3752 = vsel %vm2047, %v3714, 0.0
        %v3753 = vadd.f32 %v3751, %v3752
        %v3754 = vrot.slane %v3753, 4
        %v3755 = vadd.f32 %v3753, %v3754
        %v3756 = vrot.slane %v3755, 2
        %v3757 = vadd.f32 %v3755, %v3756
        %v3758 = vrot.slane %v3757, 1
        %v3759 = vadd.f32 %v3757, %v3758
        %v3760 = vsel %vm2047, %v3715, 0.0
        %v3761 = vsel %vm2047, %v3716, 0.0
        %v3762 = vadd.f32 %v3760, %v3761
        %v3763 = vsel %vm2047, %v3717, 0.0
        %v3764 = vadd.f32 %v3762, %v3763
        %v3765 = vsel %vm2047, %v3718, 0.0
        %v3766 = vadd.f32 %v3764, %v3765
        %v3767 = vsel %vm2047, %v3719, 0.0
        %v3768 = vadd.f32 %v3766, %v3767
        %v3769 = vsel %vm2047, %v3720, 0.0
        %v3770 = vadd.f32 %v3768, %v3769
        %v3771 = vsel %vm2047, %v3721, 0.0
        %v3772 = vadd.f32 %v3770, %v3771
        %v3773 = vsel %vm2047, %v3722, 0.0
        %v3774 = vadd.f32 %v3772, %v3773
        %v3775 = vrot.slane %v3774, 4
        %v3776 = vadd.f32 %v3774, %v3775
        %v3777 = vrot.slane %v3776, 2
        %v3778 = vadd.f32 %v3776, %v3777
        %v3779 = vrot.slane %v3778, 1
        %v3780 = vadd.f32 %v3778, %v3779
        %v3781 = vsel %vm2047, %v3723, 0.0
        %v3782 = vsel %vm2047, %v3724, 0.0
        %v3783 = vadd.f32 %v3781, %v3782
        %v3784 = vsel %vm2047, %v3725, 0.0
        %v3785 = vadd.f32 %v3783, %v3784
        %v3786 = vsel %vm2047, %v3726, 0.0
        %v3787 = vadd.f32 %v3785, %v3786
        %v3788 = vsel %vm2047, %v3727, 0.0
        %v3789 = vadd.f32 %v3787, %v3788
        %v3790 = vsel %vm2047, %v3728, 0.0
        %v3791 = vadd.f32 %v3789, %v3790
        %v3792 = vsel %vm2047, %v3729, 0.0
        %v3793 = vadd.f32 %v3791, %v3792
        %v3794 = vsel %vm2047, %v3730, 0.0
        %v3795 = vadd.f32 %v3793, %v3794
        %v3796 = vrot.slane %v3795, 4
        %v3797 = vadd.f32 %v3795, %v3796
        %v3798 = vrot.slane %v3797, 2
        %v3799 = vadd.f32 %v3797, %v3798
        %v3800 = vrot.slane %v3799, 1
        %v3801 = vadd.f32 %v3799, %v3800
        %v3802 = vsel %vm2047, %v3731, 0.0
        %v3803 = vsel %vm2047, %v3732, 0.0
        %v3804 = vadd.f32 %v3802, %v3803
        %v3805 = vsel %vm2047, %v3733, 0.0
        %v3806 = vadd.f32 %v3804, %v3805
        %v3807 = vsel %vm2047, %v3734, 0.0
        %v3808 = vadd.f32 %v3806, %v3807
        %v3809 = vsel %vm2047, %v3735, 0.0
        %v3810 = vadd.f32 %v3808, %v3809
        %v3811 = vsel %vm2047, %v3736, 0.0
        %v3812 = vadd.f32 %v3810, %v3811
        %v3813 = vsel %vm2047, %v3737, 0.0
        %v3814 = vadd.f32 %v3812, %v3813
        %v3815 = vsel %vm2047, %v3738, 0.0
        %v3816 = vadd.f32 %v3814, %v3815
        %v3817 = vrot.slane %v3816, 4
        %v3818 = vadd.f32 %v3816, %v3817
        %v3819 = vrot.slane %v3818, 2
        %v3820 = vadd.f32 %v3818, %v3819
        %v3821 = vrot.slane %v3820, 1
        %v3822 = vadd.f32 %v3820, %v3821
        %v3823 = vrcp.pop 64.0
        %v3824 = vmul.f32 64.0, %v3823
        %v3825 = vsub.f32 1.0, %v3824
        %v3826 = vmul.f32 %v3823, %v3825
        %v3827 = vadd.f32 %v3823, %v3826
        %vm3828 = vweird.f32 %v3823
        %v3829 = vsel %vm3828, %v3823, %v3827
        %v3830 = vmul.f32 %v3759, %v3829
        %v3831 = vmul.f32 %v3780, %v3829
        %v3832 = vmul.f32 %v3801, %v3829
        %v3833 = vmul.f32 %v3822, %v3829
        %v3834 = vpack.c.bf16 %v3830, %v3830
        %v3835 = vpack.c.bf16 %v3831, %v3831
        %v3836 = vpack.c.bf16 %v3832, %v3832
        %v3837 = vpack.c.bf16 %v3833, %v3833
        %v3838 = vld [vmem:[%s4] sm:$0xf]
        %v3839 = vld [vmem:[%s4 + $0x4] sm:$0xf]
        %v3840 = vld [vmem:[%s4 + $0x8] sm:$0xf]
        %v3841 = vld [vmem:[%s4 + $0xc] sm:$0xf]
        %v3842 = vld [vmem:[%s4 + $0x10] sm:$0xf]
        %v3843 = vld [vmem:[%s4 + $0x14] sm:$0xf]
        %v3844 = vld [vmem:[%s4 + $0x18] sm:$0xf]
        %v3845 = vld [vmem:[%s4 + $0x1c] sm:$0xf]
        %v3846 = vld [vmem:[%s10 + $0x3] sm:$0x1]
        %v3848 = vperm.slane %v3846, 0
        %v3854 = vunpack.c.l.b16 %v3834
        %v3855 = vunpack.c.l.b16 %v3835
        %v3856 = vunpack.c.l.b16 %v3836
        %v3857 = vunpack.c.l.b16 %v3837
        %vm3858 = vcmask 1041409
        %v3859 = vsel %vm3858, %v3855, %v3854
        %vm3860 = vcmask 1042434
        %v3861 = vsel %vm3860, %v3856, %v3859
        %vm3862 = vcmask 1043459
        %v3863 = vsel %vm3862, %v3857, %v3861
        %v3864 = vpack.c.b16 %v3863, %v3863
        %v3873 = vunpack.c.l.b16 %v3838
        %v3874 = vunpack.c.l.b16 %v3839
        %v3875 = vunpack.c.l.b16 %v3840
        %v3876 = vunpack.c.l.b16 %v3841
        %v3877 = vunpack.c.l.b16 %v3842
        %v3878 = vunpack.c.l.b16 %v3843
        %v3879 = vunpack.c.l.b16 %v3844
        %v3880 = vunpack.c.l.b16 %v3845
        %v3881 = vpack.c.b16 %v3874, %v3873
        %v3882 = vpack.c.b16 %v3876, %v3875
        %v3883 = vpack.c.b16 %v3878, %v3877
        %v3884 = vpack.c.b16 %v3880, %v3879
        %v3890 = vsel %vm2047, %v3864, 0
        %3892 = vmatpush.bf16.msra.mxu0 0
        %3893 = vmatpush.bf16.msra.mxu0 0
        %3894 = vmatpush.bf16.msra.mxu0 0
        %3895 = vmatpush.bf16.msra.mxu0 0
        %3896 = vmatpush.bf16.msra.mxu0 %v3884
        %3897 = vmatpush.bf16.msra.mxu0 %v3883
        %3898 = vmatpush.bf16.msra.mxu0 %v3882
        %3899 = vmatpush.bf16.msra.mxu0 %v3881
        %3900 = vmatmul.bf16.gmra.mxu0 %v3890
        %v3901 = vpop.f32.mrf.mxu0
        %v3902 = vadd.f32 %v3848, %v3901
        %v3903 = vpop.f32.mrf.mxu0
        %3904 = vdwg.mxu0
        %v3905 = vxor.u32 %v3902, 2147483648
        %v3906 = vmul.f32 %v3905, 1.442695
        %v3907 = vpow.pop %v3906
        %v3908 = vadd.f32 %v3907, 1.0
        %v3909 = vrcp.pop %v3908
        %v3910 = vmul.f32 %v3908, %v3909
        %v3911 = vsub.f32 1.0, %v3910
        %v3912 = vmul.f32 %v3909, %v3911
        %v3913 = vadd.f32 %v3909, %v3912
        %vm3914 = vweird.f32 %v3908
        %vm3915 = vweird.f32 %v3909
        %vm3916 = vmor %vm3914, %vm3915
        %v3917 = vsel %vm3916, %v3909, %v3913
        %v3918 = vand.u32 2147483647, %v3908
        %vm3919 = vcmp.eq.f32.partialorder %v3918, 8.507059e+37
        %v3920 = vand.u32 %v3908, 2147483648
        %v3921 = vor.u32 1.1754944e-38, %v3920
        %v3922 = vsel %vm3919, %v3921, %v3917
        %v3923 = vmul.f32 1.0, %v3922
        %v3924 = vmul.f32 %v3902, %v3923
        %v3925 = vpack.c.bf16 %v3924, %v3924
        %v3926 = vld [vmem:[%s5] sm:$0xf]
        %v3927 = vld [vmem:[%s5 + $0x4] sm:$0xf]
        %v3928 = vld [vmem:[%s10 + $0x4] sm:$0x1]
        %v3930 = vperm.slane %v3928, 0
        %v3934 = vunpack.c.l.b16 %v3926
        %v3935 = vunpack.c.l.b16 %v3927
        %v3936 = vpack.c.b16 %v3935, %v3934
        %vm3938 = vcmask 130048
        %v3940 = vsel %vm3938, %v3925, 0
        %3942 = vmatpush.bf16.msra.mxu0 0
        %3943 = vmatpush.bf16.msra.mxu0 0
        %3944 = vmatpush.bf16.msra.mxu0 0
        %3945 = vmatpush.bf16.msra.mxu0 0
        %3946 = vmatpush.bf16.msra.mxu0 0
        %3947 = vmatpush.bf16.msra.mxu0 0
        %3948 = vmatpush.bf16.msra.mxu0 0
        %3949 = vmatpush.bf16.msra.mxu0 %v3936
        %3950 = vmatmul.bf16.gmra.mxu0 %v3940
        %v3951 = vpop.f32.mrf.mxu0
        %v3952 = vadd.f32 %v3930, %v3951
        %v3953 = vpop.f32.mrf.mxu0
        %3954 = vdwg.mxu0
        %v3955 = vxor.u32 %v3952, 2147483648
        %v3956 = vmul.f32 %v3955, 1.442695
        %v3957 = vpow.pop %v3956
        %v3958 = vadd.f32 %v3957, 1.0
        %v3959 = vrcp.pop %v3958
        %v3960 = vmul.f32 %v3958, %v3959
        %v3961 = vsub.f32 1.0, %v3960
        %v3962 = vmul.f32 %v3959, %v3961
        %v3963 = vadd.f32 %v3959, %v3962
        %vm3964 = vweird.f32 %v3958
        %vm3965 = vweird.f32 %v3959
        %vm3966 = vmor %vm3964, %vm3965
        %v3967 = vsel %vm3966, %v3959, %v3963
        %v3968 = vand.u32 2147483647, %v3958
        %vm3969 = vcmp.eq.f32.partialorder %v3968, 8.507059e+37
        %v3970 = vand.u32 %v3958, 2147483648
        %v3971 = vor.u32 1.1754944e-38, %v3970
        %v3972 = vsel %vm3969, %v3971, %v3967
        %v3973 = vmul.f32 1.0, %v3972
        %v3975 = vrot.slane %v3973, 1
        %v3976 = vrot.slane %v3973, 2
        %v3977 = vrot.slane %v3973, 3
        %v3978 = vperm.slane %v3973, 0
        %v3979 = vperm.slane %v3975, 0
        %v3980 = vperm.slane %v3976, 0
        %v3981 = vperm.slane %v3977, 0
        %v3986 = vmul.f32 %v3707, %v3978
        %v3987 = vmul.f32 %v3708, %v3978
        %v3988 = vmul.f32 %v3709, %v3978
        %v3989 = vmul.f32 %v3710, %v3978
        %v3990 = vmul.f32 %v3711, %v3978
        %v3991 = vmul.f32 %v3712, %v3978
        %v3992 = vmul.f32 %v3713, %v3978
        %v3993 = vmul.f32 %v3714, %v3978
        %v3994 = vmul.f32 %v3715, %v3979
        %v3995 = vmul.f32 %v3716, %v3979
        %v3996 = vmul.f32 %v3717, %v3979
        %v3997 = vmul.f32 %v3718, %v3979
        %v3998 = vmul.f32 %v3719, %v3979
        %v3999 = vmul.f32 %v3720, %v3979
        %v4000 = vmul.f32 %v3721, %v3979
        %v4001 = vmul.f32 %v3722, %v3979
        %v4002 = vmul.f32 %v3723, %v3980
        %v4003 = vmul.f32 %v3724, %v3980
        %v4004 = vmul.f32 %v3725, %v3980
        %v4005 = vmul.f32 %v3726, %v3980
        %v4006 = vmul.f32 %v3727, %v3980
        %v4007 = vmul.f32 %v3728, %v3980
        %v4008 = vmul.f32 %v3729, %v3980
        %v4009 = vmul.f32 %v3730, %v3980
        %v4010 = vmul.f32 %v3731, %v3981
        %v4011 = vmul.f32 %v3732, %v3981
        %v4012 = vmul.f32 %v3733, %v3981
        %v4013 = vmul.f32 %v3734, %v3981
        %v4014 = vmul.f32 %v3735, %v3981
        %v4015 = vmul.f32 %v3736, %v3981
        %v4016 = vmul.f32 %v3737, %v3981
        %v4017 = vmul.f32 %v3738, %v3981
        %v4018 = vpack.c.bf16 %v3987, %v3986
        %v4019 = vpack.c.bf16 %v3989, %v3988
        %v4020 = vpack.c.bf16 %v3991, %v3990
        %v4021 = vpack.c.bf16 %v3993, %v3992
        %v4022 = vpack.c.bf16 %v3995, %v3994
        %v4023 = vpack.c.bf16 %v3997, %v3996
        %v4024 = vpack.c.bf16 %v3999, %v3998
        %v4025 = vpack.c.bf16 %v4001, %v4000
        %v4026 = vpack.c.bf16 %v4003, %v4002
        %v4027 = vpack.c.bf16 %v4005, %v4004
        %v4028 = vpack.c.bf16 %v4007, %v4006
        %v4029 = vpack.c.bf16 %v4009, %v4008
        %v4030 = vpack.c.bf16 %v4011, %v4010
        %v4031 = vpack.c.bf16 %v4013, %v4012
        %v4032 = vpack.c.bf16 %v4015, %v4014
        %v4033 = vpack.c.bf16 %v4017, %v4016
        %v4034 = vld [vmem:[%s6] sm:$0xf]
        %v4035 = vld [vmem:[%s6 + $0x4] sm:$0xf]
        %v4036 = vld [vmem:[%s6 + $0x8] sm:$0xf]
        %v4037 = vld [vmem:[%s6 + $0xc] sm:$0xf]
        %v4038 = vld [vmem:[%s6 + $0x10] sm:$0xf]
        %v4039 = vld [vmem:[%s6 + $0x14] sm:$0xf]
        %v4040 = vld [vmem:[%s6 + $0x18] sm:$0xf]
        %v4041 = vld [vmem:[%s6 + $0x1c] sm:$0xf]
        %v4042 = vld [vmem:[%s10 + $0x5] sm:$0x1]
        %v4044 = vperm.slane %v4042, 0
        %v4054 = vunpack.c.l.b16 %v4034
        %v4055 = vunpack.c.l.b16 %v4035
        %v4056 = vunpack.c.l.b16 %v4036
        %v4057 = vunpack.c.l.b16 %v4037
        %v4058 = vunpack.c.l.b16 %v4038
        %v4059 = vunpack.c.l.b16 %v4039
        %v4060 = vunpack.c.l.b16 %v4040
        %v4061 = vunpack.c.l.b16 %v4041
        %v4062 = vpack.c.b16 %v4055, %v4054
        %v4063 = vpack.c.b16 %v4057, %v4056
        %v4064 = vpack.c.b16 %v4059, %v4058
        %v4065 = vpack.c.b16 %v4061, %v4060
        %v4071 = vsel %vm2047, %v4018, 0
        %v4074 = vsel %vm2047, %v4019, 0
        %v4077 = vsel %vm2047, %v4020, 0
        %v4080 = vsel %vm2047, %v4021, 0
        %v4083 = vsel %vm2047, %v4022, 0
        %v4086 = vsel %vm2047, %v4023, 0
        %v4089 = vsel %vm2047, %v4024, 0
        %v4092 = vsel %vm2047, %v4025, 0
        %v4095 = vsel %vm2047, %v4026, 0
        %v4098 = vsel %vm2047, %v4027, 0
        %v4101 = vsel %vm2047, %v4028, 0
        %v4104 = vsel %vm2047, %v4029, 0
        %v4107 = vsel %vm2047, %v4030, 0
        %v4110 = vsel %vm2047, %v4031, 0
        %v4113 = vsel %vm2047, %v4032, 0
        %v4116 = vsel %vm2047, %v4033, 0
        %4118 = vmatpush.bf16.msra.mxu0 0
        %4119 = vmatpush.bf16.msra.mxu0 0
        %4120 = vmatpush.bf16.msra.mxu0 0
        %4121 = vmatpush.bf16.msra.mxu0 0
        %4122 = vmatpush.bf16.msra.mxu0 %v4065
        %4123 = vmatpush.bf16.msra.mxu0 %v4064
        %4124 = vmatpush.bf16.msra.mxu0 %v4063
        %4125 = vmatpush.bf16.msra.mxu0 %v4062
        %4126 = vmatmul.bf16.gmra.mxu0 %v4071
        %v4127 = vpop.f32.mrf.mxu0
        %v4128 = vadd.f32 %v4044, %v4127
        %v4129 = vpop.f32.mrf.mxu0
        %v4130 = vadd.f32 %v4044, %v4129
        %4131 = vmatmul.bf16.gmra.mxu0 %v4074
        %v4132 = vpop.f32.mrf.mxu0
        %v4133 = vadd.f32 %v4044, %v4132
        %v4134 = vpop.f32.mrf.mxu0
        %v4135 = vadd.f32 %v4044, %v4134
        %4136 = vmatmul.bf16.gmra.mxu0 %v4077
        %v4137 = vpop.f32.mrf.mxu0
        %v4138 = vadd.f32 %v4044, %v4137
        %v4139 = vpop.f32.mrf.mxu0
        %v4140 = vadd.f32 %v4044, %v4139
        %4141 = vmatmul.bf16.gmra.mxu0 %v4080
        %v4142 = vpop.f32.mrf.mxu0
        %v4143 = vadd.f32 %v4044, %v4142
        %v4144 = vpop.f32.mrf.mxu0
        %v4145 = vadd.f32 %v4044, %v4144
        %4146 = vmatmul.bf16.gmra.mxu0 %v4083
        %v4147 = vpop.f32.mrf.mxu0
        %v4148 = vadd.f32 %v4044, %v4147
        %v4149 = vpop.f32.mrf.mxu0
        %v4150 = vadd.f32 %v4044, %v4149
        %4151 = vmatmul.bf16.gmra.mxu0 %v4086
        %v4152 = vpop.f32.mrf.mxu0
        %v4153 = vadd.f32 %v4044, %v4152
        %v4154 = vpop.f32.mrf.mxu0
        %v4155 = vadd.f32 %v4044, %v4154
        %4156 = vmatmul.bf16.gmra.mxu0 %v4089
        %v4157 = vpop.f32.mrf.mxu0
        %v4158 = vadd.f32 %v4044, %v4157
        %v4159 = vpop.f32.mrf.mxu0
        %v4160 = vadd.f32 %v4044, %v4159
        %4161 = vmatmul.bf16.gmra.mxu0 %v4092
        %v4162 = vpop.f32.mrf.mxu0
        %v4163 = vadd.f32 %v4044, %v4162
        %v4164 = vpop.f32.mrf.mxu0
        %v4165 = vadd.f32 %v4044, %v4164
        %4166 = vmatmul.bf16.gmra.mxu0 %v4095
        %v4167 = vpop.f32.mrf.mxu0
        %v4168 = vadd.f32 %v4044, %v4167
        %v4169 = vpop.f32.mrf.mxu0
        %v4170 = vadd.f32 %v4044, %v4169
        %4171 = vmatmul.bf16.gmra.mxu0 %v4098
        %v4172 = vpop.f32.mrf.mxu0
        %v4173 = vadd.f32 %v4044, %v4172
        %v4174 = vpop.f32.mrf.mxu0
        %v4175 = vadd.f32 %v4044, %v4174
        %4176 = vmatmul.bf16.gmra.mxu0 %v4101
        %v4177 = vpop.f32.mrf.mxu0
        %v4178 = vadd.f32 %v4044, %v4177
        %v4179 = vpop.f32.mrf.mxu0
        %v4180 = vadd.f32 %v4044, %v4179
        %4181 = vmatmul.bf16.gmra.mxu0 %v4104
        %v4182 = vpop.f32.mrf.mxu0
        %v4183 = vadd.f32 %v4044, %v4182
        %v4184 = vpop.f32.mrf.mxu0
        %v4185 = vadd.f32 %v4044, %v4184
        %4186 = vmatmul.bf16.gmra.mxu0 %v4107
        %v4187 = vpop.f32.mrf.mxu0
        %v4188 = vadd.f32 %v4044, %v4187
        %v4189 = vpop.f32.mrf.mxu0
        %v4190 = vadd.f32 %v4044, %v4189
        %4191 = vmatmul.bf16.gmra.mxu0 %v4110
        %v4192 = vpop.f32.mrf.mxu0
        %v4193 = vadd.f32 %v4044, %v4192
        %v4194 = vpop.f32.mrf.mxu0
        %v4195 = vadd.f32 %v4044, %v4194
        %4196 = vmatmul.bf16.gmra.mxu0 %v4113
        %v4197 = vpop.f32.mrf.mxu0
        %v4198 = vadd.f32 %v4044, %v4197
        %v4199 = vpop.f32.mrf.mxu0
        %v4200 = vadd.f32 %v4044, %v4199
        %4201 = vmatmul.bf16.gmra.mxu0 %v4116
        %v4202 = vpop.f32.mrf.mxu0
        %v4203 = vadd.f32 %v4044, %v4202
        %v4204 = vpop.f32.mrf.mxu0
        %v4205 = vadd.f32 %v4044, %v4204
        %4206 = vdwg.mxu0
        %v4207 = vpack.c.bf16 %v4130, %v4128
        %v4208 = vpack.c.bf16 %v4135, %v4133
        %v4209 = vpack.c.bf16 %v4140, %v4138
        %v4210 = vpack.c.bf16 %v4145, %v4143
        %v4211 = vpack.c.bf16 %v4150, %v4148
        %v4212 = vpack.c.bf16 %v4155, %v4153
        %v4213 = vpack.c.bf16 %v4160, %v4158
        %v4214 = vpack.c.bf16 %v4165, %v4163
        %v4215 = vpack.c.bf16 %v4170, %v4168
        %v4216 = vpack.c.bf16 %v4175, %v4173
        %v4217 = vpack.c.bf16 %v4180, %v4178
        %v4218 = vpack.c.bf16 %v4185, %v4183
        %v4219 = vpack.c.bf16 %v4190, %v4188
        %v4220 = vpack.c.bf16 %v4195, %v4193
        %v4221 = vpack.c.bf16 %v4200, %v4198
        %v4222 = vpack.c.bf16 %v4205, %v4203
        %v4223 = vld [vmem:[%s7] sm:$0xf]
        %v4224 = vld [vmem:[%s7 + $0x4] sm:$0xf]
        %v4225 = vld [vmem:[%s7 + $0x8] sm:$0xf]
        %v4226 = vld [vmem:[%s7 + $0xc] sm:$0xf]
        %v4227 = vld [vmem:[%s10 + $0x6] sm:$0x1]
        %v4229 = vperm.slane %v4227, 0
        %v4235 = vunpack.c.l.b16 %v4223
        %v4236 = vunpack.c.l.b16 %v4224
        %v4237 = vunpack.c.l.b16 %v4225
        %v4238 = vunpack.c.l.b16 %v4226
        %v4239 = vpack.c.b16 %v4236, %v4235
        %v4240 = vpack.c.b16 %v4238, %v4237
        %v4244 = vsel %vm456, %v4207, 0
        %v4247 = vsel %vm456, %v4208, 0
        %v4250 = vsel %vm456, %v4209, 0
        %v4253 = vsel %vm456, %v4210, 0
        %v4256 = vsel %vm456, %v4211, 0
        %v4259 = vsel %vm456, %v4212, 0
        %v4262 = vsel %vm456, %v4213, 0
        %v4265 = vsel %vm456, %v4214, 0
        %v4268 = vsel %vm456, %v4215, 0
        %v4271 = vsel %vm456, %v4216, 0
        %v4274 = vsel %vm456, %v4217, 0
        %v4277 = vsel %vm456, %v4218, 0
        %v4280 = vsel %vm456, %v4219, 0
        %v4283 = vsel %vm456, %v4220, 0
        %v4286 = vsel %vm456, %v4221, 0
        %v4289 = vsel %vm456, %v4222, 0
        %4291 = vmatpush.bf16.msra.mxu0 0
        %4292 = vmatpush.bf16.msra.mxu0 0
        %4293 = vmatpush.bf16.msra.mxu0 0
        %4294 = vmatpush.bf16.msra.mxu0 0
        %4295 = vmatpush.bf16.msra.mxu0 0
        %4296 = vmatpush.bf16.msra.mxu0 0
        %4297 = vmatpush.bf16.msra.mxu0 %v4240
        %4298 = vmatpush.bf16.msra.mxu0 %v4239
        %4299 = vmatmul.bf16.gmra.mxu0 %v4244
        %v4300 = vpop.f32.mrf.mxu0
        %v4301 = vadd.f32 %v4229, %v4300
        %v4302 = vpop.f32.mrf.mxu0
        %v4303 = vadd.f32 %v4229, %v4302
        %4304 = vmatmul.bf16.gmra.mxu0 %v4247
        %v4305 = vpop.f32.mrf.mxu0
        %v4306 = vadd.f32 %v4229, %v4305
        %v4307 = vpop.f32.mrf.mxu0
        %v4308 = vadd.f32 %v4229, %v4307
        %4309 = vmatmul.bf16.gmra.mxu0 %v4250
        %v4310 = vpop.f32.mrf.mxu0
        %v4311 = vadd.f32 %v4229, %v4310
        %v4312 = vpop.f32.mrf.mxu0
        %v4313 = vadd.f32 %v4229, %v4312
        %4314 = vmatmul.bf16.gmra.mxu0 %v4253
        %v4315 = vpop.f32.mrf.mxu0
        %v4316 = vadd.f32 %v4229, %v4315
        %v4317 = vpop.f32.mrf.mxu0
        %v4318 = vadd.f32 %v4229, %v4317
        %4319 = vmatmul.bf16.gmra.mxu0 %v4256
        %v4320 = vpop.f32.mrf.mxu0
        %v4321 = vadd.f32 %v4229, %v4320
        %v4322 = vpop.f32.mrf.mxu0
        %v4323 = vadd.f32 %v4229, %v4322
        %4324 = vmatmul.bf16.gmra.mxu0 %v4259
        %v4325 = vpop.f32.mrf.mxu0
        %v4326 = vadd.f32 %v4229, %v4325
        %v4327 = vpop.f32.mrf.mxu0
        %v4328 = vadd.f32 %v4229, %v4327
        %4329 = vmatmul.bf16.gmra.mxu0 %v4262
        %v4330 = vpop.f32.mrf.mxu0
        %v4331 = vadd.f32 %v4229, %v4330
        %v4332 = vpop.f32.mrf.mxu0
        %v4333 = vadd.f32 %v4229, %v4332
        %4334 = vmatmul.bf16.gmra.mxu0 %v4265
        %v4335 = vpop.f32.mrf.mxu0
        %v4336 = vadd.f32 %v4229, %v4335
        %v4337 = vpop.f32.mrf.mxu0
        %v4338 = vadd.f32 %v4229, %v4337
        %4339 = vmatmul.bf16.gmra.mxu0 %v4268
        %v4340 = vpop.f32.mrf.mxu0
        %v4341 = vadd.f32 %v4229, %v4340
        %v4342 = vpop.f32.mrf.mxu0
        %v4343 = vadd.f32 %v4229, %v4342
        %4344 = vmatmul.bf16.gmra.mxu0 %v4271
        %v4345 = vpop.f32.mrf.mxu0
        %v4346 = vadd.f32 %v4229, %v4345
        %v4347 = vpop.f32.mrf.mxu0
        %v4348 = vadd.f32 %v4229, %v4347
        %4349 = vmatmul.bf16.gmra.mxu0 %v4274
        %v4350 = vpop.f32.mrf.mxu0
        %v4351 = vadd.f32 %v4229, %v4350
        %v4352 = vpop.f32.mrf.mxu0
        %v4353 = vadd.f32 %v4229, %v4352
        %4354 = vmatmul.bf16.gmra.mxu0 %v4277
        %v4355 = vpop.f32.mrf.mxu0
        %v4356 = vadd.f32 %v4229, %v4355
        %v4357 = vpop.f32.mrf.mxu0
        %v4358 = vadd.f32 %v4229, %v4357
        %4359 = vmatmul.bf16.gmra.mxu0 %v4280
        %v4360 = vpop.f32.mrf.mxu0
        %v4361 = vadd.f32 %v4229, %v4360
        %v4362 = vpop.f32.mrf.mxu0
        %v4363 = vadd.f32 %v4229, %v4362
        %4364 = vmatmul.bf16.gmra.mxu0 %v4283
        %v4365 = vpop.f32.mrf.mxu0
        %v4366 = vadd.f32 %v4229, %v4365
        %v4367 = vpop.f32.mrf.mxu0
        %v4368 = vadd.f32 %v4229, %v4367
        %4369 = vmatmul.bf16.gmra.mxu0 %v4286
        %v4370 = vpop.f32.mrf.mxu0
        %v4371 = vadd.f32 %v4229, %v4370
        %v4372 = vpop.f32.mrf.mxu0
        %v4373 = vadd.f32 %v4229, %v4372
        %4374 = vmatmul.bf16.gmra.mxu0 %v4289
        %v4375 = vpop.f32.mrf.mxu0
        %v4376 = vadd.f32 %v4229, %v4375
        %v4377 = vpop.f32.mrf.mxu0
        %v4378 = vadd.f32 %v4229, %v4377
        %4379 = vdwg.mxu0
        %v4380 = vxor.u32 %v4301, 2147483648
        %v4381 = vxor.u32 %v4303, 2147483648
        %v4382 = vxor.u32 %v4306, 2147483648
        %v4383 = vxor.u32 %v4308, 2147483648
        %v4384 = vxor.u32 %v4311, 2147483648
        %v4385 = vxor.u32 %v4313, 2147483648
        %v4386 = vxor.u32 %v4316, 2147483648
        %v4387 = vxor.u32 %v4318, 2147483648
        %v4388 = vxor.u32 %v4321, 2147483648
        %v4389 = vxor.u32 %v4323, 2147483648
        %v4390 = vxor.u32 %v4326, 2147483648
        %v4391 = vxor.u32 %v4328, 2147483648
        %v4392 = vxor.u32 %v4331, 2147483648
        %v4393 = vxor.u32 %v4333, 2147483648
        %v4394 = vxor.u32 %v4336, 2147483648
        %v4395 = vxor.u32 %v4338, 2147483648
        %v4396 = vxor.u32 %v4341, 2147483648
        %v4397 = vxor.u32 %v4343, 2147483648
        %v4398 = vxor.u32 %v4346, 2147483648
        %v4399 = vxor.u32 %v4348, 2147483648
        %v4400 = vxor.u32 %v4351, 2147483648
        %v4401 = vxor.u32 %v4353, 2147483648
        %v4402 = vxor.u32 %v4356, 2147483648
        %v4403 = vxor.u32 %v4358, 2147483648
        %v4404 = vxor.u32 %v4361, 2147483648
        %v4405 = vxor.u32 %v4363, 2147483648
        %v4406 = vxor.u32 %v4366, 2147483648
        %v4407 = vxor.u32 %v4368, 2147483648
        %v4408 = vxor.u32 %v4371, 2147483648
        %v4409 = vxor.u32 %v4373, 2147483648
        %v4410 = vxor.u32 %v4376, 2147483648
        %v4411 = vxor.u32 %v4378, 2147483648
        %v4412 = vmul.f32 %v4380, 1.442695
        %v4413 = vpow.pop %v4412
        %v4414 = vmul.f32 %v4381, 1.442695
        %v4415 = vpow.pop %v4414
        %v4416 = vmul.f32 %v4382, 1.442695
        %v4417 = vpow.pop %v4416
        %v4418 = vmul.f32 %v4383, 1.442695
        %v4419 = vpow.pop %v4418
        %v4420 = vmul.f32 %v4384, 1.442695
        %v4421 = vpow.pop %v4420
        %v4422 = vmul.f32 %v4385, 1.442695
        %v4423 = vpow.pop %v4422
        %v4424 = vmul.f32 %v4386, 1.442695
        %v4425 = vpow.pop %v4424
        %v4426 = vmul.f32 %v4387, 1.442695
        %v4427 = vpow.pop %v4426
        %v4428 = vmul.f32 %v4388, 1.442695
        %v4429 = vpow.pop %v4428
        %v4430 = vmul.f32 %v4389, 1.442695
        %v4431 = vpow.pop %v4430
        %v4432 = vmul.f32 %v4390, 1.442695
        %v4433 = vpow.pop %v4432
        %v4434 = vmul.f32 %v4391, 1.442695
        %v4435 = vpow.pop %v4434
        %v4436 = vmul.f32 %v4392, 1.442695
        %v4437 = vpow.pop %v4436
        %v4438 = vmul.f32 %v4393, 1.442695
        %v4439 = vpow.pop %v4438
        %v4440 = vmul.f32 %v4394, 1.442695
        %v4441 = vpow.pop %v4440
        %v4442 = vmul.f32 %v4395, 1.442695
        %v4443 = vpow.pop %v4442
        %v4444 = vmul.f32 %v4396, 1.442695
        %v4445 = vpow.pop %v4444
        %v4446 = vmul.f32 %v4397, 1.442695
        %v4447 = vpow.pop %v4446
        %v4448 = vmul.f32 %v4398, 1.442695
        %v4449 = vpow.pop %v4448
        %v4450 = vmul.f32 %v4399, 1.442695
        %v4451 = vpow.pop %v4450
        %v4452 = vmul.f32 %v4400, 1.442695
        %v4453 = vpow.pop %v4452
        %v4454 = vmul.f32 %v4401, 1.442695
        %v4455 = vpow.pop %v4454
        %v4456 = vmul.f32 %v4402, 1.442695
        %v4457 = vpow.pop %v4456
        %v4458 = vmul.f32 %v4403, 1.442695
        %v4459 = vpow.pop %v4458
        %v4460 = vmul.f32 %v4404, 1.442695
        %v4461 = vpow.pop %v4460
        %v4462 = vmul.f32 %v4405, 1.442695
        %v4463 = vpow.pop %v4462
        %v4464 = vmul.f32 %v4406, 1.442695
        %v4465 = vpow.pop %v4464
        %v4466 = vmul.f32 %v4407, 1.442695
        %v4467 = vpow.pop %v4466
        %v4468 = vmul.f32 %v4408, 1.442695
        %v4469 = vpow.pop %v4468
        %v4470 = vmul.f32 %v4409, 1.442695
        %v4471 = vpow.pop %v4470
        %v4472 = vmul.f32 %v4410, 1.442695
        %v4473 = vpow.pop %v4472
        %v4474 = vmul.f32 %v4411, 1.442695
        %v4475 = vpow.pop %v4474
        %v4476 = vadd.f32 %v4413, 1.0
        %v4477 = vadd.f32 %v4415, 1.0
        %v4478 = vadd.f32 %v4417, 1.0
        %v4479 = vadd.f32 %v4419, 1.0
        %v4480 = vadd.f32 %v4421, 1.0
        %v4481 = vadd.f32 %v4423, 1.0
        %v4482 = vadd.f32 %v4425, 1.0
        %v4483 = vadd.f32 %v4427, 1.0
        %v4484 = vadd.f32 %v4429, 1.0
        %v4485 = vadd.f32 %v4431, 1.0
        %v4486 = vadd.f32 %v4433, 1.0
        %v4487 = vadd.f32 %v4435, 1.0
        %v4488 = vadd.f32 %v4437, 1.0
        %v4489 = vadd.f32 %v4439, 1.0
        %v4490 = vadd.f32 %v4441, 1.0
        %v4491 = vadd.f32 %v4443, 1.0
        %v4492 = vadd.f32 %v4445, 1.0
        %v4493 = vadd.f32 %v4447, 1.0
        %v4494 = vadd.f32 %v4449, 1.0
        %v4495 = vadd.f32 %v4451, 1.0
        %v4496 = vadd.f32 %v4453, 1.0
        %v4497 = vadd.f32 %v4455, 1.0
        %v4498 = vadd.f32 %v4457, 1.0
        %v4499 = vadd.f32 %v4459, 1.0
        %v4500 = vadd.f32 %v4461, 1.0
        %v4501 = vadd.f32 %v4463, 1.0
        %v4502 = vadd.f32 %v4465, 1.0
        %v4503 = vadd.f32 %v4467, 1.0
        %v4504 = vadd.f32 %v4469, 1.0
        %v4505 = vadd.f32 %v4471, 1.0
        %v4506 = vadd.f32 %v4473, 1.0
        %v4507 = vadd.f32 %v4475, 1.0
        %v4508 = vrcp.pop %v4476
        %v4509 = vmul.f32 %v4476, %v4508
        %v4510 = vsub.f32 1.0, %v4509
        %v4511 = vmul.f32 %v4508, %v4510
        %v4512 = vadd.f32 %v4508, %v4511
        %vm4513 = vweird.f32 %v4476
        %vm4514 = vweird.f32 %v4508
        %vm4515 = vmor %vm4513, %vm4514
        %v4516 = vsel %vm4515, %v4508, %v4512
        %v4517 = vand.u32 2147483647, %v4476
        %vm4518 = vcmp.eq.f32.partialorder %v4517, 8.507059e+37
        %v4519 = vand.u32 %v4476, 2147483648
        %v4520 = vor.u32 1.1754944e-38, %v4519
        %v4521 = vsel %vm4518, %v4520, %v4516
        %v4522 = vmul.f32 1.0, %v4521
        %v4523 = vrcp.pop %v4477
        %v4524 = vmul.f32 %v4477, %v4523
        %v4525 = vsub.f32 1.0, %v4524
        %v4526 = vmul.f32 %v4523, %v4525
        %v4527 = vadd.f32 %v4523, %v4526
        %vm4528 = vweird.f32 %v4477
        %vm4529 = vweird.f32 %v4523
        %vm4530 = vmor %vm4528, %vm4529
        %v4531 = vsel %vm4530, %v4523, %v4527
        %v4532 = vand.u32 2147483647, %v4477
        %vm4533 = vcmp.eq.f32.partialorder %v4532, 8.507059e+37
        %v4534 = vand.u32 %v4477, 2147483648
        %v4535 = vor.u32 1.1754944e-38, %v4534
        %v4536 = vsel %vm4533, %v4535, %v4531
        %v4537 = vmul.f32 1.0, %v4536
        %v4538 = vrcp.pop %v4478
        %v4539 = vmul.f32 %v4478, %v4538
        %v4540 = vsub.f32 1.0, %v4539
        %v4541 = vmul.f32 %v4538, %v4540
        %v4542 = vadd.f32 %v4538, %v4541
        %vm4543 = vweird.f32 %v4478
        %vm4544 = vweird.f32 %v4538
        %vm4545 = vmor %vm4543, %vm4544
        %v4546 = vsel %vm4545, %v4538, %v4542
        %v4547 = vand.u32 2147483647, %v4478
        %vm4548 = vcmp.eq.f32.partialorder %v4547, 8.507059e+37
        %v4549 = vand.u32 %v4478, 2147483648
        %v4550 = vor.u32 1.1754944e-38, %v4549
        %v4551 = vsel %vm4548, %v4550, %v4546
        %v4552 = vmul.f32 1.0, %v4551
        %v4553 = vrcp.pop %v4479
        %v4554 = vmul.f32 %v4479, %v4553
        %v4555 = vsub.f32 1.0, %v4554
        %v4556 = vmul.f32 %v4553, %v4555
        %v4557 = vadd.f32 %v4553, %v4556
        %vm4558 = vweird.f32 %v4479
        %vm4559 = vweird.f32 %v4553
        %vm4560 = vmor %vm4558, %vm4559
        %v4561 = vsel %vm4560, %v4553, %v4557
        %v4562 = vand.u32 2147483647, %v4479
        %vm4563 = vcmp.eq.f32.partialorder %v4562, 8.507059e+37
        %v4564 = vand.u32 %v4479, 2147483648
        %v4565 = vor.u32 1.1754944e-38, %v4564
        %v4566 = vsel %vm4563, %v4565, %v4561
        %v4567 = vmul.f32 1.0, %v4566
        %v4568 = vrcp.pop %v4480
        %v4569 = vmul.f32 %v4480, %v4568
        %v4570 = vsub.f32 1.0, %v4569
        %v4571 = vmul.f32 %v4568, %v4570
        %v4572 = vadd.f32 %v4568, %v4571
        %vm4573 = vweird.f32 %v4480
        %vm4574 = vweird.f32 %v4568
        %vm4575 = vmor %vm4573, %vm4574
        %v4576 = vsel %vm4575, %v4568, %v4572
        %v4577 = vand.u32 2147483647, %v4480
        %vm4578 = vcmp.eq.f32.partialorder %v4577, 8.507059e+37
        %v4579 = vand.u32 %v4480, 2147483648
        %v4580 = vor.u32 1.1754944e-38, %v4579
        %v4581 = vsel %vm4578, %v4580, %v4576
        %v4582 = vmul.f32 1.0, %v4581
        %v4583 = vrcp.pop %v4481
        %v4584 = vmul.f32 %v4481, %v4583
        %v4585 = vsub.f32 1.0, %v4584
        %v4586 = vmul.f32 %v4583, %v4585
        %v4587 = vadd.f32 %v4583, %v4586
        %vm4588 = vweird.f32 %v4481
        %vm4589 = vweird.f32 %v4583
        %vm4590 = vmor %vm4588, %vm4589
        %v4591 = vsel %vm4590, %v4583, %v4587
        %v4592 = vand.u32 2147483647, %v4481
        %vm4593 = vcmp.eq.f32.partialorder %v4592, 8.507059e+37
        %v4594 = vand.u32 %v4481, 2147483648
        %v4595 = vor.u32 1.1754944e-38, %v4594
        %v4596 = vsel %vm4593, %v4595, %v4591
        %v4597 = vmul.f32 1.0, %v4596
        %v4598 = vrcp.pop %v4482
        %v4599 = vmul.f32 %v4482, %v4598
        %v4600 = vsub.f32 1.0, %v4599
        %v4601 = vmul.f32 %v4598, %v4600
        %v4602 = vadd.f32 %v4598, %v4601
        %vm4603 = vweird.f32 %v4482
        %vm4604 = vweird.f32 %v4598
        %vm4605 = vmor %vm4603, %vm4604
        %v4606 = vsel %vm4605, %v4598, %v4602
        %v4607 = vand.u32 2147483647, %v4482
        %vm4608 = vcmp.eq.f32.partialorder %v4607, 8.507059e+37
        %v4609 = vand.u32 %v4482, 2147483648
        %v4610 = vor.u32 1.1754944e-38, %v4609
        %v4611 = vsel %vm4608, %v4610, %v4606
        %v4612 = vmul.f32 1.0, %v4611
        %v4613 = vrcp.pop %v4483
        %v4614 = vmul.f32 %v4483, %v4613
        %v4615 = vsub.f32 1.0, %v4614
        %v4616 = vmul.f32 %v4613, %v4615
        %v4617 = vadd.f32 %v4613, %v4616
        %vm4618 = vweird.f32 %v4483
        %vm4619 = vweird.f32 %v4613
        %vm4620 = vmor %vm4618, %vm4619
        %v4621 = vsel %vm4620, %v4613, %v4617
        %v4622 = vand.u32 2147483647, %v4483
        %vm4623 = vcmp.eq.f32.partialorder %v4622, 8.507059e+37
        %v4624 = vand.u32 %v4483, 2147483648
        %v4625 = vor.u32 1.1754944e-38, %v4624
        %v4626 = vsel %vm4623, %v4625, %v4621
        %v4627 = vmul.f32 1.0, %v4626
        %v4628 = vrcp.pop %v4484
        %v4629 = vmul.f32 %v4484, %v4628
        %v4630 = vsub.f32 1.0, %v4629
        %v4631 = vmul.f32 %v4628, %v4630
        %v4632 = vadd.f32 %v4628, %v4631
        %vm4633 = vweird.f32 %v4484
        %vm4634 = vweird.f32 %v4628
        %vm4635 = vmor %vm4633, %vm4634
        %v4636 = vsel %vm4635, %v4628, %v4632
        %v4637 = vand.u32 2147483647, %v4484
        %vm4638 = vcmp.eq.f32.partialorder %v4637, 8.507059e+37
        %v4639 = vand.u32 %v4484, 2147483648
        %v4640 = vor.u32 1.1754944e-38, %v4639
        %v4641 = vsel %vm4638, %v4640, %v4636
        %v4642 = vmul.f32 1.0, %v4641
        %v4643 = vrcp.pop %v4485
        %v4644 = vmul.f32 %v4485, %v4643
        %v4645 = vsub.f32 1.0, %v4644
        %v4646 = vmul.f32 %v4643, %v4645
        %v4647 = vadd.f32 %v4643, %v4646
        %vm4648 = vweird.f32 %v4485
        %vm4649 = vweird.f32 %v4643
        %vm4650 = vmor %vm4648, %vm4649
        %v4651 = vsel %vm4650, %v4643, %v4647
        %v4652 = vand.u32 2147483647, %v4485
        %vm4653 = vcmp.eq.f32.partialorder %v4652, 8.507059e+37
        %v4654 = vand.u32 %v4485, 2147483648
        %v4655 = vor.u32 1.1754944e-38, %v4654
        %v4656 = vsel %vm4653, %v4655, %v4651
        %v4657 = vmul.f32 1.0, %v4656
        %v4658 = vrcp.pop %v4486
        %v4659 = vmul.f32 %v4486, %v4658
        %v4660 = vsub.f32 1.0, %v4659
        %v4661 = vmul.f32 %v4658, %v4660
        %v4662 = vadd.f32 %v4658, %v4661
        %vm4663 = vweird.f32 %v4486
        %vm4664 = vweird.f32 %v4658
        %vm4665 = vmor %vm4663, %vm4664
        %v4666 = vsel %vm4665, %v4658, %v4662
        %v4667 = vand.u32 2147483647, %v4486
        %vm4668 = vcmp.eq.f32.partialorder %v4667, 8.507059e+37
        %v4669 = vand.u32 %v4486, 2147483648
        %v4670 = vor.u32 1.1754944e-38, %v4669
        %v4671 = vsel %vm4668, %v4670, %v4666
        %v4672 = vmul.f32 1.0, %v4671
        %v4673 = vrcp.pop %v4487
        %v4674 = vmul.f32 %v4487, %v4673
        %v4675 = vsub.f32 1.0, %v4674
        %v4676 = vmul.f32 %v4673, %v4675
        %v4677 = vadd.f32 %v4673, %v4676
        %vm4678 = vweird.f32 %v4487
        %vm4679 = vweird.f32 %v4673
        %vm4680 = vmor %vm4678, %vm4679
        %v4681 = vsel %vm4680, %v4673, %v4677
        %v4682 = vand.u32 2147483647, %v4487
        %vm4683 = vcmp.eq.f32.partialorder %v4682, 8.507059e+37
        %v4684 = vand.u32 %v4487, 2147483648
        %v4685 = vor.u32 1.1754944e-38, %v4684
        %v4686 = vsel %vm4683, %v4685, %v4681
        %v4687 = vmul.f32 1.0, %v4686
        %v4688 = vrcp.pop %v4488
        %v4689 = vmul.f32 %v4488, %v4688
        %v4690 = vsub.f32 1.0, %v4689
        %v4691 = vmul.f32 %v4688, %v4690
        %v4692 = vadd.f32 %v4688, %v4691
        %vm4693 = vweird.f32 %v4488
        %vm4694 = vweird.f32 %v4688
        %vm4695 = vmor %vm4693, %vm4694
        %v4696 = vsel %vm4695, %v4688, %v4692
        %v4697 = vand.u32 2147483647, %v4488
        %vm4698 = vcmp.eq.f32.partialorder %v4697, 8.507059e+37
        %v4699 = vand.u32 %v4488, 2147483648
        %v4700 = vor.u32 1.1754944e-38, %v4699
        %v4701 = vsel %vm4698, %v4700, %v4696
        %v4702 = vmul.f32 1.0, %v4701
        %v4703 = vrcp.pop %v4489
        %v4704 = vmul.f32 %v4489, %v4703
        %v4705 = vsub.f32 1.0, %v4704
        %v4706 = vmul.f32 %v4703, %v4705
        %v4707 = vadd.f32 %v4703, %v4706
        %vm4708 = vweird.f32 %v4489
        %vm4709 = vweird.f32 %v4703
        %vm4710 = vmor %vm4708, %vm4709
        %v4711 = vsel %vm4710, %v4703, %v4707
        %v4712 = vand.u32 2147483647, %v4489
        %vm4713 = vcmp.eq.f32.partialorder %v4712, 8.507059e+37
        %v4714 = vand.u32 %v4489, 2147483648
        %v4715 = vor.u32 1.1754944e-38, %v4714
        %v4716 = vsel %vm4713, %v4715, %v4711
        %v4717 = vmul.f32 1.0, %v4716
        %v4718 = vrcp.pop %v4490
        %v4719 = vmul.f32 %v4490, %v4718
        %v4720 = vsub.f32 1.0, %v4719
        %v4721 = vmul.f32 %v4718, %v4720
        %v4722 = vadd.f32 %v4718, %v4721
        %vm4723 = vweird.f32 %v4490
        %vm4724 = vweird.f32 %v4718
        %vm4725 = vmor %vm4723, %vm4724
        %v4726 = vsel %vm4725, %v4718, %v4722
        %v4727 = vand.u32 2147483647, %v4490
        %vm4728 = vcmp.eq.f32.partialorder %v4727, 8.507059e+37
        %v4729 = vand.u32 %v4490, 2147483648
        %v4730 = vor.u32 1.1754944e-38, %v4729
        %v4731 = vsel %vm4728, %v4730, %v4726
        %v4732 = vmul.f32 1.0, %v4731
        %v4733 = vrcp.pop %v4491
        %v4734 = vmul.f32 %v4491, %v4733
        %v4735 = vsub.f32 1.0, %v4734
        %v4736 = vmul.f32 %v4733, %v4735
        %v4737 = vadd.f32 %v4733, %v4736
        %vm4738 = vweird.f32 %v4491
        %vm4739 = vweird.f32 %v4733
        %vm4740 = vmor %vm4738, %vm4739
        %v4741 = vsel %vm4740, %v4733, %v4737
        %v4742 = vand.u32 2147483647, %v4491
        %vm4743 = vcmp.eq.f32.partialorder %v4742, 8.507059e+37
        %v4744 = vand.u32 %v4491, 2147483648
        %v4745 = vor.u32 1.1754944e-38, %v4744
        %v4746 = vsel %vm4743, %v4745, %v4741
        %v4747 = vmul.f32 1.0, %v4746
        %v4748 = vrcp.pop %v4492
        %v4749 = vmul.f32 %v4492, %v4748
        %v4750 = vsub.f32 1.0, %v4749
        %v4751 = vmul.f32 %v4748, %v4750
        %v4752 = vadd.f32 %v4748, %v4751
        %vm4753 = vweird.f32 %v4492
        %vm4754 = vweird.f32 %v4748
        %vm4755 = vmor %vm4753, %vm4754
        %v4756 = vsel %vm4755, %v4748, %v4752
        %v4757 = vand.u32 2147483647, %v4492
        %vm4758 = vcmp.eq.f32.partialorder %v4757, 8.507059e+37
        %v4759 = vand.u32 %v4492, 2147483648
        %v4760 = vor.u32 1.1754944e-38, %v4759
        %v4761 = vsel %vm4758, %v4760, %v4756
        %v4762 = vmul.f32 1.0, %v4761
        %v4763 = vrcp.pop %v4493
        %v4764 = vmul.f32 %v4493, %v4763
        %v4765 = vsub.f32 1.0, %v4764
        %v4766 = vmul.f32 %v4763, %v4765
        %v4767 = vadd.f32 %v4763, %v4766
        %vm4768 = vweird.f32 %v4493
        %vm4769 = vweird.f32 %v4763
        %vm4770 = vmor %vm4768, %vm4769
        %v4771 = vsel %vm4770, %v4763, %v4767
        %v4772 = vand.u32 2147483647, %v4493
        %vm4773 = vcmp.eq.f32.partialorder %v4772, 8.507059e+37
        %v4774 = vand.u32 %v4493, 2147483648
        %v4775 = vor.u32 1.1754944e-38, %v4774
        %v4776 = vsel %vm4773, %v4775, %v4771
        %v4777 = vmul.f32 1.0, %v4776
        %v4778 = vrcp.pop %v4494
        %v4779 = vmul.f32 %v4494, %v4778
        %v4780 = vsub.f32 1.0, %v4779
        %v4781 = vmul.f32 %v4778, %v4780
        %v4782 = vadd.f32 %v4778, %v4781
        %vm4783 = vweird.f32 %v4494
        %vm4784 = vweird.f32 %v4778
        %vm4785 = vmor %vm4783, %vm4784
        %v4786 = vsel %vm4785, %v4778, %v4782
        %v4787 = vand.u32 2147483647, %v4494
        %vm4788 = vcmp.eq.f32.partialorder %v4787, 8.507059e+37
        %v4789 = vand.u32 %v4494, 2147483648
        %v4790 = vor.u32 1.1754944e-38, %v4789
        %v4791 = vsel %vm4788, %v4790, %v4786
        %v4792 = vmul.f32 1.0, %v4791
        %v4793 = vrcp.pop %v4495
        %v4794 = vmul.f32 %v4495, %v4793
        %v4795 = vsub.f32 1.0, %v4794
        %v4796 = vmul.f32 %v4793, %v4795
        %v4797 = vadd.f32 %v4793, %v4796
        %vm4798 = vweird.f32 %v4495
        %vm4799 = vweird.f32 %v4793
        %vm4800 = vmor %vm4798, %vm4799
        %v4801 = vsel %vm4800, %v4793, %v4797
        %v4802 = vand.u32 2147483647, %v4495
        %vm4803 = vcmp.eq.f32.partialorder %v4802, 8.507059e+37
        %v4804 = vand.u32 %v4495, 2147483648
        %v4805 = vor.u32 1.1754944e-38, %v4804
        %v4806 = vsel %vm4803, %v4805, %v4801
        %v4807 = vmul.f32 1.0, %v4806
        %v4808 = vrcp.pop %v4496
        %v4809 = vmul.f32 %v4496, %v4808
        %v4810 = vsub.f32 1.0, %v4809
        %v4811 = vmul.f32 %v4808, %v4810
        %v4812 = vadd.f32 %v4808, %v4811
        %vm4813 = vweird.f32 %v4496
        %vm4814 = vweird.f32 %v4808
        %vm4815 = vmor %vm4813, %vm4814
        %v4816 = vsel %vm4815, %v4808, %v4812
        %v4817 = vand.u32 2147483647, %v4496
        %vm4818 = vcmp.eq.f32.partialorder %v4817, 8.507059e+37
        %v4819 = vand.u32 %v4496, 2147483648
        %v4820 = vor.u32 1.1754944e-38, %v4819
        %v4821 = vsel %vm4818, %v4820, %v4816
        %v4822 = vmul.f32 1.0, %v4821
        %v4823 = vrcp.pop %v4497
        %v4824 = vmul.f32 %v4497, %v4823
        %v4825 = vsub.f32 1.0, %v4824
        %v4826 = vmul.f32 %v4823, %v4825
        %v4827 = vadd.f32 %v4823, %v4826
        %vm4828 = vweird.f32 %v4497
        %vm4829 = vweird.f32 %v4823
        %vm4830 = vmor %vm4828, %vm4829
        %v4831 = vsel %vm4830, %v4823, %v4827
        %v4832 = vand.u32 2147483647, %v4497
        %vm4833 = vcmp.eq.f32.partialorder %v4832, 8.507059e+37
        %v4834 = vand.u32 %v4497, 2147483648
        %v4835 = vor.u32 1.1754944e-38, %v4834
        %v4836 = vsel %vm4833, %v4835, %v4831
        %v4837 = vmul.f32 1.0, %v4836
        %v4838 = vrcp.pop %v4498
        %v4839 = vmul.f32 %v4498, %v4838
        %v4840 = vsub.f32 1.0, %v4839
        %v4841 = vmul.f32 %v4838, %v4840
        %v4842 = vadd.f32 %v4838, %v4841
        %vm4843 = vweird.f32 %v4498
        %vm4844 = vweird.f32 %v4838
        %vm4845 = vmor %vm4843, %vm4844
        %v4846 = vsel %vm4845, %v4838, %v4842
        %v4847 = vand.u32 2147483647, %v4498
        %vm4848 = vcmp.eq.f32.partialorder %v4847, 8.507059e+37
        %v4849 = vand.u32 %v4498, 2147483648
        %v4850 = vor.u32 1.1754944e-38, %v4849
        %v4851 = vsel %vm4848, %v4850, %v4846
        %v4852 = vmul.f32 1.0, %v4851
        %v4853 = vrcp.pop %v4499
        %v4854 = vmul.f32 %v4499, %v4853
        %v4855 = vsub.f32 1.0, %v4854
        %v4856 = vmul.f32 %v4853, %v4855
        %v4857 = vadd.f32 %v4853, %v4856
        %vm4858 = vweird.f32 %v4499
        %vm4859 = vweird.f32 %v4853
        %vm4860 = vmor %vm4858, %vm4859
        %v4861 = vsel %vm4860, %v4853, %v4857
        %v4862 = vand.u32 2147483647, %v4499
        %vm4863 = vcmp.eq.f32.partialorder %v4862, 8.507059e+37
        %v4864 = vand.u32 %v4499, 2147483648
        %v4865 = vor.u32 1.1754944e-38, %v4864
        %v4866 = vsel %vm4863, %v4865, %v4861
        %v4867 = vmul.f32 1.0, %v4866
        %v4868 = vrcp.pop %v4500
        %v4869 = vmul.f32 %v4500, %v4868
        %v4870 = vsub.f32 1.0, %v4869
        %v4871 = vmul.f32 %v4868, %v4870
        %v4872 = vadd.f32 %v4868, %v4871
        %vm4873 = vweird.f32 %v4500
        %vm4874 = vweird.f32 %v4868
        %vm4875 = vmor %vm4873, %vm4874
        %v4876 = vsel %vm4875, %v4868, %v4872
        %v4877 = vand.u32 2147483647, %v4500
        %vm4878 = vcmp.eq.f32.partialorder %v4877, 8.507059e+37
        %v4879 = vand.u32 %v4500, 2147483648
        %v4880 = vor.u32 1.1754944e-38, %v4879
        %v4881 = vsel %vm4878, %v4880, %v4876
        %v4882 = vmul.f32 1.0, %v4881
        %v4883 = vrcp.pop %v4501
        %v4884 = vmul.f32 %v4501, %v4883
        %v4885 = vsub.f32 1.0, %v4884
        %v4886 = vmul.f32 %v4883, %v4885
        %v4887 = vadd.f32 %v4883, %v4886
        %vm4888 = vweird.f32 %v4501
        %vm4889 = vweird.f32 %v4883
        %vm4890 = vmor %vm4888, %vm4889
        %v4891 = vsel %vm4890, %v4883, %v4887
        %v4892 = vand.u32 2147483647, %v4501
        %vm4893 = vcmp.eq.f32.partialorder %v4892, 8.507059e+37
        %v4894 = vand.u32 %v4501, 2147483648
        %v4895 = vor.u32 1.1754944e-38, %v4894
        %v4896 = vsel %vm4893, %v4895, %v4891
        %v4897 = vmul.f32 1.0, %v4896
        %v4898 = vrcp.pop %v4502
        %v4899 = vmul.f32 %v4502, %v4898
        %v4900 = vsub.f32 1.0, %v4899
        %v4901 = vmul.f32 %v4898, %v4900
        %v4902 = vadd.f32 %v4898, %v4901
        %vm4903 = vweird.f32 %v4502
        %vm4904 = vweird.f32 %v4898
        %vm4905 = vmor %vm4903, %vm4904
        %v4906 = vsel %vm4905, %v4898, %v4902
        %v4907 = vand.u32 2147483647, %v4502
        %vm4908 = vcmp.eq.f32.partialorder %v4907, 8.507059e+37
        %v4909 = vand.u32 %v4502, 2147483648
        %v4910 = vor.u32 1.1754944e-38, %v4909
        %v4911 = vsel %vm4908, %v4910, %v4906
        %v4912 = vmul.f32 1.0, %v4911
        %v4913 = vrcp.pop %v4503
        %v4914 = vmul.f32 %v4503, %v4913
        %v4915 = vsub.f32 1.0, %v4914
        %v4916 = vmul.f32 %v4913, %v4915
        %v4917 = vadd.f32 %v4913, %v4916
        %vm4918 = vweird.f32 %v4503
        %vm4919 = vweird.f32 %v4913
        %vm4920 = vmor %vm4918, %vm4919
        %v4921 = vsel %vm4920, %v4913, %v4917
        %v4922 = vand.u32 2147483647, %v4503
        %vm4923 = vcmp.eq.f32.partialorder %v4922, 8.507059e+37
        %v4924 = vand.u32 %v4503, 2147483648
        %v4925 = vor.u32 1.1754944e-38, %v4924
        %v4926 = vsel %vm4923, %v4925, %v4921
        %v4927 = vmul.f32 1.0, %v4926
        %v4928 = vrcp.pop %v4504
        %v4929 = vmul.f32 %v4504, %v4928
        %v4930 = vsub.f32 1.0, %v4929
        %v4931 = vmul.f32 %v4928, %v4930
        %v4932 = vadd.f32 %v4928, %v4931
        %vm4933 = vweird.f32 %v4504
        %vm4934 = vweird.f32 %v4928
        %vm4935 = vmor %vm4933, %vm4934
        %v4936 = vsel %vm4935, %v4928, %v4932
        %v4937 = vand.u32 2147483647, %v4504
        %vm4938 = vcmp.eq.f32.partialorder %v4937, 8.507059e+37
        %v4939 = vand.u32 %v4504, 2147483648
        %v4940 = vor.u32 1.1754944e-38, %v4939
        %v4941 = vsel %vm4938, %v4940, %v4936
        %v4942 = vmul.f32 1.0, %v4941
        %v4943 = vrcp.pop %v4505
        %v4944 = vmul.f32 %v4505, %v4943
        %v4945 = vsub.f32 1.0, %v4944
        %v4946 = vmul.f32 %v4943, %v4945
        %v4947 = vadd.f32 %v4943, %v4946
        %vm4948 = vweird.f32 %v4505
        %vm4949 = vweird.f32 %v4943
        %vm4950 = vmor %vm4948, %vm4949
        %v4951 = vsel %vm4950, %v4943, %v4947
        %v4952 = vand.u32 2147483647, %v4505
        %vm4953 = vcmp.eq.f32.partialorder %v4952, 8.507059e+37
        %v4954 = vand.u32 %v4505, 2147483648
        %v4955 = vor.u32 1.1754944e-38, %v4954
        %v4956 = vsel %vm4953, %v4955, %v4951
        %v4957 = vmul.f32 1.0, %v4956
        %v4958 = vrcp.pop %v4506
        %v4959 = vmul.f32 %v4506, %v4958
        %v4960 = vsub.f32 1.0, %v4959
        %v4961 = vmul.f32 %v4958, %v4960
        %v4962 = vadd.f32 %v4958, %v4961
        %vm4963 = vweird.f32 %v4506
        %vm4964 = vweird.f32 %v4958
        %vm4965 = vmor %vm4963, %vm4964
        %v4966 = vsel %vm4965, %v4958, %v4962
        %v4967 = vand.u32 2147483647, %v4506
        %vm4968 = vcmp.eq.f32.partialorder %v4967, 8.507059e+37
        %v4969 = vand.u32 %v4506, 2147483648
        %v4970 = vor.u32 1.1754944e-38, %v4969
        %v4971 = vsel %vm4968, %v4970, %v4966
        %v4972 = vmul.f32 1.0, %v4971
        %v4973 = vrcp.pop %v4507
        %v4974 = vmul.f32 %v4507, %v4973
        %v4975 = vsub.f32 1.0, %v4974
        %v4976 = vmul.f32 %v4973, %v4975
        %v4977 = vadd.f32 %v4973, %v4976
        %vm4978 = vweird.f32 %v4507
        %vm4979 = vweird.f32 %v4973
        %vm4980 = vmor %vm4978, %vm4979
        %v4981 = vsel %vm4980, %v4973, %v4977
        %v4982 = vand.u32 2147483647, %v4507
        %vm4983 = vcmp.eq.f32.partialorder %v4982, 8.507059e+37
        %v4984 = vand.u32 %v4507, 2147483648
        %v4985 = vor.u32 1.1754944e-38, %v4984
        %v4986 = vsel %vm4983, %v4985, %v4981
        %v4987 = vmul.f32 1.0, %v4986
        %v4988 = vmul.f32 %v4301, %v4522
        %v4989 = vmul.f32 %v4303, %v4537
        %v4990 = vmul.f32 %v4306, %v4552
        %v4991 = vmul.f32 %v4308, %v4567
        %v4992 = vmul.f32 %v4311, %v4582
        %v4993 = vmul.f32 %v4313, %v4597
        %v4994 = vmul.f32 %v4316, %v4612
        %v4995 = vmul.f32 %v4318, %v4627
        %v4996 = vmul.f32 %v4321, %v4642
        %v4997 = vmul.f32 %v4323, %v4657
        %v4998 = vmul.f32 %v4326, %v4672
        %v4999 = vmul.f32 %v4328, %v4687
        %v5000 = vmul.f32 %v4331, %v4702
        %v5001 = vmul.f32 %v4333, %v4717
        %v5002 = vmul.f32 %v4336, %v4732
        %v5003 = vmul.f32 %v4338, %v4747
        %v5004 = vmul.f32 %v4341, %v4762
        %v5005 = vmul.f32 %v4343, %v4777
        %v5006 = vmul.f32 %v4346, %v4792
        %v5007 = vmul.f32 %v4348, %v4807
        %v5008 = vmul.f32 %v4351, %v4822
        %v5009 = vmul.f32 %v4353, %v4837
        %v5010 = vmul.f32 %v4356, %v4852
        %v5011 = vmul.f32 %v4358, %v4867
        %v5012 = vmul.f32 %v4361, %v4882
        %v5013 = vmul.f32 %v4363, %v4897
        %v5014 = vmul.f32 %v4366, %v4912
        %v5015 = vmul.f32 %v4368, %v4927
        %v5016 = vmul.f32 %v4371, %v4942
        %v5017 = vmul.f32 %v4373, %v4957
        %v5018 = vmul.f32 %v4376, %v4972
        %v5019 = vmul.f32 %v4378, %v4987
        %v5020 = vadd.f32 %v4988, %v4989
        %v5021 = vadd.f32 %v5020, %v4990
        %v5022 = vadd.f32 %v5021, %v4991
        %v5023 = vadd.f32 %v5022, %v4992
        %v5024 = vadd.f32 %v5023, %v4993
        %v5025 = vadd.f32 %v5024, %v4994
        %v5026 = vadd.f32 %v5025, %v4995
        %v5027 = vrot.slane %v5026, 4
        %v5028 = vadd.f32 %v5026, %v5027
        %v5029 = vrot.slane %v5028, 2
        %v5030 = vadd.f32 %v5028, %v5029
        %v5031 = vrot.slane %v5030, 1
        %v5032 = vadd.f32 %v5030, %v5031
        %v5033 = vadd.f32 %v4996, %v4997
        %v5034 = vadd.f32 %v5033, %v4998
        %v5035 = vadd.f32 %v5034, %v4999
        %v5036 = vadd.f32 %v5035, %v5000
        %v5037 = vadd.f32 %v5036, %v5001
        %v5038 = vadd.f32 %v5037, %v5002
        %v5039 = vadd.f32 %v5038, %v5003
        %v5040 = vrot.slane %v5039, 4
        %v5041 = vadd.f32 %v5039, %v5040
        %v5042 = vrot.slane %v5041, 2
        %v5043 = vadd.f32 %v5041, %v5042
        %v5044 = vrot.slane %v5043, 1
        %v5045 = vadd.f32 %v5043, %v5044
        %v5046 = vadd.f32 %v5004, %v5005
        %v5047 = vadd.f32 %v5046, %v5006
        %v5048 = vadd.f32 %v5047, %v5007
        %v5049 = vadd.f32 %v5048, %v5008
        %v5050 = vadd.f32 %v5049, %v5009
        %v5051 = vadd.f32 %v5050, %v5010
        %v5052 = vadd.f32 %v5051, %v5011
        %v5053 = vrot.slane %v5052, 4
        %v5054 = vadd.f32 %v5052, %v5053
        %v5055 = vrot.slane %v5054, 2
        %v5056 = vadd.f32 %v5054, %v5055
        %v5057 = vrot.slane %v5056, 1
        %v5058 = vadd.f32 %v5056, %v5057
        %v5059 = vadd.f32 %v5012, %v5013
        %v5060 = vadd.f32 %v5059, %v5014
        %v5061 = vadd.f32 %v5060, %v5015
        %v5062 = vadd.f32 %v5061, %v5016
        %v5063 = vadd.f32 %v5062, %v5017
        %v5064 = vadd.f32 %v5063, %v5018
        %v5065 = vadd.f32 %v5064, %v5019
        %v5066 = vrot.slane %v5065, 4
        %v5067 = vadd.f32 %v5065, %v5066
        %v5068 = vrot.slane %v5067, 2
        %v5069 = vadd.f32 %v5067, %v5068
        %v5070 = vrot.slane %v5069, 1
        %v5071 = vadd.f32 %v5069, %v5070
        %v5072 = vmul.f32 %v5032, %v3829
        %v5073 = vmul.f32 %v5045, %v3829
        %v5074 = vmul.f32 %v5058, %v3829
        %v5075 = vmul.f32 %v5071, %v3829
        %v5076 = vpack.c.bf16 %v5072, %v5072
        %v5077 = vpack.c.bf16 %v5073, %v5073
        %v5078 = vpack.c.bf16 %v5074, %v5074
        %v5079 = vpack.c.bf16 %v5075, %v5075
        %v5080 = vld [vmem:[%s8] sm:$0xf]
        %v5081 = vld [vmem:[%s8 + $0x4] sm:$0xf]
        %v5082 = vld [vmem:[%s8 + $0x8] sm:$0xf]
        %v5083 = vld [vmem:[%s8 + $0xc] sm:$0xf]
        %v5084 = vld [vmem:[%s8 + $0x10] sm:$0xf]
        %v5085 = vld [vmem:[%s8 + $0x14] sm:$0xf]
        %v5086 = vld [vmem:[%s8 + $0x18] sm:$0xf]
        %v5087 = vld [vmem:[%s8 + $0x1c] sm:$0xf]
        %v5088 = vld [vmem:[%s8 + $0x20] sm:$0xf]
        %v5089 = vld [vmem:[%s8 + $0x24] sm:$0xf]
        %v5090 = vld [vmem:[%s8 + $0x28] sm:$0xf]
        %v5091 = vld [vmem:[%s8 + $0x2c] sm:$0xf]
        %v5092 = vld [vmem:[%s8 + $0x30] sm:$0xf]
        %v5093 = vld [vmem:[%s8 + $0x34] sm:$0xf]
        %v5094 = vld [vmem:[%s8 + $0x38] sm:$0xf]
        %v5095 = vld [vmem:[%s8 + $0x3c] sm:$0xf]
        %v5096 = vld [vmem:[%s10 + $0x7] sm:$0x1]
        %v5098 = vperm.slane %v5096, 0
        %v5104 = vunpack.c.l.b16 %v5076
        %v5105 = vunpack.c.l.b16 %v5077
        %v5106 = vunpack.c.l.b16 %v5078
        %v5107 = vunpack.c.l.b16 %v5079
        %v5108 = vsel %vm3858, %v5105, %v5104
        %v5109 = vsel %vm3860, %v5106, %v5108
        %v5110 = vsel %vm3862, %v5107, %v5109
        %v5111 = vpack.c.b16 %v5110, %v5110
        %v5129 = vunpack.c.l.b16 %v5080
        %v5130 = vunpack.c.l.b16 %v5081
        %v5131 = vunpack.c.l.b16 %v5082
        %v5132 = vunpack.c.l.b16 %v5083
        %v5133 = vunpack.c.l.b16 %v5084
        %v5134 = vunpack.c.l.b16 %v5085
        %v5135 = vunpack.c.l.b16 %v5086
        %v5136 = vunpack.c.l.b16 %v5087
        %v5137 = vunpack.c.l.b16 %v5088
        %v5138 = vunpack.c.l.b16 %v5089
        %v5139 = vunpack.c.l.b16 %v5090
        %v5140 = vunpack.c.l.b16 %v5091
        %v5141 = vunpack.c.l.b16 %v5092
        %v5142 = vunpack.c.l.b16 %v5093
        %v5143 = vunpack.c.l.b16 %v5094
        %v5144 = vunpack.c.l.b16 %v5095
        %v5145 = vpack.c.b16 %v5130, %v5129
        %v5146 = vpack.c.b16 %v5132, %v5131
        %v5147 = vpack.c.b16 %v5134, %v5133
        %v5148 = vpack.c.b16 %v5136, %v5135
        %v5149 = vpack.c.b16 %v5138, %v5137
        %v5150 = vpack.c.b16 %v5140, %v5139
        %v5151 = vpack.c.b16 %v5142, %v5141
        %v5152 = vpack.c.b16 %v5144, %v5143
        %5161 = vmatpush.bf16.msra.mxu0 %v5152
        %5162 = vmatpush.bf16.msra.mxu0 %v5151
        %5163 = vmatpush.bf16.msra.mxu0 %v5150
        %5164 = vmatpush.bf16.msra.mxu0 %v5149
        %5165 = vmatpush.bf16.msra.mxu0 %v5148
        %5166 = vmatpush.bf16.msra.mxu0 %v5147
        %5167 = vmatpush.bf16.msra.mxu0 %v5146
        %5168 = vmatpush.bf16.msra.mxu0 %v5145
        %5169 = vmatmul.bf16.gmra.mxu0 %v5111
        %v5170 = vpop.f32.mrf.mxu0
        %v5171 = vadd.f32 %v5098, %v5170
        %v5172 = vpop.f32.mrf.mxu0
        %5173 = vdwg.mxu0
        %v5174 = vmax.f32 %v5171, 0.0
        %v5175 = vpack.c.bf16 %v5174, %v5174
        %v5176 = vld [vmem:[%s9] sm:$0xf]
        %v5177 = vld [vmem:[%s9 + $0x4] sm:$0xf]
        %v5178 = vld [vmem:[%s9 + $0x8] sm:$0xf]
        %v5179 = vld [vmem:[%s9 + $0xc] sm:$0xf]
        %v5180 = vld [vmem:[%s9 + $0x10] sm:$0xf]
        %v5181 = vld [vmem:[%s9 + $0x14] sm:$0xf]
        %v5182 = vld [vmem:[%s9 + $0x18] sm:$0xf]
        %v5183 = vld [vmem:[%s9 + $0x1c] sm:$0xf]
        %v5184 = vld [vmem:[%s9 + $0x20] sm:$0xf]
        %v5185 = vld [vmem:[%s9 + $0x24] sm:$0xf]
        %v5186 = vld [vmem:[%s9 + $0x28] sm:$0xf]
        %v5187 = vld [vmem:[%s9 + $0x2c] sm:$0xf]
        %v5188 = vld [vmem:[%s9 + $0x30] sm:$0xf]
        %v5189 = vld [vmem:[%s9 + $0x34] sm:$0xf]
        %v5190 = vld [vmem:[%s9 + $0x38] sm:$0xf]
        %v5191 = vld [vmem:[%s9 + $0x3c] sm:$0xf]
        %v5192 = vld [vmem:[%s10 + $0x8] sm:$0x1]
        %v5194 = vperm.slane %v5192, 0
        %v5212 = vunpack.c.l.b16 %v5176
        %v5213 = vunpack.c.l.b16 %v5177
        %v5214 = vunpack.c.l.b16 %v5178
        %v5215 = vunpack.c.l.b16 %v5179
        %v5216 = vunpack.c.l.b16 %v5180
        %v5217 = vunpack.c.l.b16 %v5181
        %v5218 = vunpack.c.l.b16 %v5182
        %v5219 = vunpack.c.l.b16 %v5183
        %v5220 = vunpack.c.l.b16 %v5184
        %v5221 = vunpack.c.l.b16 %v5185
        %v5222 = vunpack.c.l.b16 %v5186
        %v5223 = vunpack.c.l.b16 %v5187
        %v5224 = vunpack.c.l.b16 %v5188
        %v5225 = vunpack.c.l.b16 %v5189
        %v5226 = vunpack.c.l.b16 %v5190
        %v5227 = vunpack.c.l.b16 %v5191
        %v5228 = vpack.c.b16 %v5213, %v5212
        %v5229 = vpack.c.b16 %v5215, %v5214
        %v5230 = vpack.c.b16 %v5217, %v5216
        %v5231 = vpack.c.b16 %v5219, %v5218
        %v5232 = vpack.c.b16 %v5221, %v5220
        %v5233 = vpack.c.b16 %v5223, %v5222
        %v5234 = vpack.c.b16 %v5225, %v5224
        %v5235 = vpack.c.b16 %v5227, %v5226
        %5244 = vmatpush.bf16.msra.mxu0 %v5235
        %5245 = vmatpush.bf16.msra.mxu0 %v5234
        %5246 = vmatpush.bf16.msra.mxu0 %v5233
        %5247 = vmatpush.bf16.msra.mxu0 %v5232
        %5248 = vmatpush.bf16.msra.mxu0 %v5231
        %5249 = vmatpush.bf16.msra.mxu0 %v5230
        %5250 = vmatpush.bf16.msra.mxu0 %v5229
        %5251 = vmatpush.bf16.msra.mxu0 %v5228
        %5252 = vmatmul.bf16.gmra.mxu0 %v5175
        %v5253 = vpop.f32.mrf.mxu0
        %v5254 = vadd.f32 %v5194, %v5253
        %v5255 = vpop.f32.mrf.mxu0
        %5256 = vdwg.mxu0
        %5257 = vst [vmem:[%s380] sm:$0xf] %v5254
        %s5258 = sand.u32 %s269, 1
        %s5259 = scalar_lea.sflag [#allocation4], %s5258
        %s5260 = sand.u32 %s269, 1
        %s5261 = smul.addr %s5260, 4
        %s5262 = scalar_lea.vmem [#allocation3], %s5261
        // Predicated region
        $region65: #{art_efficientnet_forward.1} parent=63 // pred_check
          %p5263 = pneg %p279
        $region66: #{art_efficientnet_forward.1} parent=63 // pred_check_branch
          %5265 = sbr.rel (%p5263) target = $region68
        $region67: #{art_efficientnet_forward.1} parent=63 // pred_region
          %5267 = vsyncadd %s5259, 0
          %s5268 = smul.addr %s25, 4
          %s5269 = scalar_lea.hbm %s11, %s5268
          %s5271 = sshll.u32 %s5262, 4
          %s5272 = int_to_ptr.vmem [resolvable:$true] %s5271
          %s5273 = sshll.u32 %s5269, 4
          %s5274 = int_to_ptr.hbm [resolvable:$true] %s5273
          %5276 = dma.vmem_to_hbm [thread:$0]  %s5272, 64, %s5274, %s5259
        $region68: #{art_efficientnet_forward.1} parent=63 // pred_fallthru
          _
      $region64: #{art_efficientnet_forward.1} parent=5 // pred_fallthru
        _
      %p5277 = scmp.le.s32.totalorder 2, %s20
      // Predicated region
      $region69: #{art_efficientnet_forward.1} parent=5 // pred_check
        %p5278 = pneg %p5277
      $region70: #{art_efficientnet_forward.1} parent=5 // pred_check_branch
        %5280 = sbr.rel (%p5278) target = $region72
      $region71: #{art_efficientnet_forward.1} parent=5 // pred_region
        %s5281 = ssub.s32 %s20, 2
        // Predicated region
        $region73: #{art_efficientnet_forward.1} parent=71 // pred_check
          %p5282 = pneg %p285
        $region74: #{art_efficientnet_forward.1} parent=71 // pred_check_branch
          %5284 = sbr.rel (%p5282) target = $region76
        $region75: #{art_efficientnet_forward.1} parent=71 // pred_region
          %s5285 = sand.u32 %s270, 1
          %s5286 = scalar_lea.sflag [#allocation4], %s5285
          %s5287 = sand.u32 %s270, 1
          %s5288 = smul.addr %s5287, 4
          %s5289 = scalar_lea.vmem [#allocation3], %s5288
          %5291 = dma.done %s5286, 64
        $region76: #{art_efficientnet_forward.1} parent=71 // pred_fallthru
          _
      $region72: #{art_efficientnet_forward.1} parent=5 // pred_fallthru
        _
    $region6: #{art_efficientnet_forward.1} parent=1 // loop_footer
      %s24 = sadd.s32 1, %s20
    $region7: #{art_efficientnet_forward.1} parent=1 // loop_footer_branch
      %19 = sbr.rel target = $region3
    $region8: #{art_efficientnet_forward.1} parent=1 // loop_exit
      _
    %5292 = vsyncpa [#allocation4], 1
    %s5293 = scalar_lea.sflag [#allocation4], 1
    %5294 = vsyncpa %s5293, 1

</llo_original>
